<compile_context>
chip_gen: v7x
topology: tpu7x:2x2x1
jax: 0.10.0
libtpu: 0.0.40
codegen_flags: <defaults>
</compile_context>

<pallas_src>
import functools

import jax
import jax.numpy as jnp
from jax.experimental import pallas as pl
from jax.experimental.pallas import tpu as pltpu


def _conv_act_kernel(x_ref, w_ref, b_ref, o_ref, *, K, approximate):
    # x_ref: (Cin, Hp, Wp)        padded image (VMEM, resident for this n)
    # w_ref: (K*K*Cin*Cout,)      f32 weights, (kh, kw, ci, co) order (SMEM)
    # b_ref: (Cout,)              f32 bias (SMEM)
    # o_ref: (Cout, TH, Wout)     output row tile
    cin = x_ref.shape[0]
    cout, th, wout = o_ref.shape
    rows = th + K - 1                         # output rows + (K-1)-row halo

    # Top padded row of this tile. TH is a multiple of 8 whenever T > 1
    # (wrapper guarantees it), so the dynamic sublane start is tile-aligned.
    row0 = pl.multiple_of(pl.program_id(1) * th, 8)

    acc = [jnp.zeros((th, wout), jnp.float32) for _ in range(cout)]

    for ci in range(cin):
        # Halo'd row window for this input channel, straight from the
        # resident ref (bounds live ranges; no big value stays live).
        win = x_ref[ci, pl.ds(row0, rows), :].astype(jnp.float32)
        for kh in range(K):
            for kw in range(K):
                tap = win[kh:kh + th, kw:kw + wout]        # (TH, Wout)
                base = ((kh * K + kw) * cin + ci) * cout
                for co in range(cout):
                    acc[co] = acc[co] + w_ref[base + co] * tap

    for co in range(cout):
        y = acc[co] + b_ref[co]
        if approximate:
            # tanh GELU (EUP slot) — optional, not torch.nn.GELU()'s default.
            c = jnp.float32(0.7978845608028654)
            y = 0.5 * y * (1.0 + jnp.tanh(c * (y + 0.044715 * y * y * y)))
        else:
            # Exact erf GELU (torch parity).
            y = 0.5 * y * (1.0 + jax.lax.erf(y * jnp.float32(0.7071067811865476)))
        o_ref[co] = y.astype(o_ref.dtype)


def _pick_row_tile(hout, batch, sublane=8, min_steps=8):
    """Row-tile height: a multiple of `sublane` dividing Hout.  Prefer the
    largest tile that still yields >= min_steps grid steps (pipelining /
    megacore); otherwise the smallest legal tile; fall back to full height."""
    cands = [th for th in range(sublane, hout + 1, sublane) if hout % th == 0]
    if not cands:
        return hout
    good = [th for th in cands if batch * (hout // th) >= min_steps]
    return max(good) if good else min(cands)


def conv_act(x_nchw, w_oihw, bias, *, kernel_size=3, stride=1, padding=1,
             compute_dtype=jnp.bfloat16, out_dtype=None, approximate=False):
    """Conv2d(Cin, Cout, k, stride=1, padding) + GELU (PyTorch NCHW layouts)."""
    assert stride == 1, "this kernel implements the default ConvAct (stride=1)"
    N, Cin, H, W = x_nchw.shape
    Cout = w_oihw.shape[0]
    K = kernel_size
    Hout = H + 2 * padding - K + 1
    Wout = W + 2 * padding - K + 1
    Hp, Wp = H + 2 * padding, W + 2 * padding
    out_dtype = x_nchw.dtype if out_dtype is None else out_dtype

    # Fully unrolled VPU FMA path — right choice for tiny channel counts.
    assert K * K * Cin * Cout <= 8192, (
        "small-channel VPU path only; TODO(synk): MXU path for large channels")

    TH = _pick_row_tile(Hout, N)
    T = Hout // TH
    assert TH % 8 == 0 or T == 1

    # ---- real per-step VMEM footprint (v7x-safe: 64 MiB physical) ----
    cbytes = jnp.dtype(compute_dtype).itemsize
    obytes = jnp.dtype(out_dtype).itemsize
    footprint = (2 * Cin * Hp * Wp * cbytes          # double-buffered image
                 + 2 * Cout * TH * Wout * obytes     # double-buffered out tile
                 + Cout * TH * Wout * 4)             # f32 accumulator
    vmem_cap = 24 * 1024 * 1024
    if footprint > vmem_cap:
        raise ValueError(
            f"per-step VMEM footprint {footprint} B exceeds {vmem_cap} B; "
            "TODO(synk): halo-row DMA tiling for large images")
    vmem_limit = 32 * 1024 * 1024                    # <= ~48 MiB v7x guidance

    # ---- glue: ONE fused cast+pad pass, no row duplication ----
    x_pad = jnp.pad(x_nchw.astype(compute_dtype),
                    ((0, 0), (0, 0), (padding, padding), (padding, padding)))
    # (Cout, Cin, Kh, Kw) -> flat (kh, kw, ci, co) scalar table for SMEM.
    w_flat = jnp.transpose(w_oihw, (2, 3, 1, 0)).reshape(-1).astype(jnp.float32)
    b_flat = bias.reshape(-1).astype(jnp.float32)

    kernel = functools.partial(_conv_act_kernel, K=K, approximate=approximate)

    return pl.pallas_call(
        kernel,
        out_shape=jax.ShapeDtypeStruct((N, Cout, Hout, Wout), out_dtype),
        grid_spec=pltpu.PrefetchScalarGridSpec(
            num_scalar_prefetch=0,
            grid=(N, T),
            in_specs=[
                # Padded image: index constant over the row-tile axis ->
                # DMA'd once per image, auto double-buffered across batch.
                pl.BlockSpec((None, Cin, Hp, Wp), lambda n, t: (n, 0, 0, 0)),
                # Tiny weight / bias scalar tables live in SMEM.
                pl.BlockSpec(memory_space=pltpu.MemorySpace.SMEM),
                pl.BlockSpec(memory_space=pltpu.MemorySpace.SMEM),
            ],
            out_specs=pl.BlockSpec((None, Cout, TH, Wout),
                                   lambda n, t: (n, 0, t, 0)),
        ),
        compiler_params=pltpu.CompilerParams(
            # batch axis parallel (megacore), row tiles arbitrary so both
            # cores never re-fetch the same resident image.
            dimension_semantics=("parallel", "arbitrary"),
            vmem_limit_bytes=vmem_limit,
        ),
    )(x_pad, w_flat, b_flat)


def _reference(x_nchw, w_oihw, bias, padding=1):
    y = jax.lax.conv_general_dilated(
        x_nchw, w_oihw,
        window_strides=(1, 1),
        padding=((padding, padding), (padding, padding)),
        dimension_numbers=("NCHW", "OIHW", "NCHW"),
        precision=jax.lax.Precision.HIGHEST,
    ) + bias[None, :, None, None]
    return jax.nn.gelu(y, approximate=False)


if __name__ == "__main__":
    # Small shapes consistent with the module: batch=2, Cin=4, Cout=8, 16x16.
    N, Cin, Cout, H, W = 2, 4, 8, 16, 16
    key = jax.random.PRNGKey(0)
    kx, kw_, kb = jax.random.split(key, 3)

    x = jax.random.normal(kx, (N, Cin, H, W), dtype=jnp.float32)
    fan_in = Cin * 3 * 3
    bound = 1.0 / (fan_in ** 0.5)
    weight = jax.random.uniform(kw_, (Cout, Cin, 3, 3), jnp.float32, -bound, bound)
    bias = jax.random.uniform(kb, (Cout,), jnp.float32, -bound, bound)

    out = jax.block_until_ready(jax.jit(conv_act)(x, weight, bias))
    assert out.shape == (N, Cout, H, W) and out.dtype == x.dtype

    # Tight check: f32 reference on the same bf16-rounded activations
    # (weights stay exact f32 in this kernel) — isolates indexing/accum/GELU.
    x_r = x.astype(jnp.bfloat16).astype(jnp.float32)
    ref_r = jax.block_until_ready(_reference(x_r, weight, bias))
    err_r = float(jnp.max(jnp.abs(out - ref_r)))
    assert jnp.allclose(out, ref_r, atol=2e-4, rtol=2e-4), err_r

    # Loose check vs the full-f32 torch-equivalent reference (bf16 input
    # staging is the documented trade-off; compute_dtype=float32 for parity).
    ref = jax.block_until_ready(_reference(x, weight, bias))
    err = float(jnp.max(jnp.abs(out - ref)))
    assert jnp.allclose(out, ref, atol=3e-2, rtol=3e-2), err

    print("KERNEL_OK")
</pallas_src>

<mosaic_0001>
module attributes {stable_mosaic.version = 11 : i64} {
  func.func @_conv_act_kernel(%arg0: i32, %arg1: i32, %arg2: memref<1x4x18x18xbf16, #tpu.memory_space<vmem>>, %arg3: memref<288xf32, #tpu.memory_space<smem>>, %arg4: memref<8xf32, #tpu.memory_space<smem>>, %arg5: memref<1x8x8x16xf32, #tpu.memory_space<vmem>>) attributes {dimension_semantics = [#tpu.dimension_semantics<parallel>, #tpu.dimension_semantics<arbitrary>], iteration_bounds = array<i64: 2, 2>, scalar_prefetch = 0 : i64, scratch_operands = 0 : i64, tpu.core_type = #tpu.core_type<tc>, window_params = [{transform_indices = @transform_0, window_bounds = array<i64: 1, 4, 18, 18>}, {transform_indices = @transform_1, window_bounds = array<i64: 288>}, {transform_indices = @transform_2, window_bounds = array<i64: 8>}, {transform_indices = @transform_3, window_bounds = array<i64: 1, 8, 8, 16>}]} {
    %c8_i32 = arith.constant 8 : i32
    %0 = arith.muli %arg1, %c8_i32 : i32
    %1 = tpu.assume_multiple %0, 8 : i32
    %cst = arith.constant 0.000000e+00 : f32
    %2 = vector.broadcast %cst : f32 to vector<8x16xf32>
    %cst_0 = arith.constant 0.000000e+00 : f32
    %3 = vector.broadcast %cst_0 : f32 to vector<8x16xf32>
    %cst_1 = arith.constant 0.000000e+00 : f32
    %4 = vector.broadcast %cst_1 : f32 to vector<8x16xf32>
    %cst_2 = arith.constant 0.000000e+00 : f32
    %5 = vector.broadcast %cst_2 : f32 to vector<8x16xf32>
    %cst_3 = arith.constant 0.000000e+00 : f32
    %6 = vector.broadcast %cst_3 : f32 to vector<8x16xf32>
    %cst_4 = arith.constant 0.000000e+00 : f32
    %7 = vector.broadcast %cst_4 : f32 to vector<8x16xf32>
    %cst_5 = arith.constant 0.000000e+00 : f32
    %8 = vector.broadcast %cst_5 : f32 to vector<8x16xf32>
    %cst_6 = arith.constant 0.000000e+00 : f32
    %9 = vector.broadcast %cst_6 : f32 to vector<8x16xf32>
    %c0 = arith.constant 0 : index
    %c0_7 = arith.constant 0 : index
    %10 = arith.index_cast %1 : i32 to index
    %c0_8 = arith.constant 0 : index
    %11 = vector.load %arg2[%c0, %c0_7, %10, %c0_8] : memref<1x4x18x18xbf16, #tpu.memory_space<vmem>>, vector<1x1x10x18xbf16>
    %12 = vector.shape_cast %11 : vector<1x1x10x18xbf16> to vector<10x18xbf16>
    %13 = arith.extf %12 : vector<10x18xbf16> to vector<10x18xf32>
    %14 = vector.extract_strided_slice %13 {offsets = [0, 0], sizes = [8, 16], strides = [1, 1]} : vector<10x18xf32> to vector<8x16xf32>
    %c0_9 = arith.constant 0 : index
    %15 = memref.load %arg3[%c0_9] : memref<288xf32, #tpu.memory_space<smem>>
    %16 = vector.broadcast %15 : f32 to vector<8x16xf32>
    %17 = arith.mulf %16, %14 : vector<8x16xf32>
    %18 = arith.addf %2, %17 : vector<8x16xf32>
    %c1 = arith.constant 1 : index
    %19 = memref.load %arg3[%c1] : memref<288xf32, #tpu.memory_space<smem>>
    %20 = vector.broadcast %19 : f32 to vector<8x16xf32>
    %21 = arith.mulf %20, %14 : vector<8x16xf32>
    %22 = arith.addf %3, %21 : vector<8x16xf32>
    %c2 = arith.constant 2 : index
    %23 = memref.load %arg3[%c2] : memref<288xf32, #tpu.memory_space<smem>>
    %24 = vector.broadcast %23 : f32 to vector<8x16xf32>
    %25 = arith.mulf %24, %14 : vector<8x16xf32>
    %26 = arith.addf %4, %25 : vector<8x16xf32>
    %c3 = arith.constant 3 : index
    %27 = memref.load %arg3[%c3] : memref<288xf32, #tpu.memory_space<smem>>
    %28 = vector.broadcast %27 : f32 to vector<8x16xf32>
    %29 = arith.mulf %28, %14 : vector<8x16xf32>
    %30 = arith.addf %5, %29 : vector<8x16xf32>
    %c4 = arith.constant 4 : index
    %31 = memref.load %arg3[%c4] : memref<288xf32, #tpu.memory_space<smem>>
    %32 = vector.broadcast %31 : f32 to vector<8x16xf32>
    %33 = arith.mulf %32, %14 : vector<8x16xf32>
    %34 = arith.addf %6, %33 : vector<8x16xf32>
    %c5 = arith.constant 5 : index
    %35 = memref.load %arg3[%c5] : memref<288xf32, #tpu.memory_space<smem>>
    %36 = vector.broadcast %35 : f32 to vector<8x16xf32>
    %37 = arith.mulf %36, %14 : vector<8x16xf32>
    %38 = arith.addf %7, %37 : vector<8x16xf32>
    %c6 = arith.constant 6 : index
    %39 = memref.load %arg3[%c6] : memref<288xf32, #tpu.memory_space<smem>>
    %40 = vector.broadcast %39 : f32 to vector<8x16xf32>
    %41 = arith.mulf %40, %14 : vector<8x16xf32>
    %42 = arith.addf %8, %41 : vector<8x16xf32>
    %c7 = arith.constant 7 : index
    %43 = memref.load %arg3[%c7] : memref<288xf32, #tpu.memory_space<smem>>
    %44 = vector.broadcast %43 : f32 to vector<8x16xf32>
    %45 = arith.mulf %44, %14 : vector<8x16xf32>
    %46 = arith.addf %9, %45 : vector<8x16xf32>
    %47 = vector.extract_strided_slice %13 {offsets = [0, 1], sizes = [8, 16], strides = [1, 1]} : vector<10x18xf32> to vector<8x16xf32>
    %c32 = arith.constant 32 : index
    %48 = memref.load %arg3[%c32] : memref<288xf32, #tpu.memory_space<smem>>
    %49 = vector.broadcast %48 : f32 to vector<8x16xf32>
    %50 = arith.mulf %49, %47 : vector<8x16xf32>
    %51 = arith.addf %18, %50 : vector<8x16xf32>
    %c33 = arith.constant 33 : index
    %52 = memref.load %arg3[%c33] : memref<288xf32, #tpu.memory_space<smem>>
    %53 = vector.broadcast %52 : f32 to vector<8x16xf32>
    %54 = arith.mulf %53, %47 : vector<8x16xf32>
    %55 = arith.addf %22, %54 : vector<8x16xf32>
    %c34 = arith.constant 34 : index
    %56 = memref.load %arg3[%c34] : memref<288xf32, #tpu.memory_space<smem>>
    %57 = vector.broadcast %56 : f32 to vector<8x16xf32>
    %58 = arith.mulf %57, %47 : vector<8x16xf32>
    %59 = arith.addf %26, %58 : vector<8x16xf32>
    %c35 = arith.constant 35 : index
    %60 = memref.load %arg3[%c35] : memref<288xf32, #tpu.memory_space<smem>>
    %61 = vector.broadcast %60 : f32 to vector<8x16xf32>
    %62 = arith.mulf %61, %47 : vector<8x16xf32>
    %63 = arith.addf %30, %62 : vector<8x16xf32>
    %c36 = arith.constant 36 : index
    %64 = memref.load %arg3[%c36] : memref<288xf32, #tpu.memory_space<smem>>
    %65 = vector.broadcast %64 : f32 to vector<8x16xf32>
    %66 = arith.mulf %65, %47 : vector<8x16xf32>
    %67 = arith.addf %34, %66 : vector<8x16xf32>
    %c37 = arith.constant 37 : index
    %68 = memref.load %arg3[%c37] : memref<288xf32, #tpu.memory_space<smem>>
    %69 = vector.broadcast %68 : f32 to vector<8x16xf32>
    %70 = arith.mulf %69, %47 : vector<8x16xf32>
    %71 = arith.addf %38, %70 : vector<8x16xf32>
    %c38 = arith.constant 38 : index
    %72 = memref.load %arg3[%c38] : memref<288xf32, #tpu.memory_space<smem>>
    %73 = vector.broadcast %72 : f32 to vector<8x16xf32>
    %74 = arith.mulf %73, %47 : vector<8x16xf32>
    %75 = arith.addf %42, %74 : vector<8x16xf32>
    %c39 = arith.constant 39 : index
    %76 = memref.load %arg3[%c39] : memref<288xf32, #tpu.memory_space<smem>>
    %77 = vector.broadcast %76 : f32 to vector<8x16xf32>
    %78 = arith.mulf %77, %47 : vector<8x16xf32>
    %79 = arith.addf %46, %78 : vector<8x16xf32>
    %80 = vector.extract_strided_slice %13 {offsets = [0, 2], sizes = [8, 16], strides = [1, 1]} : vector<10x18xf32> to vector<8x16xf32>
    %c64 = arith.constant 64 : index
    %81 = memref.load %arg3[%c64] : memref<288xf32, #tpu.memory_space<smem>>
    %82 = vector.broadcast %81 : f32 to vector<8x16xf32>
    %83 = arith.mulf %82, %80 : vector<8x16xf32>
    %84 = arith.addf %51, %83 : vector<8x16xf32>
    %c65 = arith.constant 65 : index
    %85 = memref.load %arg3[%c65] : memref<288xf32, #tpu.memory_space<smem>>
    %86 = vector.broadcast %85 : f32 to vector<8x16xf32>
    %87 = arith.mulf %86, %80 : vector<8x16xf32>
    %88 = arith.addf %55, %87 : vector<8x16xf32>
    %c66 = arith.constant 66 : index
    %89 = memref.load %arg3[%c66] : memref<288xf32, #tpu.memory_space<smem>>
    %90 = vector.broadcast %89 : f32 to vector<8x16xf32>
    %91 = arith.mulf %90, %80 : vector<8x16xf32>
    %92 = arith.addf %59, %91 : vector<8x16xf32>
    %c67 = arith.constant 67 : index
    %93 = memref.load %arg3[%c67] : memref<288xf32, #tpu.memory_space<smem>>
    %94 = vector.broadcast %93 : f32 to vector<8x16xf32>
    %95 = arith.mulf %94, %80 : vector<8x16xf32>
    %96 = arith.addf %63, %95 : vector<8x16xf32>
    %c68 = arith.constant 68 : index
    %97 = memref.load %arg3[%c68] : memref<288xf32, #tpu.memory_space<smem>>
    %98 = vector.broadcast %97 : f32 to vector<8x16xf32>
    %99 = arith.mulf %98, %80 : vector<8x16xf32>
    %100 = arith.addf %67, %99 : vector<8x16xf32>
    %c69 = arith.constant 69 : index
    %101 = memref.load %arg3[%c69] : memref<288xf32, #tpu.memory_space<smem>>
    %102 = vector.broadcast %101 : f32 to vector<8x16xf32>
    %103 = arith.mulf %102, %80 : vector<8x16xf32>
    %104 = arith.addf %71, %103 : vector<8x16xf32>
    %c70 = arith.constant 70 : index
    %105 = memref.load %arg3[%c70] : memref<288xf32, #tpu.memory_space<smem>>
    %106 = vector.broadcast %105 : f32 to vector<8x16xf32>
    %107 = arith.mulf %106, %80 : vector<8x16xf32>
    %108 = arith.addf %75, %107 : vector<8x16xf32>
    %c71 = arith.constant 71 : index
    %109 = memref.load %arg3[%c71] : memref<288xf32, #tpu.memory_space<smem>>
    %110 = vector.broadcast %109 : f32 to vector<8x16xf32>
    %111 = arith.mulf %110, %80 : vector<8x16xf32>
    %112 = arith.addf %79, %111 : vector<8x16xf32>
    %113 = vector.extract_strided_slice %13 {offsets = [1, 0], sizes = [8, 16], strides = [1, 1]} : vector<10x18xf32> to vector<8x16xf32>
    %c96 = arith.constant 96 : index
    %114 = memref.load %arg3[%c96] : memref<288xf32, #tpu.memory_space<smem>>
    %115 = vector.broadcast %114 : f32 to vector<8x16xf32>
    %116 = arith.mulf %115, %113 : vector<8x16xf32>
    %117 = arith.addf %84, %116 : vector<8x16xf32>
    %c97 = arith.constant 97 : index
    %118 = memref.load %arg3[%c97] : memref<288xf32, #tpu.memory_space<smem>>
    %119 = vector.broadcast %118 : f32 to vector<8x16xf32>
    %120 = arith.mulf %119, %113 : vector<8x16xf32>
    %121 = arith.addf %88, %120 : vector<8x16xf32>
    %c98 = arith.constant 98 : index
    %122 = memref.load %arg3[%c98] : memref<288xf32, #tpu.memory_space<smem>>
    %123 = vector.broadcast %122 : f32 to vector<8x16xf32>
    %124 = arith.mulf %123, %113 : vector<8x16xf32>
    %125 = arith.addf %92, %124 : vector<8x16xf32>
    %c99 = arith.constant 99 : index
    %126 = memref.load %arg3[%c99] : memref<288xf32, #tpu.memory_space<smem>>
    %127 = vector.broadcast %126 : f32 to vector<8x16xf32>
    %128 = arith.mulf %127, %113 : vector<8x16xf32>
    %129 = arith.addf %96, %128 : vector<8x16xf32>
    %c100 = arith.constant 100 : index
    %130 = memref.load %arg3[%c100] : memref<288xf32, #tpu.memory_space<smem>>
    %131 = vector.broadcast %130 : f32 to vector<8x16xf32>
    %132 = arith.mulf %131, %113 : vector<8x16xf32>
    %133 = arith.addf %100, %132 : vector<8x16xf32>
    %c101 = arith.constant 101 : index
    %134 = memref.load %arg3[%c101] : memref<288xf32, #tpu.memory_space<smem>>
    %135 = vector.broadcast %134 : f32 to vector<8x16xf32>
    %136 = arith.mulf %135, %113 : vector<8x16xf32>
    %137 = arith.addf %104, %136 : vector<8x16xf32>
    %c102 = arith.constant 102 : index
    %138 = memref.load %arg3[%c102] : memref<288xf32, #tpu.memory_space<smem>>
    %139 = vector.broadcast %138 : f32 to vector<8x16xf32>
    %140 = arith.mulf %139, %113 : vector<8x16xf32>
    %141 = arith.addf %108, %140 : vector<8x16xf32>
    %c103 = arith.constant 103 : index
    %142 = memref.load %arg3[%c103] : memref<288xf32, #tpu.memory_space<smem>>
    %143 = vector.broadcast %142 : f32 to vector<8x16xf32>
    %144 = arith.mulf %143, %113 : vector<8x16xf32>
    %145 = arith.addf %112, %144 : vector<8x16xf32>
    %146 = vector.extract_strided_slice %13 {offsets = [1, 1], sizes = [8, 16], strides = [1, 1]} : vector<10x18xf32> to vector<8x16xf32>
    %c128 = arith.constant 128 : index
    %147 = memref.load %arg3[%c128] : memref<288xf32, #tpu.memory_space<smem>>
    %148 = vector.broadcast %147 : f32 to vector<8x16xf32>
    %149 = arith.mulf %148, %146 : vector<8x16xf32>
    %150 = arith.addf %117, %149 : vector<8x16xf32>
    %c129 = arith.constant 129 : index
    %151 = memref.load %arg3[%c129] : memref<288xf32, #tpu.memory_space<smem>>
    %152 = vector.broadcast %151 : f32 to vector<8x16xf32>
    %153 = arith.mulf %152, %146 : vector<8x16xf32>
    %154 = arith.addf %121, %153 : vector<8x16xf32>
    %c130 = arith.constant 130 : index
    %155 = memref.load %arg3[%c130] : memref<288xf32, #tpu.memory_space<smem>>
    %156 = vector.broadcast %155 : f32 to vector<8x16xf32>
    %157 = arith.mulf %156, %146 : vector<8x16xf32>
    %158 = arith.addf %125, %157 : vector<8x16xf32>
    %c131 = arith.constant 131 : index
    %159 = memref.load %arg3[%c131] : memref<288xf32, #tpu.memory_space<smem>>
    %160 = vector.broadcast %159 : f32 to vector<8x16xf32>
    %161 = arith.mulf %160, %146 : vector<8x16xf32>
    %162 = arith.addf %129, %161 : vector<8x16xf32>
    %c132 = arith.constant 132 : index
    %163 = memref.load %arg3[%c132] : memref<288xf32, #tpu.memory_space<smem>>
    %164 = vector.broadcast %163 : f32 to vector<8x16xf32>
    %165 = arith.mulf %164, %146 : vector<8x16xf32>
    %166 = arith.addf %133, %165 : vector<8x16xf32>
    %c133 = arith.constant 133 : index
    %167 = memref.load %arg3[%c133] : memref<288xf32, #tpu.memory_space<smem>>
    %168 = vector.broadcast %167 : f32 to vector<8x16xf32>
    %169 = arith.mulf %168, %146 : vector<8x16xf32>
    %170 = arith.addf %137, %169 : vector<8x16xf32>
    %c134 = arith.constant 134 : index
    %171 = memref.load %arg3[%c134] : memref<288xf32, #tpu.memory_space<smem>>
    %172 = vector.broadcast %171 : f32 to vector<8x16xf32>
    %173 = arith.mulf %172, %146 : vector<8x16xf32>
    %174 = arith.addf %141, %173 : vector<8x16xf32>
    %c135 = arith.constant 135 : index
    %175 = memref.load %arg3[%c135] : memref<288xf32, #tpu.memory_space<smem>>
    %176 = vector.broadcast %175 : f32 to vector<8x16xf32>
    %177 = arith.mulf %176, %146 : vector<8x16xf32>
    %178 = arith.addf %145, %177 : vector<8x16xf32>
    %179 = vector.extract_strided_slice %13 {offsets = [1, 2], sizes = [8, 16], strides = [1, 1]} : vector<10x18xf32> to vector<8x16xf32>
    %c160 = arith.constant 160 : index
    %180 = memref.load %arg3[%c160] : memref<288xf32, #tpu.memory_space<smem>>
    %181 = vector.broadcast %180 : f32 to vector<8x16xf32>
    %182 = arith.mulf %181, %179 : vector<8x16xf32>
    %183 = arith.addf %150, %182 : vector<8x16xf32>
    %c161 = arith.constant 161 : index
    %184 = memref.load %arg3[%c161] : memref<288xf32, #tpu.memory_space<smem>>
    %185 = vector.broadcast %184 : f32 to vector<8x16xf32>
    %186 = arith.mulf %185, %179 : vector<8x16xf32>
    %187 = arith.addf %154, %186 : vector<8x16xf32>
    %c162 = arith.constant 162 : index
    %188 = memref.load %arg3[%c162] : memref<288xf32, #tpu.memory_space<smem>>
    %189 = vector.broadcast %188 : f32 to vector<8x16xf32>
    %190 = arith.mulf %189, %179 : vector<8x16xf32>
    %191 = arith.addf %158, %190 : vector<8x16xf32>
    %c163 = arith.constant 163 : index
    %192 = memref.load %arg3[%c163] : memref<288xf32, #tpu.memory_space<smem>>
    %193 = vector.broadcast %192 : f32 to vector<8x16xf32>
    %194 = arith.mulf %193, %179 : vector<8x16xf32>
    %195 = arith.addf %162, %194 : vector<8x16xf32>
    %c164 = arith.constant 164 : index
    %196 = memref.load %arg3[%c164] : memref<288xf32, #tpu.memory_space<smem>>
    %197 = vector.broadcast %196 : f32 to vector<8x16xf32>
    %198 = arith.mulf %197, %179 : vector<8x16xf32>
    %199 = arith.addf %166, %198 : vector<8x16xf32>
    %c165 = arith.constant 165 : index
    %200 = memref.load %arg3[%c165] : memref<288xf32, #tpu.memory_space<smem>>
    %201 = vector.broadcast %200 : f32 to vector<8x16xf32>
    %202 = arith.mulf %201, %179 : vector<8x16xf32>
    %203 = arith.addf %170, %202 : vector<8x16xf32>
    %c166 = arith.constant 166 : index
    %204 = memref.load %arg3[%c166] : memref<288xf32, #tpu.memory_space<smem>>
    %205 = vector.broadcast %204 : f32 to vector<8x16xf32>
    %206 = arith.mulf %205, %179 : vector<8x16xf32>
    %207 = arith.addf %174, %206 : vector<8x16xf32>
    %c167 = arith.constant 167 : index
    %208 = memref.load %arg3[%c167] : memref<288xf32, #tpu.memory_space<smem>>
    %209 = vector.broadcast %208 : f32 to vector<8x16xf32>
    %210 = arith.mulf %209, %179 : vector<8x16xf32>
    %211 = arith.addf %178, %210 : vector<8x16xf32>
    %212 = vector.extract_strided_slice %13 {offsets = [2, 0], sizes = [8, 16], strides = [1, 1]} : vector<10x18xf32> to vector<8x16xf32>
    %c192 = arith.constant 192 : index
    %213 = memref.load %arg3[%c192] : memref<288xf32, #tpu.memory_space<smem>>
    %214 = vector.broadcast %213 : f32 to vector<8x16xf32>
    %215 = arith.mulf %214, %212 : vector<8x16xf32>
    %216 = arith.addf %183, %215 : vector<8x16xf32>
    %c193 = arith.constant 193 : index
    %217 = memref.load %arg3[%c193] : memref<288xf32, #tpu.memory_space<smem>>
    %218 = vector.broadcast %217 : f32 to vector<8x16xf32>
    %219 = arith.mulf %218, %212 : vector<8x16xf32>
    %220 = arith.addf %187, %219 : vector<8x16xf32>
    %c194 = arith.constant 194 : index
    %221 = memref.load %arg3[%c194] : memref<288xf32, #tpu.memory_space<smem>>
    %222 = vector.broadcast %221 : f32 to vector<8x16xf32>
    %223 = arith.mulf %222, %212 : vector<8x16xf32>
    %224 = arith.addf %191, %223 : vector<8x16xf32>
    %c195 = arith.constant 195 : index
    %225 = memref.load %arg3[%c195] : memref<288xf32, #tpu.memory_space<smem>>
    %226 = vector.broadcast %225 : f32 to vector<8x16xf32>
    %227 = arith.mulf %226, %212 : vector<8x16xf32>
    %228 = arith.addf %195, %227 : vector<8x16xf32>
    %c196 = arith.constant 196 : index
    %229 = memref.load %arg3[%c196] : memref<288xf32, #tpu.memory_space<smem>>
    %230 = vector.broadcast %229 : f32 to vector<8x16xf32>
    %231 = arith.mulf %230, %212 : vector<8x16xf32>
    %232 = arith.addf %199, %231 : vector<8x16xf32>
    %c197 = arith.constant 197 : index
    %233 = memref.load %arg3[%c197] : memref<288xf32, #tpu.memory_space<smem>>
    %234 = vector.broadcast %233 : f32 to vector<8x16xf32>
    %235 = arith.mulf %234, %212 : vector<8x16xf32>
    %236 = arith.addf %203, %235 : vector<8x16xf32>
    %c198 = arith.constant 198 : index
    %237 = memref.load %arg3[%c198] : memref<288xf32, #tpu.memory_space<smem>>
    %238 = vector.broadcast %237 : f32 to vector<8x16xf32>
    %239 = arith.mulf %238, %212 : vector<8x16xf32>
    %240 = arith.addf %207, %239 : vector<8x16xf32>
    %c199 = arith.constant 199 : index
    %241 = memref.load %arg3[%c199] : memref<288xf32, #tpu.memory_space<smem>>
    %242 = vector.broadcast %241 : f32 to vector<8x16xf32>
    %243 = arith.mulf %242, %212 : vector<8x16xf32>
    %244 = arith.addf %211, %243 : vector<8x16xf32>
    %245 = vector.extract_strided_slice %13 {offsets = [2, 1], sizes = [8, 16], strides = [1, 1]} : vector<10x18xf32> to vector<8x16xf32>
    %c224 = arith.constant 224 : index
    %246 = memref.load %arg3[%c224] : memref<288xf32, #tpu.memory_space<smem>>
    %247 = vector.broadcast %246 : f32 to vector<8x16xf32>
    %248 = arith.mulf %247, %245 : vector<8x16xf32>
    %249 = arith.addf %216, %248 : vector<8x16xf32>
    %c225 = arith.constant 225 : index
    %250 = memref.load %arg3[%c225] : memref<288xf32, #tpu.memory_space<smem>>
    %251 = vector.broadcast %250 : f32 to vector<8x16xf32>
    %252 = arith.mulf %251, %245 : vector<8x16xf32>
    %253 = arith.addf %220, %252 : vector<8x16xf32>
    %c226 = arith.constant 226 : index
    %254 = memref.load %arg3[%c226] : memref<288xf32, #tpu.memory_space<smem>>
    %255 = vector.broadcast %254 : f32 to vector<8x16xf32>
    %256 = arith.mulf %255, %245 : vector<8x16xf32>
    %257 = arith.addf %224, %256 : vector<8x16xf32>
    %c227 = arith.constant 227 : index
    %258 = memref.load %arg3[%c227] : memref<288xf32, #tpu.memory_space<smem>>
    %259 = vector.broadcast %258 : f32 to vector<8x16xf32>
    %260 = arith.mulf %259, %245 : vector<8x16xf32>
    %261 = arith.addf %228, %260 : vector<8x16xf32>
    %c228 = arith.constant 228 : index
    %262 = memref.load %arg3[%c228] : memref<288xf32, #tpu.memory_space<smem>>
    %263 = vector.broadcast %262 : f32 to vector<8x16xf32>
    %264 = arith.mulf %263, %245 : vector<8x16xf32>
    %265 = arith.addf %232, %264 : vector<8x16xf32>
    %c229 = arith.constant 229 : index
    %266 = memref.load %arg3[%c229] : memref<288xf32, #tpu.memory_space<smem>>
    %267 = vector.broadcast %266 : f32 to vector<8x16xf32>
    %268 = arith.mulf %267, %245 : vector<8x16xf32>
    %269 = arith.addf %236, %268 : vector<8x16xf32>
    %c230 = arith.constant 230 : index
    %270 = memref.load %arg3[%c230] : memref<288xf32, #tpu.memory_space<smem>>
    %271 = vector.broadcast %270 : f32 to vector<8x16xf32>
    %272 = arith.mulf %271, %245 : vector<8x16xf32>
    %273 = arith.addf %240, %272 : vector<8x16xf32>
    %c231 = arith.constant 231 : index
    %274 = memref.load %arg3[%c231] : memref<288xf32, #tpu.memory_space<smem>>
    %275 = vector.broadcast %274 : f32 to vector<8x16xf32>
    %276 = arith.mulf %275, %245 : vector<8x16xf32>
    %277 = arith.addf %244, %276 : vector<8x16xf32>
    %278 = vector.extract_strided_slice %13 {offsets = [2, 2], sizes = [8, 16], strides = [1, 1]} : vector<10x18xf32> to vector<8x16xf32>
    %c256 = arith.constant 256 : index
    %279 = memref.load %arg3[%c256] : memref<288xf32, #tpu.memory_space<smem>>
    %280 = vector.broadcast %279 : f32 to vector<8x16xf32>
    %281 = arith.mulf %280, %278 : vector<8x16xf32>
    %282 = arith.addf %249, %281 : vector<8x16xf32>
    %c257 = arith.constant 257 : index
    %283 = memref.load %arg3[%c257] : memref<288xf32, #tpu.memory_space<smem>>
    %284 = vector.broadcast %283 : f32 to vector<8x16xf32>
    %285 = arith.mulf %284, %278 : vector<8x16xf32>
    %286 = arith.addf %253, %285 : vector<8x16xf32>
    %c258 = arith.constant 258 : index
    %287 = memref.load %arg3[%c258] : memref<288xf32, #tpu.memory_space<smem>>
    %288 = vector.broadcast %287 : f32 to vector<8x16xf32>
    %289 = arith.mulf %288, %278 : vector<8x16xf32>
    %290 = arith.addf %257, %289 : vector<8x16xf32>
    %c259 = arith.constant 259 : index
    %291 = memref.load %arg3[%c259] : memref<288xf32, #tpu.memory_space<smem>>
    %292 = vector.broadcast %291 : f32 to vector<8x16xf32>
    %293 = arith.mulf %292, %278 : vector<8x16xf32>
    %294 = arith.addf %261, %293 : vector<8x16xf32>
    %c260 = arith.constant 260 : index
    %295 = memref.load %arg3[%c260] : memref<288xf32, #tpu.memory_space<smem>>
    %296 = vector.broadcast %295 : f32 to vector<8x16xf32>
    %297 = arith.mulf %296, %278 : vector<8x16xf32>
    %298 = arith.addf %265, %297 : vector<8x16xf32>
    %c261 = arith.constant 261 : index
    %299 = memref.load %arg3[%c261] : memref<288xf32, #tpu.memory_space<smem>>
    %300 = vector.broadcast %299 : f32 to vector<8x16xf32>
    %301 = arith.mulf %300, %278 : vector<8x16xf32>
    %302 = arith.addf %269, %301 : vector<8x16xf32>
    %c262 = arith.constant 262 : index
    %303 = memref.load %arg3[%c262] : memref<288xf32, #tpu.memory_space<smem>>
    %304 = vector.broadcast %303 : f32 to vector<8x16xf32>
    %305 = arith.mulf %304, %278 : vector<8x16xf32>
    %306 = arith.addf %273, %305 : vector<8x16xf32>
    %c263 = arith.constant 263 : index
    %307 = memref.load %arg3[%c263] : memref<288xf32, #tpu.memory_space<smem>>
    %308 = vector.broadcast %307 : f32 to vector<8x16xf32>
    %309 = arith.mulf %308, %278 : vector<8x16xf32>
    %310 = arith.addf %277, %309 : vector<8x16xf32>
    %c0_10 = arith.constant 0 : index
    %c1_11 = arith.constant 1 : index
    %311 = arith.index_cast %1 : i32 to index
    %c0_12 = arith.constant 0 : index
    %312 = vector.load %arg2[%c0_10, %c1_11, %311, %c0_12] : memref<1x4x18x18xbf16, #tpu.memory_space<vmem>>, vector<1x1x10x18xbf16>
    %313 = vector.shape_cast %312 : vector<1x1x10x18xbf16> to vector<10x18xbf16>
    %314 = arith.extf %313 : vector<10x18xbf16> to vector<10x18xf32>
    %315 = vector.extract_strided_slice %314 {offsets = [0, 0], sizes = [8, 16], strides = [1, 1]} : vector<10x18xf32> to vector<8x16xf32>
    %c8 = arith.constant 8 : index
    %316 = memref.load %arg3[%c8] : memref<288xf32, #tpu.memory_space<smem>>
    %317 = vector.broadcast %316 : f32 to vector<8x16xf32>
    %318 = arith.mulf %317, %315 : vector<8x16xf32>
    %319 = arith.addf %282, %318 : vector<8x16xf32>
    %c9 = arith.constant 9 : index
    %320 = memref.load %arg3[%c9] : memref<288xf32, #tpu.memory_space<smem>>
    %321 = vector.broadcast %320 : f32 to vector<8x16xf32>
    %322 = arith.mulf %321, %315 : vector<8x16xf32>
    %323 = arith.addf %286, %322 : vector<8x16xf32>
    %c10 = arith.constant 10 : index
    %324 = memref.load %arg3[%c10] : memref<288xf32, #tpu.memory_space<smem>>
    %325 = vector.broadcast %324 : f32 to vector<8x16xf32>
    %326 = arith.mulf %325, %315 : vector<8x16xf32>
    %327 = arith.addf %290, %326 : vector<8x16xf32>
    %c11 = arith.constant 11 : index
    %328 = memref.load %arg3[%c11] : memref<288xf32, #tpu.memory_space<smem>>
    %329 = vector.broadcast %328 : f32 to vector<8x16xf32>
    %330 = arith.mulf %329, %315 : vector<8x16xf32>
    %331 = arith.addf %294, %330 : vector<8x16xf32>
    %c12 = arith.constant 12 : index
    %332 = memref.load %arg3[%c12] : memref<288xf32, #tpu.memory_space<smem>>
    %333 = vector.broadcast %332 : f32 to vector<8x16xf32>
    %334 = arith.mulf %333, %315 : vector<8x16xf32>
    %335 = arith.addf %298, %334 : vector<8x16xf32>
    %c13 = arith.constant 13 : index
    %336 = memref.load %arg3[%c13] : memref<288xf32, #tpu.memory_space<smem>>
    %337 = vector.broadcast %336 : f32 to vector<8x16xf32>
    %338 = arith.mulf %337, %315 : vector<8x16xf32>
    %339 = arith.addf %302, %338 : vector<8x16xf32>
    %c14 = arith.constant 14 : index
    %340 = memref.load %arg3[%c14] : memref<288xf32, #tpu.memory_space<smem>>
    %341 = vector.broadcast %340 : f32 to vector<8x16xf32>
    %342 = arith.mulf %341, %315 : vector<8x16xf32>
    %343 = arith.addf %306, %342 : vector<8x16xf32>
    %c15 = arith.constant 15 : index
    %344 = memref.load %arg3[%c15] : memref<288xf32, #tpu.memory_space<smem>>
    %345 = vector.broadcast %344 : f32 to vector<8x16xf32>
    %346 = arith.mulf %345, %315 : vector<8x16xf32>
    %347 = arith.addf %310, %346 : vector<8x16xf32>
    %348 = vector.extract_strided_slice %314 {offsets = [0, 1], sizes = [8, 16], strides = [1, 1]} : vector<10x18xf32> to vector<8x16xf32>
    %c40 = arith.constant 40 : index
    %349 = memref.load %arg3[%c40] : memref<288xf32, #tpu.memory_space<smem>>
    %350 = vector.broadcast %349 : f32 to vector<8x16xf32>
    %351 = arith.mulf %350, %348 : vector<8x16xf32>
    %352 = arith.addf %319, %351 : vector<8x16xf32>
    %c41 = arith.constant 41 : index
    %353 = memref.load %arg3[%c41] : memref<288xf32, #tpu.memory_space<smem>>
    %354 = vector.broadcast %353 : f32 to vector<8x16xf32>
    %355 = arith.mulf %354, %348 : vector<8x16xf32>
    %356 = arith.addf %323, %355 : vector<8x16xf32>
    %c42 = arith.constant 42 : index
    %357 = memref.load %arg3[%c42] : memref<288xf32, #tpu.memory_space<smem>>
    %358 = vector.broadcast %357 : f32 to vector<8x16xf32>
    %359 = arith.mulf %358, %348 : vector<8x16xf32>
    %360 = arith.addf %327, %359 : vector<8x16xf32>
    %c43 = arith.constant 43 : index
    %361 = memref.load %arg3[%c43] : memref<288xf32, #tpu.memory_space<smem>>
    %362 = vector.broadcast %361 : f32 to vector<8x16xf32>
    %363 = arith.mulf %362, %348 : vector<8x16xf32>
    %364 = arith.addf %331, %363 : vector<8x16xf32>
    %c44 = arith.constant 44 : index
    %365 = memref.load %arg3[%c44] : memref<288xf32, #tpu.memory_space<smem>>
    %366 = vector.broadcast %365 : f32 to vector<8x16xf32>
    %367 = arith.mulf %366, %348 : vector<8x16xf32>
    %368 = arith.addf %335, %367 : vector<8x16xf32>
    %c45 = arith.constant 45 : index
    %369 = memref.load %arg3[%c45] : memref<288xf32, #tpu.memory_space<smem>>
    %370 = vector.broadcast %369 : f32 to vector<8x16xf32>
    %371 = arith.mulf %370, %348 : vector<8x16xf32>
    %372 = arith.addf %339, %371 : vector<8x16xf32>
    %c46 = arith.constant 46 : index
    %373 = memref.load %arg3[%c46] : memref<288xf32, #tpu.memory_space<smem>>
    %374 = vector.broadcast %373 : f32 to vector<8x16xf32>
    %375 = arith.mulf %374, %348 : vector<8x16xf32>
    %376 = arith.addf %343, %375 : vector<8x16xf32>
    %c47 = arith.constant 47 : index
    %377 = memref.load %arg3[%c47] : memref<288xf32, #tpu.memory_space<smem>>
    %378 = vector.broadcast %377 : f32 to vector<8x16xf32>
    %379 = arith.mulf %378, %348 : vector<8x16xf32>
    %380 = arith.addf %347, %379 : vector<8x16xf32>
    %381 = vector.extract_strided_slice %314 {offsets = [0, 2], sizes = [8, 16], strides = [1, 1]} : vector<10x18xf32> to vector<8x16xf32>
    %c72 = arith.constant 72 : index
    %382 = memref.load %arg3[%c72] : memref<288xf32, #tpu.memory_space<smem>>
    %383 = vector.broadcast %382 : f32 to vector<8x16xf32>
    %384 = arith.mulf %383, %381 : vector<8x16xf32>
    %385 = arith.addf %352, %384 : vector<8x16xf32>
    %c73 = arith.constant 73 : index
    %386 = memref.load %arg3[%c73] : memref<288xf32, #tpu.memory_space<smem>>
    %387 = vector.broadcast %386 : f32 to vector<8x16xf32>
    %388 = arith.mulf %387, %381 : vector<8x16xf32>
    %389 = arith.addf %356, %388 : vector<8x16xf32>
    %c74 = arith.constant 74 : index
    %390 = memref.load %arg3[%c74] : memref<288xf32, #tpu.memory_space<smem>>
    %391 = vector.broadcast %390 : f32 to vector<8x16xf32>
    %392 = arith.mulf %391, %381 : vector<8x16xf32>
    %393 = arith.addf %360, %392 : vector<8x16xf32>
    %c75 = arith.constant 75 : index
    %394 = memref.load %arg3[%c75] : memref<288xf32, #tpu.memory_space<smem>>
    %395 = vector.broadcast %394 : f32 to vector<8x16xf32>
    %396 = arith.mulf %395, %381 : vector<8x16xf32>
    %397 = arith.addf %364, %396 : vector<8x16xf32>
    %c76 = arith.constant 76 : index
    %398 = memref.load %arg3[%c76] : memref<288xf32, #tpu.memory_space<smem>>
    %399 = vector.broadcast %398 : f32 to vector<8x16xf32>
    %400 = arith.mulf %399, %381 : vector<8x16xf32>
    %401 = arith.addf %368, %400 : vector<8x16xf32>
    %c77 = arith.constant 77 : index
    %402 = memref.load %arg3[%c77] : memref<288xf32, #tpu.memory_space<smem>>
    %403 = vector.broadcast %402 : f32 to vector<8x16xf32>
    %404 = arith.mulf %403, %381 : vector<8x16xf32>
    %405 = arith.addf %372, %404 : vector<8x16xf32>
    %c78 = arith.constant 78 : index
    %406 = memref.load %arg3[%c78] : memref<288xf32, #tpu.memory_space<smem>>
    %407 = vector.broadcast %406 : f32 to vector<8x16xf32>
    %408 = arith.mulf %407, %381 : vector<8x16xf32>
    %409 = arith.addf %376, %408 : vector<8x16xf32>
    %c79 = arith.constant 79 : index
    %410 = memref.load %arg3[%c79] : memref<288xf32, #tpu.memory_space<smem>>
    %411 = vector.broadcast %410 : f32 to vector<8x16xf32>
    %412 = arith.mulf %411, %381 : vector<8x16xf32>
    %413 = arith.addf %380, %412 : vector<8x16xf32>
    %414 = vector.extract_strided_slice %314 {offsets = [1, 0], sizes = [8, 16], strides = [1, 1]} : vector<10x18xf32> to vector<8x16xf32>
    %c104 = arith.constant 104 : index
    %415 = memref.load %arg3[%c104] : memref<288xf32, #tpu.memory_space<smem>>
    %416 = vector.broadcast %415 : f32 to vector<8x16xf32>
    %417 = arith.mulf %416, %414 : vector<8x16xf32>
    %418 = arith.addf %385, %417 : vector<8x16xf32>
    %c105 = arith.constant 105 : index
    %419 = memref.load %arg3[%c105] : memref<288xf32, #tpu.memory_space<smem>>
    %420 = vector.broadcast %419 : f32 to vector<8x16xf32>
    %421 = arith.mulf %420, %414 : vector<8x16xf32>
    %422 = arith.addf %389, %421 : vector<8x16xf32>
    %c106 = arith.constant 106 : index
    %423 = memref.load %arg3[%c106] : memref<288xf32, #tpu.memory_space<smem>>
    %424 = vector.broadcast %423 : f32 to vector<8x16xf32>
    %425 = arith.mulf %424, %414 : vector<8x16xf32>
    %426 = arith.addf %393, %425 : vector<8x16xf32>
    %c107 = arith.constant 107 : index
    %427 = memref.load %arg3[%c107] : memref<288xf32, #tpu.memory_space<smem>>
    %428 = vector.broadcast %427 : f32 to vector<8x16xf32>
    %429 = arith.mulf %428, %414 : vector<8x16xf32>
    %430 = arith.addf %397, %429 : vector<8x16xf32>
    %c108 = arith.constant 108 : index
    %431 = memref.load %arg3[%c108] : memref<288xf32, #tpu.memory_space<smem>>
    %432 = vector.broadcast %431 : f32 to vector<8x16xf32>
    %433 = arith.mulf %432, %414 : vector<8x16xf32>
    %434 = arith.addf %401, %433 : vector<8x16xf32>
    %c109 = arith.constant 109 : index
    %435 = memref.load %arg3[%c109] : memref<288xf32, #tpu.memory_space<smem>>
    %436 = vector.broadcast %435 : f32 to vector<8x16xf32>
    %437 = arith.mulf %436, %414 : vector<8x16xf32>
    %438 = arith.addf %405, %437 : vector<8x16xf32>
    %c110 = arith.constant 110 : index
    %439 = memref.load %arg3[%c110] : memref<288xf32, #tpu.memory_space<smem>>
    %440 = vector.broadcast %439 : f32 to vector<8x16xf32>
    %441 = arith.mulf %440, %414 : vector<8x16xf32>
    %442 = arith.addf %409, %441 : vector<8x16xf32>
    %c111 = arith.constant 111 : index
    %443 = memref.load %arg3[%c111] : memref<288xf32, #tpu.memory_space<smem>>
    %444 = vector.broadcast %443 : f32 to vector<8x16xf32>
    %445 = arith.mulf %444, %414 : vector<8x16xf32>
    %446 = arith.addf %413, %445 : vector<8x16xf32>
    %447 = vector.extract_strided_slice %314 {offsets = [1, 1], sizes = [8, 16], strides = [1, 1]} : vector<10x18xf32> to vector<8x16xf32>
    %c136 = arith.constant 136 : index
    %448 = memref.load %arg3[%c136] : memref<288xf32, #tpu.memory_space<smem>>
    %449 = vector.broadcast %448 : f32 to vector<8x16xf32>
    %450 = arith.mulf %449, %447 : vector<8x16xf32>
    %451 = arith.addf %418, %450 : vector<8x16xf32>
    %c137 = arith.constant 137 : index
    %452 = memref.load %arg3[%c137] : memref<288xf32, #tpu.memory_space<smem>>
    %453 = vector.broadcast %452 : f32 to vector<8x16xf32>
    %454 = arith.mulf %453, %447 : vector<8x16xf32>
    %455 = arith.addf %422, %454 : vector<8x16xf32>
    %c138 = arith.constant 138 : index
    %456 = memref.load %arg3[%c138] : memref<288xf32, #tpu.memory_space<smem>>
    %457 = vector.broadcast %456 : f32 to vector<8x16xf32>
    %458 = arith.mulf %457, %447 : vector<8x16xf32>
    %459 = arith.addf %426, %458 : vector<8x16xf32>
    %c139 = arith.constant 139 : index
    %460 = memref.load %arg3[%c139] : memref<288xf32, #tpu.memory_space<smem>>
    %461 = vector.broadcast %460 : f32 to vector<8x16xf32>
    %462 = arith.mulf %461, %447 : vector<8x16xf32>
    %463 = arith.addf %430, %462 : vector<8x16xf32>
    %c140 = arith.constant 140 : index
    %464 = memref.load %arg3[%c140] : memref<288xf32, #tpu.memory_space<smem>>
    %465 = vector.broadcast %464 : f32 to vector<8x16xf32>
    %466 = arith.mulf %465, %447 : vector<8x16xf32>
    %467 = arith.addf %434, %466 : vector<8x16xf32>
    %c141 = arith.constant 141 : index
    %468 = memref.load %arg3[%c141] : memref<288xf32, #tpu.memory_space<smem>>
    %469 = vector.broadcast %468 : f32 to vector<8x16xf32>
    %470 = arith.mulf %469, %447 : vector<8x16xf32>
    %471 = arith.addf %438, %470 : vector<8x16xf32>
    %c142 = arith.constant 142 : index
    %472 = memref.load %arg3[%c142] : memref<288xf32, #tpu.memory_space<smem>>
    %473 = vector.broadcast %472 : f32 to vector<8x16xf32>
    %474 = arith.mulf %473, %447 : vector<8x16xf32>
    %475 = arith.addf %442, %474 : vector<8x16xf32>
    %c143 = arith.constant 143 : index
    %476 = memref.load %arg3[%c143] : memref<288xf32, #tpu.memory_space<smem>>
    %477 = vector.broadcast %476 : f32 to vector<8x16xf32>
    %478 = arith.mulf %477, %447 : vector<8x16xf32>
    %479 = arith.addf %446, %478 : vector<8x16xf32>
    %480 = vector.extract_strided_slice %314 {offsets = [1, 2], sizes = [8, 16], strides = [1, 1]} : vector<10x18xf32> to vector<8x16xf32>
    %c168 = arith.constant 168 : index
    %481 = memref.load %arg3[%c168] : memref<288xf32, #tpu.memory_space<smem>>
    %482 = vector.broadcast %481 : f32 to vector<8x16xf32>
    %483 = arith.mulf %482, %480 : vector<8x16xf32>
    %484 = arith.addf %451, %483 : vector<8x16xf32>
    %c169 = arith.constant 169 : index
    %485 = memref.load %arg3[%c169] : memref<288xf32, #tpu.memory_space<smem>>
    %486 = vector.broadcast %485 : f32 to vector<8x16xf32>
    %487 = arith.mulf %486, %480 : vector<8x16xf32>
    %488 = arith.addf %455, %487 : vector<8x16xf32>
    %c170 = arith.constant 170 : index
    %489 = memref.load %arg3[%c170] : memref<288xf32, #tpu.memory_space<smem>>
    %490 = vector.broadcast %489 : f32 to vector<8x16xf32>
    %491 = arith.mulf %490, %480 : vector<8x16xf32>
    %492 = arith.addf %459, %491 : vector<8x16xf32>
    %c171 = arith.constant 171 : index
    %493 = memref.load %arg3[%c171] : memref<288xf32, #tpu.memory_space<smem>>
    %494 = vector.broadcast %493 : f32 to vector<8x16xf32>
    %495 = arith.mulf %494, %480 : vector<8x16xf32>
    %496 = arith.addf %463, %495 : vector<8x16xf32>
    %c172 = arith.constant 172 : index
    %497 = memref.load %arg3[%c172] : memref<288xf32, #tpu.memory_space<smem>>
    %498 = vector.broadcast %497 : f32 to vector<8x16xf32>
    %499 = arith.mulf %498, %480 : vector<8x16xf32>
    %500 = arith.addf %467, %499 : vector<8x16xf32>
    %c173 = arith.constant 173 : index
    %501 = memref.load %arg3[%c173] : memref<288xf32, #tpu.memory_space<smem>>
    %502 = vector.broadcast %501 : f32 to vector<8x16xf32>
    %503 = arith.mulf %502, %480 : vector<8x16xf32>
    %504 = arith.addf %471, %503 : vector<8x16xf32>
    %c174 = arith.constant 174 : index
    %505 = memref.load %arg3[%c174] : memref<288xf32, #tpu.memory_space<smem>>
    %506 = vector.broadcast %505 : f32 to vector<8x16xf32>
    %507 = arith.mulf %506, %480 : vector<8x16xf32>
    %508 = arith.addf %475, %507 : vector<8x16xf32>
    %c175 = arith.constant 175 : index
    %509 = memref.load %arg3[%c175] : memref<288xf32, #tpu.memory_space<smem>>
    %510 = vector.broadcast %509 : f32 to vector<8x16xf32>
    %511 = arith.mulf %510, %480 : vector<8x16xf32>
    %512 = arith.addf %479, %511 : vector<8x16xf32>
    %513 = vector.extract_strided_slice %314 {offsets = [2, 0], sizes = [8, 16], strides = [1, 1]} : vector<10x18xf32> to vector<8x16xf32>
    %c200 = arith.constant 200 : index
    %514 = memref.load %arg3[%c200] : memref<288xf32, #tpu.memory_space<smem>>
    %515 = vector.broadcast %514 : f32 to vector<8x16xf32>
    %516 = arith.mulf %515, %513 : vector<8x16xf32>
    %517 = arith.addf %484, %516 : vector<8x16xf32>
    %c201 = arith.constant 201 : index
    %518 = memref.load %arg3[%c201] : memref<288xf32, #tpu.memory_space<smem>>
    %519 = vector.broadcast %518 : f32 to vector<8x16xf32>
    %520 = arith.mulf %519, %513 : vector<8x16xf32>
    %521 = arith.addf %488, %520 : vector<8x16xf32>
    %c202 = arith.constant 202 : index
    %522 = memref.load %arg3[%c202] : memref<288xf32, #tpu.memory_space<smem>>
    %523 = vector.broadcast %522 : f32 to vector<8x16xf32>
    %524 = arith.mulf %523, %513 : vector<8x16xf32>
    %525 = arith.addf %492, %524 : vector<8x16xf32>
    %c203 = arith.constant 203 : index
    %526 = memref.load %arg3[%c203] : memref<288xf32, #tpu.memory_space<smem>>
    %527 = vector.broadcast %526 : f32 to vector<8x16xf32>
    %528 = arith.mulf %527, %513 : vector<8x16xf32>
    %529 = arith.addf %496, %528 : vector<8x16xf32>
    %c204 = arith.constant 204 : index
    %530 = memref.load %arg3[%c204] : memref<288xf32, #tpu.memory_space<smem>>
    %531 = vector.broadcast %530 : f32 to vector<8x16xf32>
    %532 = arith.mulf %531, %513 : vector<8x16xf32>
    %533 = arith.addf %500, %532 : vector<8x16xf32>
    %c205 = arith.constant 205 : index
    %534 = memref.load %arg3[%c205] : memref<288xf32, #tpu.memory_space<smem>>
    %535 = vector.broadcast %534 : f32 to vector<8x16xf32>
    %536 = arith.mulf %535, %513 : vector<8x16xf32>
    %537 = arith.addf %504, %536 : vector<8x16xf32>
    %c206 = arith.constant 206 : index
    %538 = memref.load %arg3[%c206] : memref<288xf32, #tpu.memory_space<smem>>
    %539 = vector.broadcast %538 : f32 to vector<8x16xf32>
    %540 = arith.mulf %539, %513 : vector<8x16xf32>
    %541 = arith.addf %508, %540 : vector<8x16xf32>
    %c207 = arith.constant 207 : index
    %542 = memref.load %arg3[%c207] : memref<288xf32, #tpu.memory_space<smem>>
    %543 = vector.broadcast %542 : f32 to vector<8x16xf32>
    %544 = arith.mulf %543, %513 : vector<8x16xf32>
    %545 = arith.addf %512, %544 : vector<8x16xf32>
    %546 = vector.extract_strided_slice %314 {offsets = [2, 1], sizes = [8, 16], strides = [1, 1]} : vector<10x18xf32> to vector<8x16xf32>
    %c232 = arith.constant 232 : index
    %547 = memref.load %arg3[%c232] : memref<288xf32, #tpu.memory_space<smem>>
    %548 = vector.broadcast %547 : f32 to vector<8x16xf32>
    %549 = arith.mulf %548, %546 : vector<8x16xf32>
    %550 = arith.addf %517, %549 : vector<8x16xf32>
    %c233 = arith.constant 233 : index
    %551 = memref.load %arg3[%c233] : memref<288xf32, #tpu.memory_space<smem>>
    %552 = vector.broadcast %551 : f32 to vector<8x16xf32>
    %553 = arith.mulf %552, %546 : vector<8x16xf32>
    %554 = arith.addf %521, %553 : vector<8x16xf32>
    %c234 = arith.constant 234 : index
    %555 = memref.load %arg3[%c234] : memref<288xf32, #tpu.memory_space<smem>>
    %556 = vector.broadcast %555 : f32 to vector<8x16xf32>
    %557 = arith.mulf %556, %546 : vector<8x16xf32>
    %558 = arith.addf %525, %557 : vector<8x16xf32>
    %c235 = arith.constant 235 : index
    %559 = memref.load %arg3[%c235] : memref<288xf32, #tpu.memory_space<smem>>
    %560 = vector.broadcast %559 : f32 to vector<8x16xf32>
    %561 = arith.mulf %560, %546 : vector<8x16xf32>
    %562 = arith.addf %529, %561 : vector<8x16xf32>
    %c236 = arith.constant 236 : index
    %563 = memref.load %arg3[%c236] : memref<288xf32, #tpu.memory_space<smem>>
    %564 = vector.broadcast %563 : f32 to vector<8x16xf32>
    %565 = arith.mulf %564, %546 : vector<8x16xf32>
    %566 = arith.addf %533, %565 : vector<8x16xf32>
    %c237 = arith.constant 237 : index
    %567 = memref.load %arg3[%c237] : memref<288xf32, #tpu.memory_space<smem>>
    %568 = vector.broadcast %567 : f32 to vector<8x16xf32>
    %569 = arith.mulf %568, %546 : vector<8x16xf32>
    %570 = arith.addf %537, %569 : vector<8x16xf32>
    %c238 = arith.constant 238 : index
    %571 = memref.load %arg3[%c238] : memref<288xf32, #tpu.memory_space<smem>>
    %572 = vector.broadcast %571 : f32 to vector<8x16xf32>
    %573 = arith.mulf %572, %546 : vector<8x16xf32>
    %574 = arith.addf %541, %573 : vector<8x16xf32>
    %c239 = arith.constant 239 : index
    %575 = memref.load %arg3[%c239] : memref<288xf32, #tpu.memory_space<smem>>
    %576 = vector.broadcast %575 : f32 to vector<8x16xf32>
    %577 = arith.mulf %576, %546 : vector<8x16xf32>
    %578 = arith.addf %545, %577 : vector<8x16xf32>
    %579 = vector.extract_strided_slice %314 {offsets = [2, 2], sizes = [8, 16], strides = [1, 1]} : vector<10x18xf32> to vector<8x16xf32>
    %c264 = arith.constant 264 : index
    %580 = memref.load %arg3[%c264] : memref<288xf32, #tpu.memory_space<smem>>
    %581 = vector.broadcast %580 : f32 to vector<8x16xf32>
    %582 = arith.mulf %581, %579 : vector<8x16xf32>
    %583 = arith.addf %550, %582 : vector<8x16xf32>
    %c265 = arith.constant 265 : index
    %584 = memref.load %arg3[%c265] : memref<288xf32, #tpu.memory_space<smem>>
    %585 = vector.broadcast %584 : f32 to vector<8x16xf32>
    %586 = arith.mulf %585, %579 : vector<8x16xf32>
    %587 = arith.addf %554, %586 : vector<8x16xf32>
    %c266 = arith.constant 266 : index
    %588 = memref.load %arg3[%c266] : memref<288xf32, #tpu.memory_space<smem>>
    %589 = vector.broadcast %588 : f32 to vector<8x16xf32>
    %590 = arith.mulf %589, %579 : vector<8x16xf32>
    %591 = arith.addf %558, %590 : vector<8x16xf32>
    %c267 = arith.constant 267 : index
    %592 = memref.load %arg3[%c267] : memref<288xf32, #tpu.memory_space<smem>>
    %593 = vector.broadcast %592 : f32 to vector<8x16xf32>
    %594 = arith.mulf %593, %579 : vector<8x16xf32>
    %595 = arith.addf %562, %594 : vector<8x16xf32>
    %c268 = arith.constant 268 : index
    %596 = memref.load %arg3[%c268] : memref<288xf32, #tpu.memory_space<smem>>
    %597 = vector.broadcast %596 : f32 to vector<8x16xf32>
    %598 = arith.mulf %597, %579 : vector<8x16xf32>
    %599 = arith.addf %566, %598 : vector<8x16xf32>
    %c269 = arith.constant 269 : index
    %600 = memref.load %arg3[%c269] : memref<288xf32, #tpu.memory_space<smem>>
    %601 = vector.broadcast %600 : f32 to vector<8x16xf32>
    %602 = arith.mulf %601, %579 : vector<8x16xf32>
    %603 = arith.addf %570, %602 : vector<8x16xf32>
    %c270 = arith.constant 270 : index
    %604 = memref.load %arg3[%c270] : memref<288xf32, #tpu.memory_space<smem>>
    %605 = vector.broadcast %604 : f32 to vector<8x16xf32>
    %606 = arith.mulf %605, %579 : vector<8x16xf32>
    %607 = arith.addf %574, %606 : vector<8x16xf32>
    %c271 = arith.constant 271 : index
    %608 = memref.load %arg3[%c271] : memref<288xf32, #tpu.memory_space<smem>>
    %609 = vector.broadcast %608 : f32 to vector<8x16xf32>
    %610 = arith.mulf %609, %579 : vector<8x16xf32>
    %611 = arith.addf %578, %610 : vector<8x16xf32>
    %c0_13 = arith.constant 0 : index
    %c2_14 = arith.constant 2 : index
    %612 = arith.index_cast %1 : i32 to index
    %c0_15 = arith.constant 0 : index
    %613 = vector.load %arg2[%c0_13, %c2_14, %612, %c0_15] : memref<1x4x18x18xbf16, #tpu.memory_space<vmem>>, vector<1x1x10x18xbf16>
    %614 = vector.shape_cast %613 : vector<1x1x10x18xbf16> to vector<10x18xbf16>
    %615 = arith.extf %614 : vector<10x18xbf16> to vector<10x18xf32>
    %616 = vector.extract_strided_slice %615 {offsets = [0, 0], sizes = [8, 16], strides = [1, 1]} : vector<10x18xf32> to vector<8x16xf32>
    %c16 = arith.constant 16 : index
    %617 = memref.load %arg3[%c16] : memref<288xf32, #tpu.memory_space<smem>>
    %618 = vector.broadcast %617 : f32 to vector<8x16xf32>
    %619 = arith.mulf %618, %616 : vector<8x16xf32>
    %620 = arith.addf %583, %619 : vector<8x16xf32>
    %c17 = arith.constant 17 : index
    %621 = memref.load %arg3[%c17] : memref<288xf32, #tpu.memory_space<smem>>
    %622 = vector.broadcast %621 : f32 to vector<8x16xf32>
    %623 = arith.mulf %622, %616 : vector<8x16xf32>
    %624 = arith.addf %587, %623 : vector<8x16xf32>
    %c18 = arith.constant 18 : index
    %625 = memref.load %arg3[%c18] : memref<288xf32, #tpu.memory_space<smem>>
    %626 = vector.broadcast %625 : f32 to vector<8x16xf32>
    %627 = arith.mulf %626, %616 : vector<8x16xf32>
    %628 = arith.addf %591, %627 : vector<8x16xf32>
    %c19 = arith.constant 19 : index
    %629 = memref.load %arg3[%c19] : memref<288xf32, #tpu.memory_space<smem>>
    %630 = vector.broadcast %629 : f32 to vector<8x16xf32>
    %631 = arith.mulf %630, %616 : vector<8x16xf32>
    %632 = arith.addf %595, %631 : vector<8x16xf32>
    %c20 = arith.constant 20 : index
    %633 = memref.load %arg3[%c20] : memref<288xf32, #tpu.memory_space<smem>>
    %634 = vector.broadcast %633 : f32 to vector<8x16xf32>
    %635 = arith.mulf %634, %616 : vector<8x16xf32>
    %636 = arith.addf %599, %635 : vector<8x16xf32>
    %c21 = arith.constant 21 : index
    %637 = memref.load %arg3[%c21] : memref<288xf32, #tpu.memory_space<smem>>
    %638 = vector.broadcast %637 : f32 to vector<8x16xf32>
    %639 = arith.mulf %638, %616 : vector<8x16xf32>
    %640 = arith.addf %603, %639 : vector<8x16xf32>
    %c22 = arith.constant 22 : index
    %641 = memref.load %arg3[%c22] : memref<288xf32, #tpu.memory_space<smem>>
    %642 = vector.broadcast %641 : f32 to vector<8x16xf32>
    %643 = arith.mulf %642, %616 : vector<8x16xf32>
    %644 = arith.addf %607, %643 : vector<8x16xf32>
    %c23 = arith.constant 23 : index
    %645 = memref.load %arg3[%c23] : memref<288xf32, #tpu.memory_space<smem>>
    %646 = vector.broadcast %645 : f32 to vector<8x16xf32>
    %647 = arith.mulf %646, %616 : vector<8x16xf32>
    %648 = arith.addf %611, %647 : vector<8x16xf32>
    %649 = vector.extract_strided_slice %615 {offsets = [0, 1], sizes = [8, 16], strides = [1, 1]} : vector<10x18xf32> to vector<8x16xf32>
    %c48 = arith.constant 48 : index
    %650 = memref.load %arg3[%c48] : memref<288xf32, #tpu.memory_space<smem>>
    %651 = vector.broadcast %650 : f32 to vector<8x16xf32>
    %652 = arith.mulf %651, %649 : vector<8x16xf32>
    %653 = arith.addf %620, %652 : vector<8x16xf32>
    %c49 = arith.constant 49 : index
    %654 = memref.load %arg3[%c49] : memref<288xf32, #tpu.memory_space<smem>>
    %655 = vector.broadcast %654 : f32 to vector<8x16xf32>
    %656 = arith.mulf %655, %649 : vector<8x16xf32>
    %657 = arith.addf %624, %656 : vector<8x16xf32>
    %c50 = arith.constant 50 : index
    %658 = memref.load %arg3[%c50] : memref<288xf32, #tpu.memory_space<smem>>
    %659 = vector.broadcast %658 : f32 to vector<8x16xf32>
    %660 = arith.mulf %659, %649 : vector<8x16xf32>
    %661 = arith.addf %628, %660 : vector<8x16xf32>
    %c51 = arith.constant 51 : index
    %662 = memref.load %arg3[%c51] : memref<288xf32, #tpu.memory_space<smem>>
    %663 = vector.broadcast %662 : f32 to vector<8x16xf32>
    %664 = arith.mulf %663, %649 : vector<8x16xf32>
    %665 = arith.addf %632, %664 : vector<8x16xf32>
    %c52 = arith.constant 52 : index
    %666 = memref.load %arg3[%c52] : memref<288xf32, #tpu.memory_space<smem>>
    %667 = vector.broadcast %666 : f32 to vector<8x16xf32>
    %668 = arith.mulf %667, %649 : vector<8x16xf32>
    %669 = arith.addf %636, %668 : vector<8x16xf32>
    %c53 = arith.constant 53 : index
    %670 = memref.load %arg3[%c53] : memref<288xf32, #tpu.memory_space<smem>>
    %671 = vector.broadcast %670 : f32 to vector<8x16xf32>
    %672 = arith.mulf %671, %649 : vector<8x16xf32>
    %673 = arith.addf %640, %672 : vector<8x16xf32>
    %c54 = arith.constant 54 : index
    %674 = memref.load %arg3[%c54] : memref<288xf32, #tpu.memory_space<smem>>
    %675 = vector.broadcast %674 : f32 to vector<8x16xf32>
    %676 = arith.mulf %675, %649 : vector<8x16xf32>
    %677 = arith.addf %644, %676 : vector<8x16xf32>
    %c55 = arith.constant 55 : index
    %678 = memref.load %arg3[%c55] : memref<288xf32, #tpu.memory_space<smem>>
    %679 = vector.broadcast %678 : f32 to vector<8x16xf32>
    %680 = arith.mulf %679, %649 : vector<8x16xf32>
    %681 = arith.addf %648, %680 : vector<8x16xf32>
    %682 = vector.extract_strided_slice %615 {offsets = [0, 2], sizes = [8, 16], strides = [1, 1]} : vector<10x18xf32> to vector<8x16xf32>
    %c80 = arith.constant 80 : index
    %683 = memref.load %arg3[%c80] : memref<288xf32, #tpu.memory_space<smem>>
    %684 = vector.broadcast %683 : f32 to vector<8x16xf32>
    %685 = arith.mulf %684, %682 : vector<8x16xf32>
    %686 = arith.addf %653, %685 : vector<8x16xf32>
    %c81 = arith.constant 81 : index
    %687 = memref.load %arg3[%c81] : memref<288xf32, #tpu.memory_space<smem>>
    %688 = vector.broadcast %687 : f32 to vector<8x16xf32>
    %689 = arith.mulf %688, %682 : vector<8x16xf32>
    %690 = arith.addf %657, %689 : vector<8x16xf32>
    %c82 = arith.constant 82 : index
    %691 = memref.load %arg3[%c82] : memref<288xf32, #tpu.memory_space<smem>>
    %692 = vector.broadcast %691 : f32 to vector<8x16xf32>
    %693 = arith.mulf %692, %682 : vector<8x16xf32>
    %694 = arith.addf %661, %693 : vector<8x16xf32>
    %c83 = arith.constant 83 : index
    %695 = memref.load %arg3[%c83] : memref<288xf32, #tpu.memory_space<smem>>
    %696 = vector.broadcast %695 : f32 to vector<8x16xf32>
    %697 = arith.mulf %696, %682 : vector<8x16xf32>
    %698 = arith.addf %665, %697 : vector<8x16xf32>
    %c84 = arith.constant 84 : index
    %699 = memref.load %arg3[%c84] : memref<288xf32, #tpu.memory_space<smem>>
    %700 = vector.broadcast %699 : f32 to vector<8x16xf32>
    %701 = arith.mulf %700, %682 : vector<8x16xf32>
    %702 = arith.addf %669, %701 : vector<8x16xf32>
    %c85 = arith.constant 85 : index
    %703 = memref.load %arg3[%c85] : memref<288xf32, #tpu.memory_space<smem>>
    %704 = vector.broadcast %703 : f32 to vector<8x16xf32>
    %705 = arith.mulf %704, %682 : vector<8x16xf32>
    %706 = arith.addf %673, %705 : vector<8x16xf32>
    %c86 = arith.constant 86 : index
    %707 = memref.load %arg3[%c86] : memref<288xf32, #tpu.memory_space<smem>>
    %708 = vector.broadcast %707 : f32 to vector<8x16xf32>
    %709 = arith.mulf %708, %682 : vector<8x16xf32>
    %710 = arith.addf %677, %709 : vector<8x16xf32>
    %c87 = arith.constant 87 : index
    %711 = memref.load %arg3[%c87] : memref<288xf32, #tpu.memory_space<smem>>
    %712 = vector.broadcast %711 : f32 to vector<8x16xf32>
    %713 = arith.mulf %712, %682 : vector<8x16xf32>
    %714 = arith.addf %681, %713 : vector<8x16xf32>
    %715 = vector.extract_strided_slice %615 {offsets = [1, 0], sizes = [8, 16], strides = [1, 1]} : vector<10x18xf32> to vector<8x16xf32>
    %c112 = arith.constant 112 : index
    %716 = memref.load %arg3[%c112] : memref<288xf32, #tpu.memory_space<smem>>
    %717 = vector.broadcast %716 : f32 to vector<8x16xf32>
    %718 = arith.mulf %717, %715 : vector<8x16xf32>
    %719 = arith.addf %686, %718 : vector<8x16xf32>
    %c113 = arith.constant 113 : index
    %720 = memref.load %arg3[%c113] : memref<288xf32, #tpu.memory_space<smem>>
    %721 = vector.broadcast %720 : f32 to vector<8x16xf32>
    %722 = arith.mulf %721, %715 : vector<8x16xf32>
    %723 = arith.addf %690, %722 : vector<8x16xf32>
    %c114 = arith.constant 114 : index
    %724 = memref.load %arg3[%c114] : memref<288xf32, #tpu.memory_space<smem>>
    %725 = vector.broadcast %724 : f32 to vector<8x16xf32>
    %726 = arith.mulf %725, %715 : vector<8x16xf32>
    %727 = arith.addf %694, %726 : vector<8x16xf32>
    %c115 = arith.constant 115 : index
    %728 = memref.load %arg3[%c115] : memref<288xf32, #tpu.memory_space<smem>>
    %729 = vector.broadcast %728 : f32 to vector<8x16xf32>
    %730 = arith.mulf %729, %715 : vector<8x16xf32>
    %731 = arith.addf %698, %730 : vector<8x16xf32>
    %c116 = arith.constant 116 : index
    %732 = memref.load %arg3[%c116] : memref<288xf32, #tpu.memory_space<smem>>
    %733 = vector.broadcast %732 : f32 to vector<8x16xf32>
    %734 = arith.mulf %733, %715 : vector<8x16xf32>
    %735 = arith.addf %702, %734 : vector<8x16xf32>
    %c117 = arith.constant 117 : index
    %736 = memref.load %arg3[%c117] : memref<288xf32, #tpu.memory_space<smem>>
    %737 = vector.broadcast %736 : f32 to vector<8x16xf32>
    %738 = arith.mulf %737, %715 : vector<8x16xf32>
    %739 = arith.addf %706, %738 : vector<8x16xf32>
    %c118 = arith.constant 118 : index
    %740 = memref.load %arg3[%c118] : memref<288xf32, #tpu.memory_space<smem>>
    %741 = vector.broadcast %740 : f32 to vector<8x16xf32>
    %742 = arith.mulf %741, %715 : vector<8x16xf32>
    %743 = arith.addf %710, %742 : vector<8x16xf32>
    %c119 = arith.constant 119 : index
    %744 = memref.load %arg3[%c119] : memref<288xf32, #tpu.memory_space<smem>>
    %745 = vector.broadcast %744 : f32 to vector<8x16xf32>
    %746 = arith.mulf %745, %715 : vector<8x16xf32>
    %747 = arith.addf %714, %746 : vector<8x16xf32>
    %748 = vector.extract_strided_slice %615 {offsets = [1, 1], sizes = [8, 16], strides = [1, 1]} : vector<10x18xf32> to vector<8x16xf32>
    %c144 = arith.constant 144 : index
    %749 = memref.load %arg3[%c144] : memref<288xf32, #tpu.memory_space<smem>>
    %750 = vector.broadcast %749 : f32 to vector<8x16xf32>
    %751 = arith.mulf %750, %748 : vector<8x16xf32>
    %752 = arith.addf %719, %751 : vector<8x16xf32>
    %c145 = arith.constant 145 : index
    %753 = memref.load %arg3[%c145] : memref<288xf32, #tpu.memory_space<smem>>
    %754 = vector.broadcast %753 : f32 to vector<8x16xf32>
    %755 = arith.mulf %754, %748 : vector<8x16xf32>
    %756 = arith.addf %723, %755 : vector<8x16xf32>
    %c146 = arith.constant 146 : index
    %757 = memref.load %arg3[%c146] : memref<288xf32, #tpu.memory_space<smem>>
    %758 = vector.broadcast %757 : f32 to vector<8x16xf32>
    %759 = arith.mulf %758, %748 : vector<8x16xf32>
    %760 = arith.addf %727, %759 : vector<8x16xf32>
    %c147 = arith.constant 147 : index
    %761 = memref.load %arg3[%c147] : memref<288xf32, #tpu.memory_space<smem>>
    %762 = vector.broadcast %761 : f32 to vector<8x16xf32>
    %763 = arith.mulf %762, %748 : vector<8x16xf32>
    %764 = arith.addf %731, %763 : vector<8x16xf32>
    %c148 = arith.constant 148 : index
    %765 = memref.load %arg3[%c148] : memref<288xf32, #tpu.memory_space<smem>>
    %766 = vector.broadcast %765 : f32 to vector<8x16xf32>
    %767 = arith.mulf %766, %748 : vector<8x16xf32>
    %768 = arith.addf %735, %767 : vector<8x16xf32>
    %c149 = arith.constant 149 : index
    %769 = memref.load %arg3[%c149] : memref<288xf32, #tpu.memory_space<smem>>
    %770 = vector.broadcast %769 : f32 to vector<8x16xf32>
    %771 = arith.mulf %770, %748 : vector<8x16xf32>
    %772 = arith.addf %739, %771 : vector<8x16xf32>
    %c150 = arith.constant 150 : index
    %773 = memref.load %arg3[%c150] : memref<288xf32, #tpu.memory_space<smem>>
    %774 = vector.broadcast %773 : f32 to vector<8x16xf32>
    %775 = arith.mulf %774, %748 : vector<8x16xf32>
    %776 = arith.addf %743, %775 : vector<8x16xf32>
    %c151 = arith.constant 151 : index
    %777 = memref.load %arg3[%c151] : memref<288xf32, #tpu.memory_space<smem>>
    %778 = vector.broadcast %777 : f32 to vector<8x16xf32>
    %779 = arith.mulf %778, %748 : vector<8x16xf32>
    %780 = arith.addf %747, %779 : vector<8x16xf32>
    %781 = vector.extract_strided_slice %615 {offsets = [1, 2], sizes = [8, 16], strides = [1, 1]} : vector<10x18xf32> to vector<8x16xf32>
    %c176 = arith.constant 176 : index
    %782 = memref.load %arg3[%c176] : memref<288xf32, #tpu.memory_space<smem>>
    %783 = vector.broadcast %782 : f32 to vector<8x16xf32>
    %784 = arith.mulf %783, %781 : vector<8x16xf32>
    %785 = arith.addf %752, %784 : vector<8x16xf32>
    %c177 = arith.constant 177 : index
    %786 = memref.load %arg3[%c177] : memref<288xf32, #tpu.memory_space<smem>>
    %787 = vector.broadcast %786 : f32 to vector<8x16xf32>
    %788 = arith.mulf %787, %781 : vector<8x16xf32>
    %789 = arith.addf %756, %788 : vector<8x16xf32>
    %c178 = arith.constant 178 : index
    %790 = memref.load %arg3[%c178] : memref<288xf32, #tpu.memory_space<smem>>
    %791 = vector.broadcast %790 : f32 to vector<8x16xf32>
    %792 = arith.mulf %791, %781 : vector<8x16xf32>
    %793 = arith.addf %760, %792 : vector<8x16xf32>
    %c179 = arith.constant 179 : index
    %794 = memref.load %arg3[%c179] : memref<288xf32, #tpu.memory_space<smem>>
    %795 = vector.broadcast %794 : f32 to vector<8x16xf32>
    %796 = arith.mulf %795, %781 : vector<8x16xf32>
    %797 = arith.addf %764, %796 : vector<8x16xf32>
    %c180 = arith.constant 180 : index
    %798 = memref.load %arg3[%c180] : memref<288xf32, #tpu.memory_space<smem>>
    %799 = vector.broadcast %798 : f32 to vector<8x16xf32>
    %800 = arith.mulf %799, %781 : vector<8x16xf32>
    %801 = arith.addf %768, %800 : vector<8x16xf32>
    %c181 = arith.constant 181 : index
    %802 = memref.load %arg3[%c181] : memref<288xf32, #tpu.memory_space<smem>>
    %803 = vector.broadcast %802 : f32 to vector<8x16xf32>
    %804 = arith.mulf %803, %781 : vector<8x16xf32>
    %805 = arith.addf %772, %804 : vector<8x16xf32>
    %c182 = arith.constant 182 : index
    %806 = memref.load %arg3[%c182] : memref<288xf32, #tpu.memory_space<smem>>
    %807 = vector.broadcast %806 : f32 to vector<8x16xf32>
    %808 = arith.mulf %807, %781 : vector<8x16xf32>
    %809 = arith.addf %776, %808 : vector<8x16xf32>
    %c183 = arith.constant 183 : index
    %810 = memref.load %arg3[%c183] : memref<288xf32, #tpu.memory_space<smem>>
    %811 = vector.broadcast %810 : f32 to vector<8x16xf32>
    %812 = arith.mulf %811, %781 : vector<8x16xf32>
    %813 = arith.addf %780, %812 : vector<8x16xf32>
    %814 = vector.extract_strided_slice %615 {offsets = [2, 0], sizes = [8, 16], strides = [1, 1]} : vector<10x18xf32> to vector<8x16xf32>
    %c208 = arith.constant 208 : index
    %815 = memref.load %arg3[%c208] : memref<288xf32, #tpu.memory_space<smem>>
    %816 = vector.broadcast %815 : f32 to vector<8x16xf32>
    %817 = arith.mulf %816, %814 : vector<8x16xf32>
    %818 = arith.addf %785, %817 : vector<8x16xf32>
    %c209 = arith.constant 209 : index
    %819 = memref.load %arg3[%c209] : memref<288xf32, #tpu.memory_space<smem>>
    %820 = vector.broadcast %819 : f32 to vector<8x16xf32>
    %821 = arith.mulf %820, %814 : vector<8x16xf32>
    %822 = arith.addf %789, %821 : vector<8x16xf32>
    %c210 = arith.constant 210 : index
    %823 = memref.load %arg3[%c210] : memref<288xf32, #tpu.memory_space<smem>>
    %824 = vector.broadcast %823 : f32 to vector<8x16xf32>
    %825 = arith.mulf %824, %814 : vector<8x16xf32>
    %826 = arith.addf %793, %825 : vector<8x16xf32>
    %c211 = arith.constant 211 : index
    %827 = memref.load %arg3[%c211] : memref<288xf32, #tpu.memory_space<smem>>
    %828 = vector.broadcast %827 : f32 to vector<8x16xf32>
    %829 = arith.mulf %828, %814 : vector<8x16xf32>
    %830 = arith.addf %797, %829 : vector<8x16xf32>
    %c212 = arith.constant 212 : index
    %831 = memref.load %arg3[%c212] : memref<288xf32, #tpu.memory_space<smem>>
    %832 = vector.broadcast %831 : f32 to vector<8x16xf32>
    %833 = arith.mulf %832, %814 : vector<8x16xf32>
    %834 = arith.addf %801, %833 : vector<8x16xf32>
    %c213 = arith.constant 213 : index
    %835 = memref.load %arg3[%c213] : memref<288xf32, #tpu.memory_space<smem>>
    %836 = vector.broadcast %835 : f32 to vector<8x16xf32>
    %837 = arith.mulf %836, %814 : vector<8x16xf32>
    %838 = arith.addf %805, %837 : vector<8x16xf32>
    %c214 = arith.constant 214 : index
    %839 = memref.load %arg3[%c214] : memref<288xf32, #tpu.memory_space<smem>>
    %840 = vector.broadcast %839 : f32 to vector<8x16xf32>
    %841 = arith.mulf %840, %814 : vector<8x16xf32>
    %842 = arith.addf %809, %841 : vector<8x16xf32>
    %c215 = arith.constant 215 : index
    %843 = memref.load %arg3[%c215] : memref<288xf32, #tpu.memory_space<smem>>
    %844 = vector.broadcast %843 : f32 to vector<8x16xf32>
    %845 = arith.mulf %844, %814 : vector<8x16xf32>
    %846 = arith.addf %813, %845 : vector<8x16xf32>
    %847 = vector.extract_strided_slice %615 {offsets = [2, 1], sizes = [8, 16], strides = [1, 1]} : vector<10x18xf32> to vector<8x16xf32>
    %c240 = arith.constant 240 : index
    %848 = memref.load %arg3[%c240] : memref<288xf32, #tpu.memory_space<smem>>
    %849 = vector.broadcast %848 : f32 to vector<8x16xf32>
    %850 = arith.mulf %849, %847 : vector<8x16xf32>
    %851 = arith.addf %818, %850 : vector<8x16xf32>
    %c241 = arith.constant 241 : index
    %852 = memref.load %arg3[%c241] : memref<288xf32, #tpu.memory_space<smem>>
    %853 = vector.broadcast %852 : f32 to vector<8x16xf32>
    %854 = arith.mulf %853, %847 : vector<8x16xf32>
    %855 = arith.addf %822, %854 : vector<8x16xf32>
    %c242 = arith.constant 242 : index
    %856 = memref.load %arg3[%c242] : memref<288xf32, #tpu.memory_space<smem>>
    %857 = vector.broadcast %856 : f32 to vector<8x16xf32>
    %858 = arith.mulf %857, %847 : vector<8x16xf32>
    %859 = arith.addf %826, %858 : vector<8x16xf32>
    %c243 = arith.constant 243 : index
    %860 = memref.load %arg3[%c243] : memref<288xf32, #tpu.memory_space<smem>>
    %861 = vector.broadcast %860 : f32 to vector<8x16xf32>
    %862 = arith.mulf %861, %847 : vector<8x16xf32>
    %863 = arith.addf %830, %862 : vector<8x16xf32>
    %c244 = arith.constant 244 : index
    %864 = memref.load %arg3[%c244] : memref<288xf32, #tpu.memory_space<smem>>
    %865 = vector.broadcast %864 : f32 to vector<8x16xf32>
    %866 = arith.mulf %865, %847 : vector<8x16xf32>
    %867 = arith.addf %834, %866 : vector<8x16xf32>
    %c245 = arith.constant 245 : index
    %868 = memref.load %arg3[%c245] : memref<288xf32, #tpu.memory_space<smem>>
    %869 = vector.broadcast %868 : f32 to vector<8x16xf32>
    %870 = arith.mulf %869, %847 : vector<8x16xf32>
    %871 = arith.addf %838, %870 : vector<8x16xf32>
    %c246 = arith.constant 246 : index
    %872 = memref.load %arg3[%c246] : memref<288xf32, #tpu.memory_space<smem>>
    %873 = vector.broadcast %872 : f32 to vector<8x16xf32>
    %874 = arith.mulf %873, %847 : vector<8x16xf32>
    %875 = arith.addf %842, %874 : vector<8x16xf32>
    %c247 = arith.constant 247 : index
    %876 = memref.load %arg3[%c247] : memref<288xf32, #tpu.memory_space<smem>>
    %877 = vector.broadcast %876 : f32 to vector<8x16xf32>
    %878 = arith.mulf %877, %847 : vector<8x16xf32>
    %879 = arith.addf %846, %878 : vector<8x16xf32>
    %880 = vector.extract_strided_slice %615 {offsets = [2, 2], sizes = [8, 16], strides = [1, 1]} : vector<10x18xf32> to vector<8x16xf32>
    %c272 = arith.constant 272 : index
    %881 = memref.load %arg3[%c272] : memref<288xf32, #tpu.memory_space<smem>>
    %882 = vector.broadcast %881 : f32 to vector<8x16xf32>
    %883 = arith.mulf %882, %880 : vector<8x16xf32>
    %884 = arith.addf %851, %883 : vector<8x16xf32>
    %c273 = arith.constant 273 : index
    %885 = memref.load %arg3[%c273] : memref<288xf32, #tpu.memory_space<smem>>
    %886 = vector.broadcast %885 : f32 to vector<8x16xf32>
    %887 = arith.mulf %886, %880 : vector<8x16xf32>
    %888 = arith.addf %855, %887 : vector<8x16xf32>
    %c274 = arith.constant 274 : index
    %889 = memref.load %arg3[%c274] : memref<288xf32, #tpu.memory_space<smem>>
    %890 = vector.broadcast %889 : f32 to vector<8x16xf32>
    %891 = arith.mulf %890, %880 : vector<8x16xf32>
    %892 = arith.addf %859, %891 : vector<8x16xf32>
    %c275 = arith.constant 275 : index
    %893 = memref.load %arg3[%c275] : memref<288xf32, #tpu.memory_space<smem>>
    %894 = vector.broadcast %893 : f32 to vector<8x16xf32>
    %895 = arith.mulf %894, %880 : vector<8x16xf32>
    %896 = arith.addf %863, %895 : vector<8x16xf32>
    %c276 = arith.constant 276 : index
    %897 = memref.load %arg3[%c276] : memref<288xf32, #tpu.memory_space<smem>>
    %898 = vector.broadcast %897 : f32 to vector<8x16xf32>
    %899 = arith.mulf %898, %880 : vector<8x16xf32>
    %900 = arith.addf %867, %899 : vector<8x16xf32>
    %c277 = arith.constant 277 : index
    %901 = memref.load %arg3[%c277] : memref<288xf32, #tpu.memory_space<smem>>
    %902 = vector.broadcast %901 : f32 to vector<8x16xf32>
    %903 = arith.mulf %902, %880 : vector<8x16xf32>
    %904 = arith.addf %871, %903 : vector<8x16xf32>
    %c278 = arith.constant 278 : index
    %905 = memref.load %arg3[%c278] : memref<288xf32, #tpu.memory_space<smem>>
    %906 = vector.broadcast %905 : f32 to vector<8x16xf32>
    %907 = arith.mulf %906, %880 : vector<8x16xf32>
    %908 = arith.addf %875, %907 : vector<8x16xf32>
    %c279 = arith.constant 279 : index
    %909 = memref.load %arg3[%c279] : memref<288xf32, #tpu.memory_space<smem>>
    %910 = vector.broadcast %909 : f32 to vector<8x16xf32>
    %911 = arith.mulf %910, %880 : vector<8x16xf32>
    %912 = arith.addf %879, %911 : vector<8x16xf32>
    %c0_16 = arith.constant 0 : index
    %c3_17 = arith.constant 3 : index
    %913 = arith.index_cast %1 : i32 to index
    %c0_18 = arith.constant 0 : index
    %914 = vector.load %arg2[%c0_16, %c3_17, %913, %c0_18] : memref<1x4x18x18xbf16, #tpu.memory_space<vmem>>, vector<1x1x10x18xbf16>
    %915 = vector.shape_cast %914 : vector<1x1x10x18xbf16> to vector<10x18xbf16>
    %916 = arith.extf %915 : vector<10x18xbf16> to vector<10x18xf32>
    %917 = vector.extract_strided_slice %916 {offsets = [0, 0], sizes = [8, 16], strides = [1, 1]} : vector<10x18xf32> to vector<8x16xf32>
    %c24 = arith.constant 24 : index
    %918 = memref.load %arg3[%c24] : memref<288xf32, #tpu.memory_space<smem>>
    %919 = vector.broadcast %918 : f32 to vector<8x16xf32>
    %920 = arith.mulf %919, %917 : vector<8x16xf32>
    %921 = arith.addf %884, %920 : vector<8x16xf32>
    %c25 = arith.constant 25 : index
    %922 = memref.load %arg3[%c25] : memref<288xf32, #tpu.memory_space<smem>>
    %923 = vector.broadcast %922 : f32 to vector<8x16xf32>
    %924 = arith.mulf %923, %917 : vector<8x16xf32>
    %925 = arith.addf %888, %924 : vector<8x16xf32>
    %c26 = arith.constant 26 : index
    %926 = memref.load %arg3[%c26] : memref<288xf32, #tpu.memory_space<smem>>
    %927 = vector.broadcast %926 : f32 to vector<8x16xf32>
    %928 = arith.mulf %927, %917 : vector<8x16xf32>
    %929 = arith.addf %892, %928 : vector<8x16xf32>
    %c27 = arith.constant 27 : index
    %930 = memref.load %arg3[%c27] : memref<288xf32, #tpu.memory_space<smem>>
    %931 = vector.broadcast %930 : f32 to vector<8x16xf32>
    %932 = arith.mulf %931, %917 : vector<8x16xf32>
    %933 = arith.addf %896, %932 : vector<8x16xf32>
    %c28 = arith.constant 28 : index
    %934 = memref.load %arg3[%c28] : memref<288xf32, #tpu.memory_space<smem>>
    %935 = vector.broadcast %934 : f32 to vector<8x16xf32>
    %936 = arith.mulf %935, %917 : vector<8x16xf32>
    %937 = arith.addf %900, %936 : vector<8x16xf32>
    %c29 = arith.constant 29 : index
    %938 = memref.load %arg3[%c29] : memref<288xf32, #tpu.memory_space<smem>>
    %939 = vector.broadcast %938 : f32 to vector<8x16xf32>
    %940 = arith.mulf %939, %917 : vector<8x16xf32>
    %941 = arith.addf %904, %940 : vector<8x16xf32>
    %c30 = arith.constant 30 : index
    %942 = memref.load %arg3[%c30] : memref<288xf32, #tpu.memory_space<smem>>
    %943 = vector.broadcast %942 : f32 to vector<8x16xf32>
    %944 = arith.mulf %943, %917 : vector<8x16xf32>
    %945 = arith.addf %908, %944 : vector<8x16xf32>
    %c31 = arith.constant 31 : index
    %946 = memref.load %arg3[%c31] : memref<288xf32, #tpu.memory_space<smem>>
    %947 = vector.broadcast %946 : f32 to vector<8x16xf32>
    %948 = arith.mulf %947, %917 : vector<8x16xf32>
    %949 = arith.addf %912, %948 : vector<8x16xf32>
    %950 = vector.extract_strided_slice %916 {offsets = [0, 1], sizes = [8, 16], strides = [1, 1]} : vector<10x18xf32> to vector<8x16xf32>
    %c56 = arith.constant 56 : index
    %951 = memref.load %arg3[%c56] : memref<288xf32, #tpu.memory_space<smem>>
    %952 = vector.broadcast %951 : f32 to vector<8x16xf32>
    %953 = arith.mulf %952, %950 : vector<8x16xf32>
    %954 = arith.addf %921, %953 : vector<8x16xf32>
    %c57 = arith.constant 57 : index
    %955 = memref.load %arg3[%c57] : memref<288xf32, #tpu.memory_space<smem>>
    %956 = vector.broadcast %955 : f32 to vector<8x16xf32>
    %957 = arith.mulf %956, %950 : vector<8x16xf32>
    %958 = arith.addf %925, %957 : vector<8x16xf32>
    %c58 = arith.constant 58 : index
    %959 = memref.load %arg3[%c58] : memref<288xf32, #tpu.memory_space<smem>>
    %960 = vector.broadcast %959 : f32 to vector<8x16xf32>
    %961 = arith.mulf %960, %950 : vector<8x16xf32>
    %962 = arith.addf %929, %961 : vector<8x16xf32>
    %c59 = arith.constant 59 : index
    %963 = memref.load %arg3[%c59] : memref<288xf32, #tpu.memory_space<smem>>
    %964 = vector.broadcast %963 : f32 to vector<8x16xf32>
    %965 = arith.mulf %964, %950 : vector<8x16xf32>
    %966 = arith.addf %933, %965 : vector<8x16xf32>
    %c60 = arith.constant 60 : index
    %967 = memref.load %arg3[%c60] : memref<288xf32, #tpu.memory_space<smem>>
    %968 = vector.broadcast %967 : f32 to vector<8x16xf32>
    %969 = arith.mulf %968, %950 : vector<8x16xf32>
    %970 = arith.addf %937, %969 : vector<8x16xf32>
    %c61 = arith.constant 61 : index
    %971 = memref.load %arg3[%c61] : memref<288xf32, #tpu.memory_space<smem>>
    %972 = vector.broadcast %971 : f32 to vector<8x16xf32>
    %973 = arith.mulf %972, %950 : vector<8x16xf32>
    %974 = arith.addf %941, %973 : vector<8x16xf32>
    %c62 = arith.constant 62 : index
    %975 = memref.load %arg3[%c62] : memref<288xf32, #tpu.memory_space<smem>>
    %976 = vector.broadcast %975 : f32 to vector<8x16xf32>
    %977 = arith.mulf %976, %950 : vector<8x16xf32>
    %978 = arith.addf %945, %977 : vector<8x16xf32>
    %c63 = arith.constant 63 : index
    %979 = memref.load %arg3[%c63] : memref<288xf32, #tpu.memory_space<smem>>
    %980 = vector.broadcast %979 : f32 to vector<8x16xf32>
    %981 = arith.mulf %980, %950 : vector<8x16xf32>
    %982 = arith.addf %949, %981 : vector<8x16xf32>
    %983 = vector.extract_strided_slice %916 {offsets = [0, 2], sizes = [8, 16], strides = [1, 1]} : vector<10x18xf32> to vector<8x16xf32>
    %c88 = arith.constant 88 : index
    %984 = memref.load %arg3[%c88] : memref<288xf32, #tpu.memory_space<smem>>
    %985 = vector.broadcast %984 : f32 to vector<8x16xf32>
    %986 = arith.mulf %985, %983 : vector<8x16xf32>
    %987 = arith.addf %954, %986 : vector<8x16xf32>
    %c89 = arith.constant 89 : index
    %988 = memref.load %arg3[%c89] : memref<288xf32, #tpu.memory_space<smem>>
    %989 = vector.broadcast %988 : f32 to vector<8x16xf32>
    %990 = arith.mulf %989, %983 : vector<8x16xf32>
    %991 = arith.addf %958, %990 : vector<8x16xf32>
    %c90 = arith.constant 90 : index
    %992 = memref.load %arg3[%c90] : memref<288xf32, #tpu.memory_space<smem>>
    %993 = vector.broadcast %992 : f32 to vector<8x16xf32>
    %994 = arith.mulf %993, %983 : vector<8x16xf32>
    %995 = arith.addf %962, %994 : vector<8x16xf32>
    %c91 = arith.constant 91 : index
    %996 = memref.load %arg3[%c91] : memref<288xf32, #tpu.memory_space<smem>>
    %997 = vector.broadcast %996 : f32 to vector<8x16xf32>
    %998 = arith.mulf %997, %983 : vector<8x16xf32>
    %999 = arith.addf %966, %998 : vector<8x16xf32>
    %c92 = arith.constant 92 : index
    %1000 = memref.load %arg3[%c92] : memref<288xf32, #tpu.memory_space<smem>>
    %1001 = vector.broadcast %1000 : f32 to vector<8x16xf32>
    %1002 = arith.mulf %1001, %983 : vector<8x16xf32>
    %1003 = arith.addf %970, %1002 : vector<8x16xf32>
    %c93 = arith.constant 93 : index
    %1004 = memref.load %arg3[%c93] : memref<288xf32, #tpu.memory_space<smem>>
    %1005 = vector.broadcast %1004 : f32 to vector<8x16xf32>
    %1006 = arith.mulf %1005, %983 : vector<8x16xf32>
    %1007 = arith.addf %974, %1006 : vector<8x16xf32>
    %c94 = arith.constant 94 : index
    %1008 = memref.load %arg3[%c94] : memref<288xf32, #tpu.memory_space<smem>>
    %1009 = vector.broadcast %1008 : f32 to vector<8x16xf32>
    %1010 = arith.mulf %1009, %983 : vector<8x16xf32>
    %1011 = arith.addf %978, %1010 : vector<8x16xf32>
    %c95 = arith.constant 95 : index
    %1012 = memref.load %arg3[%c95] : memref<288xf32, #tpu.memory_space<smem>>
    %1013 = vector.broadcast %1012 : f32 to vector<8x16xf32>
    %1014 = arith.mulf %1013, %983 : vector<8x16xf32>
    %1015 = arith.addf %982, %1014 : vector<8x16xf32>
    %1016 = vector.extract_strided_slice %916 {offsets = [1, 0], sizes = [8, 16], strides = [1, 1]} : vector<10x18xf32> to vector<8x16xf32>
    %c120 = arith.constant 120 : index
    %1017 = memref.load %arg3[%c120] : memref<288xf32, #tpu.memory_space<smem>>
    %1018 = vector.broadcast %1017 : f32 to vector<8x16xf32>
    %1019 = arith.mulf %1018, %1016 : vector<8x16xf32>
    %1020 = arith.addf %987, %1019 : vector<8x16xf32>
    %c121 = arith.constant 121 : index
    %1021 = memref.load %arg3[%c121] : memref<288xf32, #tpu.memory_space<smem>>
    %1022 = vector.broadcast %1021 : f32 to vector<8x16xf32>
    %1023 = arith.mulf %1022, %1016 : vector<8x16xf32>
    %1024 = arith.addf %991, %1023 : vector<8x16xf32>
    %c122 = arith.constant 122 : index
    %1025 = memref.load %arg3[%c122] : memref<288xf32, #tpu.memory_space<smem>>
    %1026 = vector.broadcast %1025 : f32 to vector<8x16xf32>
    %1027 = arith.mulf %1026, %1016 : vector<8x16xf32>
    %1028 = arith.addf %995, %1027 : vector<8x16xf32>
    %c123 = arith.constant 123 : index
    %1029 = memref.load %arg3[%c123] : memref<288xf32, #tpu.memory_space<smem>>
    %1030 = vector.broadcast %1029 : f32 to vector<8x16xf32>
    %1031 = arith.mulf %1030, %1016 : vector<8x16xf32>
    %1032 = arith.addf %999, %1031 : vector<8x16xf32>
    %c124 = arith.constant 124 : index
    %1033 = memref.load %arg3[%c124] : memref<288xf32, #tpu.memory_space<smem>>
    %1034 = vector.broadcast %1033 : f32 to vector<8x16xf32>
    %1035 = arith.mulf %1034, %1016 : vector<8x16xf32>
    %1036 = arith.addf %1003, %1035 : vector<8x16xf32>
    %c125 = arith.constant 125 : index
    %1037 = memref.load %arg3[%c125] : memref<288xf32, #tpu.memory_space<smem>>
    %1038 = vector.broadcast %1037 : f32 to vector<8x16xf32>
    %1039 = arith.mulf %1038, %1016 : vector<8x16xf32>
    %1040 = arith.addf %1007, %1039 : vector<8x16xf32>
    %c126 = arith.constant 126 : index
    %1041 = memref.load %arg3[%c126] : memref<288xf32, #tpu.memory_space<smem>>
    %1042 = vector.broadcast %1041 : f32 to vector<8x16xf32>
    %1043 = arith.mulf %1042, %1016 : vector<8x16xf32>
    %1044 = arith.addf %1011, %1043 : vector<8x16xf32>
    %c127 = arith.constant 127 : index
    %1045 = memref.load %arg3[%c127] : memref<288xf32, #tpu.memory_space<smem>>
    %1046 = vector.broadcast %1045 : f32 to vector<8x16xf32>
    %1047 = arith.mulf %1046, %1016 : vector<8x16xf32>
    %1048 = arith.addf %1015, %1047 : vector<8x16xf32>
    %1049 = vector.extract_strided_slice %916 {offsets = [1, 1], sizes = [8, 16], strides = [1, 1]} : vector<10x18xf32> to vector<8x16xf32>
    %c152 = arith.constant 152 : index
    %1050 = memref.load %arg3[%c152] : memref<288xf32, #tpu.memory_space<smem>>
    %1051 = vector.broadcast %1050 : f32 to vector<8x16xf32>
    %1052 = arith.mulf %1051, %1049 : vector<8x16xf32>
    %1053 = arith.addf %1020, %1052 : vector<8x16xf32>
    %c153 = arith.constant 153 : index
    %1054 = memref.load %arg3[%c153] : memref<288xf32, #tpu.memory_space<smem>>
    %1055 = vector.broadcast %1054 : f32 to vector<8x16xf32>
    %1056 = arith.mulf %1055, %1049 : vector<8x16xf32>
    %1057 = arith.addf %1024, %1056 : vector<8x16xf32>
    %c154 = arith.constant 154 : index
    %1058 = memref.load %arg3[%c154] : memref<288xf32, #tpu.memory_space<smem>>
    %1059 = vector.broadcast %1058 : f32 to vector<8x16xf32>
    %1060 = arith.mulf %1059, %1049 : vector<8x16xf32>
    %1061 = arith.addf %1028, %1060 : vector<8x16xf32>
    %c155 = arith.constant 155 : index
    %1062 = memref.load %arg3[%c155] : memref<288xf32, #tpu.memory_space<smem>>
    %1063 = vector.broadcast %1062 : f32 to vector<8x16xf32>
    %1064 = arith.mulf %1063, %1049 : vector<8x16xf32>
    %1065 = arith.addf %1032, %1064 : vector<8x16xf32>
    %c156 = arith.constant 156 : index
    %1066 = memref.load %arg3[%c156] : memref<288xf32, #tpu.memory_space<smem>>
    %1067 = vector.broadcast %1066 : f32 to vector<8x16xf32>
    %1068 = arith.mulf %1067, %1049 : vector<8x16xf32>
    %1069 = arith.addf %1036, %1068 : vector<8x16xf32>
    %c157 = arith.constant 157 : index
    %1070 = memref.load %arg3[%c157] : memref<288xf32, #tpu.memory_space<smem>>
    %1071 = vector.broadcast %1070 : f32 to vector<8x16xf32>
    %1072 = arith.mulf %1071, %1049 : vector<8x16xf32>
    %1073 = arith.addf %1040, %1072 : vector<8x16xf32>
    %c158 = arith.constant 158 : index
    %1074 = memref.load %arg3[%c158] : memref<288xf32, #tpu.memory_space<smem>>
    %1075 = vector.broadcast %1074 : f32 to vector<8x16xf32>
    %1076 = arith.mulf %1075, %1049 : vector<8x16xf32>
    %1077 = arith.addf %1044, %1076 : vector<8x16xf32>
    %c159 = arith.constant 159 : index
    %1078 = memref.load %arg3[%c159] : memref<288xf32, #tpu.memory_space<smem>>
    %1079 = vector.broadcast %1078 : f32 to vector<8x16xf32>
    %1080 = arith.mulf %1079, %1049 : vector<8x16xf32>
    %1081 = arith.addf %1048, %1080 : vector<8x16xf32>
    %1082 = vector.extract_strided_slice %916 {offsets = [1, 2], sizes = [8, 16], strides = [1, 1]} : vector<10x18xf32> to vector<8x16xf32>
    %c184 = arith.constant 184 : index
    %1083 = memref.load %arg3[%c184] : memref<288xf32, #tpu.memory_space<smem>>
    %1084 = vector.broadcast %1083 : f32 to vector<8x16xf32>
    %1085 = arith.mulf %1084, %1082 : vector<8x16xf32>
    %1086 = arith.addf %1053, %1085 : vector<8x16xf32>
    %c185 = arith.constant 185 : index
    %1087 = memref.load %arg3[%c185] : memref<288xf32, #tpu.memory_space<smem>>
    %1088 = vector.broadcast %1087 : f32 to vector<8x16xf32>
    %1089 = arith.mulf %1088, %1082 : vector<8x16xf32>
    %1090 = arith.addf %1057, %1089 : vector<8x16xf32>
    %c186 = arith.constant 186 : index
    %1091 = memref.load %arg3[%c186] : memref<288xf32, #tpu.memory_space<smem>>
    %1092 = vector.broadcast %1091 : f32 to vector<8x16xf32>
    %1093 = arith.mulf %1092, %1082 : vector<8x16xf32>
    %1094 = arith.addf %1061, %1093 : vector<8x16xf32>
    %c187 = arith.constant 187 : index
    %1095 = memref.load %arg3[%c187] : memref<288xf32, #tpu.memory_space<smem>>
    %1096 = vector.broadcast %1095 : f32 to vector<8x16xf32>
    %1097 = arith.mulf %1096, %1082 : vector<8x16xf32>
    %1098 = arith.addf %1065, %1097 : vector<8x16xf32>
    %c188 = arith.constant 188 : index
    %1099 = memref.load %arg3[%c188] : memref<288xf32, #tpu.memory_space<smem>>
    %1100 = vector.broadcast %1099 : f32 to vector<8x16xf32>
    %1101 = arith.mulf %1100, %1082 : vector<8x16xf32>
    %1102 = arith.addf %1069, %1101 : vector<8x16xf32>
    %c189 = arith.constant 189 : index
    %1103 = memref.load %arg3[%c189] : memref<288xf32, #tpu.memory_space<smem>>
    %1104 = vector.broadcast %1103 : f32 to vector<8x16xf32>
    %1105 = arith.mulf %1104, %1082 : vector<8x16xf32>
    %1106 = arith.addf %1073, %1105 : vector<8x16xf32>
    %c190 = arith.constant 190 : index
    %1107 = memref.load %arg3[%c190] : memref<288xf32, #tpu.memory_space<smem>>
    %1108 = vector.broadcast %1107 : f32 to vector<8x16xf32>
    %1109 = arith.mulf %1108, %1082 : vector<8x16xf32>
    %1110 = arith.addf %1077, %1109 : vector<8x16xf32>
    %c191 = arith.constant 191 : index
    %1111 = memref.load %arg3[%c191] : memref<288xf32, #tpu.memory_space<smem>>
    %1112 = vector.broadcast %1111 : f32 to vector<8x16xf32>
    %1113 = arith.mulf %1112, %1082 : vector<8x16xf32>
    %1114 = arith.addf %1081, %1113 : vector<8x16xf32>
    %1115 = vector.extract_strided_slice %916 {offsets = [2, 0], sizes = [8, 16], strides = [1, 1]} : vector<10x18xf32> to vector<8x16xf32>
    %c216 = arith.constant 216 : index
    %1116 = memref.load %arg3[%c216] : memref<288xf32, #tpu.memory_space<smem>>
    %1117 = vector.broadcast %1116 : f32 to vector<8x16xf32>
    %1118 = arith.mulf %1117, %1115 : vector<8x16xf32>
    %1119 = arith.addf %1086, %1118 : vector<8x16xf32>
    %c217 = arith.constant 217 : index
    %1120 = memref.load %arg3[%c217] : memref<288xf32, #tpu.memory_space<smem>>
    %1121 = vector.broadcast %1120 : f32 to vector<8x16xf32>
    %1122 = arith.mulf %1121, %1115 : vector<8x16xf32>
    %1123 = arith.addf %1090, %1122 : vector<8x16xf32>
    %c218 = arith.constant 218 : index
    %1124 = memref.load %arg3[%c218] : memref<288xf32, #tpu.memory_space<smem>>
    %1125 = vector.broadcast %1124 : f32 to vector<8x16xf32>
    %1126 = arith.mulf %1125, %1115 : vector<8x16xf32>
    %1127 = arith.addf %1094, %1126 : vector<8x16xf32>
    %c219 = arith.constant 219 : index
    %1128 = memref.load %arg3[%c219] : memref<288xf32, #tpu.memory_space<smem>>
    %1129 = vector.broadcast %1128 : f32 to vector<8x16xf32>
    %1130 = arith.mulf %1129, %1115 : vector<8x16xf32>
    %1131 = arith.addf %1098, %1130 : vector<8x16xf32>
    %c220 = arith.constant 220 : index
    %1132 = memref.load %arg3[%c220] : memref<288xf32, #tpu.memory_space<smem>>
    %1133 = vector.broadcast %1132 : f32 to vector<8x16xf32>
    %1134 = arith.mulf %1133, %1115 : vector<8x16xf32>
    %1135 = arith.addf %1102, %1134 : vector<8x16xf32>
    %c221 = arith.constant 221 : index
    %1136 = memref.load %arg3[%c221] : memref<288xf32, #tpu.memory_space<smem>>
    %1137 = vector.broadcast %1136 : f32 to vector<8x16xf32>
    %1138 = arith.mulf %1137, %1115 : vector<8x16xf32>
    %1139 = arith.addf %1106, %1138 : vector<8x16xf32>
    %c222 = arith.constant 222 : index
    %1140 = memref.load %arg3[%c222] : memref<288xf32, #tpu.memory_space<smem>>
    %1141 = vector.broadcast %1140 : f32 to vector<8x16xf32>
    %1142 = arith.mulf %1141, %1115 : vector<8x16xf32>
    %1143 = arith.addf %1110, %1142 : vector<8x16xf32>
    %c223 = arith.constant 223 : index
    %1144 = memref.load %arg3[%c223] : memref<288xf32, #tpu.memory_space<smem>>
    %1145 = vector.broadcast %1144 : f32 to vector<8x16xf32>
    %1146 = arith.mulf %1145, %1115 : vector<8x16xf32>
    %1147 = arith.addf %1114, %1146 : vector<8x16xf32>
    %1148 = vector.extract_strided_slice %916 {offsets = [2, 1], sizes = [8, 16], strides = [1, 1]} : vector<10x18xf32> to vector<8x16xf32>
    %c248 = arith.constant 248 : index
    %1149 = memref.load %arg3[%c248] : memref<288xf32, #tpu.memory_space<smem>>
    %1150 = vector.broadcast %1149 : f32 to vector<8x16xf32>
    %1151 = arith.mulf %1150, %1148 : vector<8x16xf32>
    %1152 = arith.addf %1119, %1151 : vector<8x16xf32>
    %c249 = arith.constant 249 : index
    %1153 = memref.load %arg3[%c249] : memref<288xf32, #tpu.memory_space<smem>>
    %1154 = vector.broadcast %1153 : f32 to vector<8x16xf32>
    %1155 = arith.mulf %1154, %1148 : vector<8x16xf32>
    %1156 = arith.addf %1123, %1155 : vector<8x16xf32>
    %c250 = arith.constant 250 : index
    %1157 = memref.load %arg3[%c250] : memref<288xf32, #tpu.memory_space<smem>>
    %1158 = vector.broadcast %1157 : f32 to vector<8x16xf32>
    %1159 = arith.mulf %1158, %1148 : vector<8x16xf32>
    %1160 = arith.addf %1127, %1159 : vector<8x16xf32>
    %c251 = arith.constant 251 : index
    %1161 = memref.load %arg3[%c251] : memref<288xf32, #tpu.memory_space<smem>>
    %1162 = vector.broadcast %1161 : f32 to vector<8x16xf32>
    %1163 = arith.mulf %1162, %1148 : vector<8x16xf32>
    %1164 = arith.addf %1131, %1163 : vector<8x16xf32>
    %c252 = arith.constant 252 : index
    %1165 = memref.load %arg3[%c252] : memref<288xf32, #tpu.memory_space<smem>>
    %1166 = vector.broadcast %1165 : f32 to vector<8x16xf32>
    %1167 = arith.mulf %1166, %1148 : vector<8x16xf32>
    %1168 = arith.addf %1135, %1167 : vector<8x16xf32>
    %c253 = arith.constant 253 : index
    %1169 = memref.load %arg3[%c253] : memref<288xf32, #tpu.memory_space<smem>>
    %1170 = vector.broadcast %1169 : f32 to vector<8x16xf32>
    %1171 = arith.mulf %1170, %1148 : vector<8x16xf32>
    %1172 = arith.addf %1139, %1171 : vector<8x16xf32>
    %c254 = arith.constant 254 : index
    %1173 = memref.load %arg3[%c254] : memref<288xf32, #tpu.memory_space<smem>>
    %1174 = vector.broadcast %1173 : f32 to vector<8x16xf32>
    %1175 = arith.mulf %1174, %1148 : vector<8x16xf32>
    %1176 = arith.addf %1143, %1175 : vector<8x16xf32>
    %c255 = arith.constant 255 : index
    %1177 = memref.load %arg3[%c255] : memref<288xf32, #tpu.memory_space<smem>>
    %1178 = vector.broadcast %1177 : f32 to vector<8x16xf32>
    %1179 = arith.mulf %1178, %1148 : vector<8x16xf32>
    %1180 = arith.addf %1147, %1179 : vector<8x16xf32>
    %1181 = vector.extract_strided_slice %916 {offsets = [2, 2], sizes = [8, 16], strides = [1, 1]} : vector<10x18xf32> to vector<8x16xf32>
    %c280 = arith.constant 280 : index
    %1182 = memref.load %arg3[%c280] : memref<288xf32, #tpu.memory_space<smem>>
    %1183 = vector.broadcast %1182 : f32 to vector<8x16xf32>
    %1184 = arith.mulf %1183, %1181 : vector<8x16xf32>
    %1185 = arith.addf %1152, %1184 : vector<8x16xf32>
    %c281 = arith.constant 281 : index
    %1186 = memref.load %arg3[%c281] : memref<288xf32, #tpu.memory_space<smem>>
    %1187 = vector.broadcast %1186 : f32 to vector<8x16xf32>
    %1188 = arith.mulf %1187, %1181 : vector<8x16xf32>
    %1189 = arith.addf %1156, %1188 : vector<8x16xf32>
    %c282 = arith.constant 282 : index
    %1190 = memref.load %arg3[%c282] : memref<288xf32, #tpu.memory_space<smem>>
    %1191 = vector.broadcast %1190 : f32 to vector<8x16xf32>
    %1192 = arith.mulf %1191, %1181 : vector<8x16xf32>
    %1193 = arith.addf %1160, %1192 : vector<8x16xf32>
    %c283 = arith.constant 283 : index
    %1194 = memref.load %arg3[%c283] : memref<288xf32, #tpu.memory_space<smem>>
    %1195 = vector.broadcast %1194 : f32 to vector<8x16xf32>
    %1196 = arith.mulf %1195, %1181 : vector<8x16xf32>
    %1197 = arith.addf %1164, %1196 : vector<8x16xf32>
    %c284 = arith.constant 284 : index
    %1198 = memref.load %arg3[%c284] : memref<288xf32, #tpu.memory_space<smem>>
    %1199 = vector.broadcast %1198 : f32 to vector<8x16xf32>
    %1200 = arith.mulf %1199, %1181 : vector<8x16xf32>
    %1201 = arith.addf %1168, %1200 : vector<8x16xf32>
    %c285 = arith.constant 285 : index
    %1202 = memref.load %arg3[%c285] : memref<288xf32, #tpu.memory_space<smem>>
    %1203 = vector.broadcast %1202 : f32 to vector<8x16xf32>
    %1204 = arith.mulf %1203, %1181 : vector<8x16xf32>
    %1205 = arith.addf %1172, %1204 : vector<8x16xf32>
    %c286 = arith.constant 286 : index
    %1206 = memref.load %arg3[%c286] : memref<288xf32, #tpu.memory_space<smem>>
    %1207 = vector.broadcast %1206 : f32 to vector<8x16xf32>
    %1208 = arith.mulf %1207, %1181 : vector<8x16xf32>
    %1209 = arith.addf %1176, %1208 : vector<8x16xf32>
    %c287 = arith.constant 287 : index
    %1210 = memref.load %arg3[%c287] : memref<288xf32, #tpu.memory_space<smem>>
    %1211 = vector.broadcast %1210 : f32 to vector<8x16xf32>
    %1212 = arith.mulf %1211, %1181 : vector<8x16xf32>
    %1213 = arith.addf %1180, %1212 : vector<8x16xf32>
    %c0_19 = arith.constant 0 : index
    %1214 = memref.load %arg4[%c0_19] : memref<8xf32, #tpu.memory_space<smem>>
    %1215 = vector.broadcast %1214 : f32 to vector<8x16xf32>
    %1216 = arith.addf %1185, %1215 : vector<8x16xf32>
    %cst_20 = arith.constant 5.000000e-01 : f32
    %1217 = vector.broadcast %cst_20 : f32 to vector<8x16xf32>
    %1218 = arith.mulf %1217, %1216 : vector<8x16xf32>
    %cst_21 = arith.constant 0.707106769 : f32
    %1219 = vector.broadcast %cst_21 : f32 to vector<8x16xf32>
    %1220 = arith.mulf %1216, %1219 : vector<8x16xf32>
    %1221 = math.erf %1220 : vector<8x16xf32>
    %cst_22 = arith.constant 1.000000e+00 : f32
    %1222 = vector.broadcast %cst_22 : f32 to vector<8x16xf32>
    %1223 = arith.addf %1222, %1221 : vector<8x16xf32>
    %1224 = arith.mulf %1218, %1223 : vector<8x16xf32>
    %c0_23 = arith.constant 0 : index
    %c0_24 = arith.constant 0 : index
    %c0_25 = arith.constant 0 : index
    %c0_26 = arith.constant 0 : index
    %1225 = vector.load %arg5[%c0_23, %c0_24, %c0_25, %c0_26] : memref<1x8x8x16xf32, #tpu.memory_space<vmem>>, vector<1x1x8x16xf32>
    %1226 = vector.shape_cast %1225 : vector<1x1x8x16xf32> to vector<8x16xf32>
    %1227 = vector.shape_cast %1224 : vector<8x16xf32> to vector<1x1x8x16xf32>
    tpu.vector_store %arg5[%c0_23, %c0_24, %c0_25, %c0_26], %1227 {strides = array<i32>} : memref<1x8x8x16xf32, #tpu.memory_space<vmem>>, vector<1x1x8x16xf32>,
    %c1_27 = arith.constant 1 : index
    %1228 = memref.load %arg4[%c1_27] : memref<8xf32, #tpu.memory_space<smem>>
    %1229 = vector.broadcast %1228 : f32 to vector<8x16xf32>
    %1230 = arith.addf %1189, %1229 : vector<8x16xf32>
    %cst_28 = arith.constant 5.000000e-01 : f32
    %1231 = vector.broadcast %cst_28 : f32 to vector<8x16xf32>
    %1232 = arith.mulf %1231, %1230 : vector<8x16xf32>
    %cst_29 = arith.constant 0.707106769 : f32
    %1233 = vector.broadcast %cst_29 : f32 to vector<8x16xf32>
    %1234 = arith.mulf %1230, %1233 : vector<8x16xf32>
    %1235 = math.erf %1234 : vector<8x16xf32>
    %cst_30 = arith.constant 1.000000e+00 : f32
    %1236 = vector.broadcast %cst_30 : f32 to vector<8x16xf32>
    %1237 = arith.addf %1236, %1235 : vector<8x16xf32>
    %1238 = arith.mulf %1232, %1237 : vector<8x16xf32>
    %c0_31 = arith.constant 0 : index
    %c1_32 = arith.constant 1 : index
    %c0_33 = arith.constant 0 : index
    %c0_34 = arith.constant 0 : index
    %1239 = vector.load %arg5[%c0_31, %c1_32, %c0_33, %c0_34] : memref<1x8x8x16xf32, #tpu.memory_space<vmem>>, vector<1x1x8x16xf32>
    %1240 = vector.shape_cast %1239 : vector<1x1x8x16xf32> to vector<8x16xf32>
    %1241 = vector.shape_cast %1238 : vector<8x16xf32> to vector<1x1x8x16xf32>
    tpu.vector_store %arg5[%c0_31, %c1_32, %c0_33, %c0_34], %1241 {strides = array<i32>} : memref<1x8x8x16xf32, #tpu.memory_space<vmem>>, vector<1x1x8x16xf32>,
    %c2_35 = arith.constant 2 : index
    %1242 = memref.load %arg4[%c2_35] : memref<8xf32, #tpu.memory_space<smem>>
    %1243 = vector.broadcast %1242 : f32 to vector<8x16xf32>
    %1244 = arith.addf %1193, %1243 : vector<8x16xf32>
    %cst_36 = arith.constant 5.000000e-01 : f32
    %1245 = vector.broadcast %cst_36 : f32 to vector<8x16xf32>
    %1246 = arith.mulf %1245, %1244 : vector<8x16xf32>
    %cst_37 = arith.constant 0.707106769 : f32
    %1247 = vector.broadcast %cst_37 : f32 to vector<8x16xf32>
    %1248 = arith.mulf %1244, %1247 : vector<8x16xf32>
    %1249 = math.erf %1248 : vector<8x16xf32>
    %cst_38 = arith.constant 1.000000e+00 : f32
    %1250 = vector.broadcast %cst_38 : f32 to vector<8x16xf32>
    %1251 = arith.addf %1250, %1249 : vector<8x16xf32>
    %1252 = arith.mulf %1246, %1251 : vector<8x16xf32>
    %c0_39 = arith.constant 0 : index
    %c2_40 = arith.constant 2 : index
    %c0_41 = arith.constant 0 : index
    %c0_42 = arith.constant 0 : index
    %1253 = vector.load %arg5[%c0_39, %c2_40, %c0_41, %c0_42] : memref<1x8x8x16xf32, #tpu.memory_space<vmem>>, vector<1x1x8x16xf32>
    %1254 = vector.shape_cast %1253 : vector<1x1x8x16xf32> to vector<8x16xf32>
    %1255 = vector.shape_cast %1252 : vector<8x16xf32> to vector<1x1x8x16xf32>
    tpu.vector_store %arg5[%c0_39, %c2_40, %c0_41, %c0_42], %1255 {strides = array<i32>} : memref<1x8x8x16xf32, #tpu.memory_space<vmem>>, vector<1x1x8x16xf32>,
    %c3_43 = arith.constant 3 : index
    %1256 = memref.load %arg4[%c3_43] : memref<8xf32, #tpu.memory_space<smem>>
    %1257 = vector.broadcast %1256 : f32 to vector<8x16xf32>
    %1258 = arith.addf %1197, %1257 : vector<8x16xf32>
    %cst_44 = arith.constant 5.000000e-01 : f32
    %1259 = vector.broadcast %cst_44 : f32 to vector<8x16xf32>
    %1260 = arith.mulf %1259, %1258 : vector<8x16xf32>
    %cst_45 = arith.constant 0.707106769 : f32
    %1261 = vector.broadcast %cst_45 : f32 to vector<8x16xf32>
    %1262 = arith.mulf %1258, %1261 : vector<8x16xf32>
    %1263 = math.erf %1262 : vector<8x16xf32>
    %cst_46 = arith.constant 1.000000e+00 : f32
    %1264 = vector.broadcast %cst_46 : f32 to vector<8x16xf32>
    %1265 = arith.addf %1264, %1263 : vector<8x16xf32>
    %1266 = arith.mulf %1260, %1265 : vector<8x16xf32>
    %c0_47 = arith.constant 0 : index
    %c3_48 = arith.constant 3 : index
    %c0_49 = arith.constant 0 : index
    %c0_50 = arith.constant 0 : index
    %1267 = vector.load %arg5[%c0_47, %c3_48, %c0_49, %c0_50] : memref<1x8x8x16xf32, #tpu.memory_space<vmem>>, vector<1x1x8x16xf32>
    %1268 = vector.shape_cast %1267 : vector<1x1x8x16xf32> to vector<8x16xf32>
    %1269 = vector.shape_cast %1266 : vector<8x16xf32> to vector<1x1x8x16xf32>
    tpu.vector_store %arg5[%c0_47, %c3_48, %c0_49, %c0_50], %1269 {strides = array<i32>} : memref<1x8x8x16xf32, #tpu.memory_space<vmem>>, vector<1x1x8x16xf32>,
    %c4_51 = arith.constant 4 : index
    %1270 = memref.load %arg4[%c4_51] : memref<8xf32, #tpu.memory_space<smem>>
    %1271 = vector.broadcast %1270 : f32 to vector<8x16xf32>
    %1272 = arith.addf %1201, %1271 : vector<8x16xf32>
    %cst_52 = arith.constant 5.000000e-01 : f32
    %1273 = vector.broadcast %cst_52 : f32 to vector<8x16xf32>
    %1274 = arith.mulf %1273, %1272 : vector<8x16xf32>
    %cst_53 = arith.constant 0.707106769 : f32
    %1275 = vector.broadcast %cst_53 : f32 to vector<8x16xf32>
    %1276 = arith.mulf %1272, %1275 : vector<8x16xf32>
    %1277 = math.erf %1276 : vector<8x16xf32>
    %cst_54 = arith.constant 1.000000e+00 : f32
    %1278 = vector.broadcast %cst_54 : f32 to vector<8x16xf32>
    %1279 = arith.addf %1278, %1277 : vector<8x16xf32>
    %1280 = arith.mulf %1274, %1279 : vector<8x16xf32>
    %c0_55 = arith.constant 0 : index
    %c4_56 = arith.constant 4 : index
    %c0_57 = arith.constant 0 : index
    %c0_58 = arith.constant 0 : index
    %1281 = vector.load %arg5[%c0_55, %c4_56, %c0_57, %c0_58] : memref<1x8x8x16xf32, #tpu.memory_space<vmem>>, vector<1x1x8x16xf32>
    %1282 = vector.shape_cast %1281 : vector<1x1x8x16xf32> to vector<8x16xf32>
    %1283 = vector.shape_cast %1280 : vector<8x16xf32> to vector<1x1x8x16xf32>
    tpu.vector_store %arg5[%c0_55, %c4_56, %c0_57, %c0_58], %1283 {strides = array<i32>} : memref<1x8x8x16xf32, #tpu.memory_space<vmem>>, vector<1x1x8x16xf32>,
    %c5_59 = arith.constant 5 : index
    %1284 = memref.load %arg4[%c5_59] : memref<8xf32, #tpu.memory_space<smem>>
    %1285 = vector.broadcast %1284 : f32 to vector<8x16xf32>
    %1286 = arith.addf %1205, %1285 : vector<8x16xf32>
    %cst_60 = arith.constant 5.000000e-01 : f32
    %1287 = vector.broadcast %cst_60 : f32 to vector<8x16xf32>
    %1288 = arith.mulf %1287, %1286 : vector<8x16xf32>
    %cst_61 = arith.constant 0.707106769 : f32
    %1289 = vector.broadcast %cst_61 : f32 to vector<8x16xf32>
    %1290 = arith.mulf %1286, %1289 : vector<8x16xf32>
    %1291 = math.erf %1290 : vector<8x16xf32>
    %cst_62 = arith.constant 1.000000e+00 : f32
    %1292 = vector.broadcast %cst_62 : f32 to vector<8x16xf32>
    %1293 = arith.addf %1292, %1291 : vector<8x16xf32>
    %1294 = arith.mulf %1288, %1293 : vector<8x16xf32>
    %c0_63 = arith.constant 0 : index
    %c5_64 = arith.constant 5 : index
    %c0_65 = arith.constant 0 : index
    %c0_66 = arith.constant 0 : index
    %1295 = vector.load %arg5[%c0_63, %c5_64, %c0_65, %c0_66] : memref<1x8x8x16xf32, #tpu.memory_space<vmem>>, vector<1x1x8x16xf32>
    %1296 = vector.shape_cast %1295 : vector<1x1x8x16xf32> to vector<8x16xf32>
    %1297 = vector.shape_cast %1294 : vector<8x16xf32> to vector<1x1x8x16xf32>
    tpu.vector_store %arg5[%c0_63, %c5_64, %c0_65, %c0_66], %1297 {strides = array<i32>} : memref<1x8x8x16xf32, #tpu.memory_space<vmem>>, vector<1x1x8x16xf32>,
    %c6_67 = arith.constant 6 : index
    %1298 = memref.load %arg4[%c6_67] : memref<8xf32, #tpu.memory_space<smem>>
    %1299 = vector.broadcast %1298 : f32 to vector<8x16xf32>
    %1300 = arith.addf %1209, %1299 : vector<8x16xf32>
    %cst_68 = arith.constant 5.000000e-01 : f32
    %1301 = vector.broadcast %cst_68 : f32 to vector<8x16xf32>
    %1302 = arith.mulf %1301, %1300 : vector<8x16xf32>
    %cst_69 = arith.constant 0.707106769 : f32
    %1303 = vector.broadcast %cst_69 : f32 to vector<8x16xf32>
    %1304 = arith.mulf %1300, %1303 : vector<8x16xf32>
    %1305 = math.erf %1304 : vector<8x16xf32>
    %cst_70 = arith.constant 1.000000e+00 : f32
    %1306 = vector.broadcast %cst_70 : f32 to vector<8x16xf32>
    %1307 = arith.addf %1306, %1305 : vector<8x16xf32>
    %1308 = arith.mulf %1302, %1307 : vector<8x16xf32>
    %c0_71 = arith.constant 0 : index
    %c6_72 = arith.constant 6 : index
    %c0_73 = arith.constant 0 : index
    %c0_74 = arith.constant 0 : index
    %1309 = vector.load %arg5[%c0_71, %c6_72, %c0_73, %c0_74] : memref<1x8x8x16xf32, #tpu.memory_space<vmem>>, vector<1x1x8x16xf32>
    %1310 = vector.shape_cast %1309 : vector<1x1x8x16xf32> to vector<8x16xf32>
    %1311 = vector.shape_cast %1308 : vector<8x16xf32> to vector<1x1x8x16xf32>
    tpu.vector_store %arg5[%c0_71, %c6_72, %c0_73, %c0_74], %1311 {strides = array<i32>} : memref<1x8x8x16xf32, #tpu.memory_space<vmem>>, vector<1x1x8x16xf32>,
    %c7_75 = arith.constant 7 : index
    %1312 = memref.load %arg4[%c7_75] : memref<8xf32, #tpu.memory_space<smem>>
    %1313 = vector.broadcast %1312 : f32 to vector<8x16xf32>
    %1314 = arith.addf %1213, %1313 : vector<8x16xf32>
    %cst_76 = arith.constant 5.000000e-01 : f32
    %1315 = vector.broadcast %cst_76 : f32 to vector<8x16xf32>
    %1316 = arith.mulf %1315, %1314 : vector<8x16xf32>
    %cst_77 = arith.constant 0.707106769 : f32
    %1317 = vector.broadcast %cst_77 : f32 to vector<8x16xf32>
    %1318 = arith.mulf %1314, %1317 : vector<8x16xf32>
    %1319 = math.erf %1318 : vector<8x16xf32>
    %cst_78 = arith.constant 1.000000e+00 : f32
    %1320 = vector.broadcast %cst_78 : f32 to vector<8x16xf32>
    %1321 = arith.addf %1320, %1319 : vector<8x16xf32>
    %1322 = arith.mulf %1316, %1321 : vector<8x16xf32>
    %c0_79 = arith.constant 0 : index
    %c7_80 = arith.constant 7 : index
    %c0_81 = arith.constant 0 : index
    %c0_82 = arith.constant 0 : index
    %1323 = vector.load %arg5[%c0_79, %c7_80, %c0_81, %c0_82] : memref<1x8x8x16xf32, #tpu.memory_space<vmem>>, vector<1x1x8x16xf32>
    %1324 = vector.shape_cast %1323 : vector<1x1x8x16xf32> to vector<8x16xf32>
    %1325 = vector.shape_cast %1322 : vector<8x16xf32> to vector<1x1x8x16xf32>
    tpu.vector_store %arg5[%c0_79, %c7_80, %c0_81, %c0_82], %1325 {strides = array<i32>} : memref<1x8x8x16xf32, #tpu.memory_space<vmem>>, vector<1x1x8x16xf32>,
    return
  }
  func.func @transform_0(%arg0: i32, %arg1: i32) -> (i32, i32, i32, i32) {
    %c0_i32 = arith.constant 0 : i32
    %c0_i32_0 = arith.constant 0 : i32
    %c0_i32_1 = arith.constant 0 : i32
    %c0_i32_2 = arith.constant 0 : i32
    return %arg0, %c0_i32, %c0_i32_0, %c0_i32_1 : i32, i32, i32, i32
  }
  func.func @transform_1(%arg0: i32, %arg1: i32) -> i32 {
    %c0_i32 = arith.constant 0 : i32
    %c0_i32_0 = arith.constant 0 : i32
    return %c0_i32 : i32
  }
  func.func @transform_2(%arg0: i32, %arg1: i32) -> i32 {
    %c0_i32 = arith.constant 0 : i32
    %c0_i32_0 = arith.constant 0 : i32
    return %c0_i32 : i32
  }
  func.func @transform_3(%arg0: i32, %arg1: i32) -> (i32, i32, i32, i32) {
    %c0_i32 = arith.constant 0 : i32
    %c0_i32_0 = arith.constant 0 : i32
    %c0_i32_1 = arith.constant 0 : i32
    return %arg0, %c0_i32, %arg1, %c0_i32_0 : i32, i32, i32, i32
  }
}

</mosaic_0001>

<llo_original>
// kernel: conv_act.1
$region0: #{conv_act.1}
  #allocation0 [shape = 'u32[]', space=smem, size = 0x4, offset = 0x4, fixed_abs, tag = 'smem constant byte address 0x4 - core index']
  #allocation1 [shape = 'u32[144,128]{1,0:T(1,128)}', space=vmem, size = 0x12000, scoped, tag = 'internal scratch']
  %s0 = inlined_call_operand.vmem [shape: bf16[2,4,18,18], index: 0, kind: input, shape index: {}]
  %s1 = inlined_call_operand.vmem [shape: f32[288], index: 1, kind: input, shape index: {}]
  %s2 = inlined_call_operand.vmem [shape: f32[8], index: 2, kind: input, shape index: {}]
  %s3 = inlined_call_operand.hbm [shape: f32[2,8,16,16], index: 3, kind: output, shape index: {}]
  %s4 = sld [smem:[#allocation0]]
  $region53: #{conv_act.1} parent=0
    _
  %s6 = ssub.s32 1, %s4
  %s7 = scalar_select 0, %s6, %s4
  $region1: #{conv_act.1} parent=0
    #allocation2 [shape = 'u8[1536]{0}', space=smem, size = 0x600, scoped, tag = 'input window, operand 1, single buffered']
    #allocation3 [shape = 's32[2]{0}', space=sflag, size = 0x8, scoped, tag = 'scoped memory for conv_act.1']
    #allocation4 [shape = 's32[2]{0}', space=sflag, size = 0x8, scoped, tag = 'scoped memory for conv_act.1']
    #allocation5 [shape = 'u8[512]{0}', space=smem, size = 0x200, scoped, tag = 'input window, operand 2, single buffered']
    #allocation6 [shape = 's32[1]{0}', space=sflag, size = 0x4, scoped, tag = 'scoped memory for conv_act.1']
    #allocation7 [shape = 'u8[65536]{0}', space=vmem, size = 0x10000, scoped, tag = 'output window, operand 0']
    %8 = vsyncpa [#allocation4], 0
    %9 = vsyncpa [#allocation6], 0
    %10 = vsyncpa [#allocation3], 0
    %s11 = scalar_lea.sflag [#allocation3], 1
    %12 = vsyncpa %s11, 0
    loop: start=0, step=1, limit=6
    $region2: #{conv_act.1} parent=1 // loop_pre_header
      _
    $region3: #{conv_act.1} parent=1 // loop_header
      %s14 = sphi 0, %s18
      %p15 = scmp.ge.s32.totalorder %s14, 6
      %s21 = sphi 0, %s33
      %s22 = sphi 0, %s29
      %s23 = sphi 0, %s21
      %s24 = sphi 0, %s22
      %s25 = sphi 0, %s23
      %s26 = sphi 0, %s24
      %s36 = sphi 0, %s38
      %s39 = sphi 0, %s36
      %s40 = sphi 0, %s39
      %s56 = sphi 0, %s40
      %s60 = sphi 0, %s60
      %s62 = sphi 0, %s60
      %s63 = sphi 0, %s62
      %s77 = sphi 0, %s63
      %s81 = sphi 0, %s81
      %s83 = sphi 0, %s81
      %s84 = sphi 0, %s83
      %s98 = sphi 0, %s84
      %s106 = sphi 0, %s108
      %s109 = sphi 0, %s106
      %s110 = sphi 0, %s109
      %s126 = sphi 0, %s110
    $region4: #{conv_act.1} parent=1 // loop_header_branch
      %17 = sbr.rel (%p15) target = $region8
    $region5: #{conv_act.1} parent=1 // loop_body
      %s19 = ssub.s32 %s14, 1
      %s20 = ssub.s32 %s14, 2
      %s27 = sadd.s32 1, %s22
      %p28 = scmp.ge.s32.totalorder %s27, 2
      %s29 = scalar_select %p28, 0, %s27
      %s30 = sadd.s32 1, %s21
      %s31 = scalar_select %p28, %s30, %s21
      %p32 = scmp.ge.s32.totalorder %s31, 2
      %s33 = scalar_select %p32, 0, %s31
      %s34 = ssub.s32 %s21, %s33
      %p35 = scmp.eq.s32.totalorder %s34, 0
      %s37 = sadd.s32 %s36, 1
      %s38 = scalar_select %p35, %s36, %s37
      %p41 = pneg %p35
      %p42 = scmp.eq.s32.totalorder %s14, 3
      %p43 = por %p41, %p42
      %p44 = scmp.ne.s32.totalorder %s36, %s39
      %p45 = scmp.eq.s32.totalorder %s14, 0
      %p46 = por %p44, %p45
      %p47 = scmp.ne.s32.totalorder %s36, %s39
      %p48 = scmp.eq.s32.totalorder %s19, 3
      %p49 = por %p47, %p48
      %p50 = scmp.ne.s32.totalorder %s39, %s40
      %p51 = scmp.eq.s32.totalorder %s19, 0
      %p52 = por %p50, %p51
      %p53 = scmp.ne.s32.totalorder %s39, %s40
      %p54 = scmp.eq.s32.totalorder %s20, 3
      %p55 = por %p53, %p54
      %p57 = scmp.ne.s32.totalorder %s40, %s56
      %p58 = scmp.eq.s32.totalorder %s20, 0
      %p59 = por %p57, %p58
      %s61 = sadd.s32 %s60, 1
      %p64 = scmp.eq.s32.totalorder %s14, 3
      %p65 = scmp.ne.s32.totalorder %s60, %s62
      %p66 = scmp.eq.s32.totalorder %s14, 0
      %p67 = por %p65, %p66
      %p68 = scmp.ne.s32.totalorder %s60, %s62
      %p69 = scmp.eq.s32.totalorder %s19, 3
      %p70 = por %p68, %p69
      %p71 = scmp.ne.s32.totalorder %s62, %s63
      %p72 = scmp.eq.s32.totalorder %s19, 0
      %p73 = por %p71, %p72
      %p74 = scmp.ne.s32.totalorder %s62, %s63
      %p75 = scmp.eq.s32.totalorder %s20, 3
      %p76 = por %p74, %p75
      %p78 = scmp.ne.s32.totalorder %s63, %s77
      %p79 = scmp.eq.s32.totalorder %s20, 0
      %p80 = por %p78, %p79
      %s82 = sadd.s32 %s81, 1
      %p85 = scmp.eq.s32.totalorder %s14, 3
      %p86 = scmp.ne.s32.totalorder %s81, %s83
      %p87 = scmp.eq.s32.totalorder %s14, 0
      %p88 = por %p86, %p87
      %p89 = scmp.ne.s32.totalorder %s81, %s83
      %p90 = scmp.eq.s32.totalorder %s19, 3
      %p91 = por %p89, %p90
      %p92 = scmp.ne.s32.totalorder %s83, %s84
      %p93 = scmp.eq.s32.totalorder %s19, 0
      %p94 = por %p92, %p93
      %p95 = scmp.ne.s32.totalorder %s83, %s84
      %p96 = scmp.eq.s32.totalorder %s20, 3
      %p97 = por %p95, %p96
      %p99 = scmp.ne.s32.totalorder %s84, %s98
      %p100 = scmp.eq.s32.totalorder %s20, 0
      %p101 = por %p99, %p100
      %s102 = ssub.s32 %s21, %s33
      %s103 = ssub.s32 %s22, %s29
      %s104 = sor.u32 %s102, %s103
      %p105 = scmp.eq.s32.totalorder %s104, 0
      %s107 = sadd.s32 %s106, 1
      %s108 = scalar_select %p105, %s106, %s107
      %p111 = pneg %p105
      %p112 = scmp.eq.s32.totalorder %s14, 3
      %p113 = por %p111, %p112
      %p114 = scmp.ne.s32.totalorder %s106, %s109
      %p115 = scmp.eq.s32.totalorder %s14, 0
      %p116 = por %p114, %p115
      %p117 = scmp.ne.s32.totalorder %s106, %s109
      %p118 = scmp.eq.s32.totalorder %s19, 3
      %p119 = por %p117, %p118
      %p120 = scmp.ne.s32.totalorder %s109, %s110
      %p121 = scmp.eq.s32.totalorder %s19, 0
      %p122 = por %p120, %p121
      %p123 = scmp.ne.s32.totalorder %s109, %s110
      %p124 = scmp.eq.s32.totalorder %s20, 3
      %p125 = por %p123, %p124
      %p127 = scmp.ne.s32.totalorder %s110, %s126
      %p128 = scmp.eq.s32.totalorder %s20, 0
      %p129 = por %p127, %p128
      %p130 = scmp.le.s32.totalorder 1, %s14
      %p131 = scmp.lt.s32.totalorder %s14, 5
      %p132 = pnand %p130, %p131
      %p133 = pneg %p132
      // Predicated region
      $region9: #{conv_act.1} parent=5 // pred_check
        _
      $region10: #{conv_act.1} parent=5 // pred_check_branch
        %135 = sbr.rel (%p132) target = $region12
      $region11: #{conv_act.1} parent=5 // pred_region
        %s136 = ssub.s32 %s14, 1
        // Predicated region
        $region13: #{conv_act.1} parent=11 // pred_check
          %p137 = pneg %p73
        $region14: #{conv_act.1} parent=11 // pred_check_branch
          %139 = sbr.rel (%p137) target = $region16
        $region15: #{conv_act.1} parent=11 // pred_region
          %s141 = ssub.s32 48, 48
          %142 = vsyncadd [#allocation4], %s141
          %s144 = sshll.u32 %s1, 4
          %s145 = int_to_ptr.vmem [resolvable:$true] %s144
          %147 = dma.vmem_to_smem %s145, 48, [#allocation2], [#allocation4]
        $region16: #{conv_act.1} parent=11 // pred_fallthru
          _
        // Predicated region
        $region17: #{conv_act.1} parent=11 // pred_check
          %p148 = pneg %p94
        $region18: #{conv_act.1} parent=11 // pred_check_branch
          %150 = sbr.rel (%p148) target = $region20
        $region19: #{conv_act.1} parent=11 // pred_region
          %s152 = ssub.s32 16, 16
          %153 = vsyncadd [#allocation6], %s152
          %s155 = sshll.u32 %s2, 4
          %s156 = int_to_ptr.vmem [resolvable:$true] %s155
          %158 = dma.vmem_to_smem %s156, 16, [#allocation5], [#allocation6]
        $region20: #{conv_act.1} parent=11 // pred_fallthru
          _
      $region12: #{conv_act.1} parent=5 // pred_fallthru
        _
      %p159 = scmp.lt.s32.totalorder %s14, 4
      // Predicated region
      $region21: #{conv_act.1} parent=5 // pred_check
        %p160 = pneg %p159
      $region22: #{conv_act.1} parent=5 // pred_check_branch
        %162 = sbr.rel (%p160) target = $region24
      $region23: #{conv_act.1} parent=5 // pred_region
        // Predicated region
        $region25: #{conv_act.1} parent=23 // pred_check
          %p163 = pneg %p46
        $region26: #{conv_act.1} parent=23 // pred_check_branch
          %165 = sbr.rel (%p163) target = $region28
        $region27: #{conv_act.1} parent=23 // pred_region
          %p166 = scmp.lt.s32.totalorder %s21, 1
          %s167 = scalar_select %p166, %s21, 1
          %s168 = smul.addr %s167, 12
          %s169 = smul.addr %s168, 4
          %s170 = scalar_lea.vmem %s0, %s169
        $region28: #{conv_act.1} parent=23 // pred_fallthru
          _
      $region24: #{conv_act.1} parent=5 // pred_fallthru
        _
      %p171 = scmp.le.s32.totalorder 1, %s14
      %p172 = scmp.lt.s32.totalorder %s14, 5
      %p173 = pnand %p171, %p172
      %p174 = pneg %p173
      // Predicated region
      $region29: #{conv_act.1} parent=5 // pred_check
        _
      $region30: #{conv_act.1} parent=5 // pred_check_branch
        %176 = sbr.rel (%p173) target = $region32
      $region31: #{conv_act.1} parent=5 // pred_region
        %s177 = ssub.s32 %s14, 1
        // Predicated region
        $region33: #{conv_act.1} parent=31 // pred_check
          %p178 = pneg %p73
        $region34: #{conv_act.1} parent=31 // pred_check_branch
          %180 = sbr.rel (%p178) target = $region36
        $region35: #{conv_act.1} parent=31 // pred_region
          %181 = dma.done [#allocation4], 48
        $region36: #{conv_act.1} parent=31 // pred_fallthru
          _
        // Predicated region
        $region37: #{conv_act.1} parent=31 // pred_check
          %p182 = pneg %p94
        $region38: #{conv_act.1} parent=31 // pred_check_branch
          %184 = sbr.rel (%p182) target = $region40
        $region39: #{conv_act.1} parent=31 // pred_region
          %185 = dma.done [#allocation6], 16
        $region40: #{conv_act.1} parent=31 // pred_fallthru
          _
        %186 = sfence
        %p187 = scmp.lt.s32.totalorder %s23, 1
        %s188 = scalar_select %p187, %s23, 1
        %s189 = smul.addr %s188, 12
        %s190 = smul.addr %s189, 4
        %s191 = scalar_lea.vmem %s0, %s190
        %p192 = pneg %p52
        %p193 = pneg %p49
        %p194 = pneg %p73
        %p195 = pneg %p70
        %p196 = pneg %p94
        %p197 = pneg %p91
        %p198 = pneg %p122
        %p199 = pneg %p119
        %s200 = sand.u32 %s109, 1
        %s201 = scalar_lea.sflag [#allocation3], %s200
        %s202 = sand.u32 %s109, 1
        %s203 = smul.addr %s202, 64
        %s204 = scalar_lea.vmem [#allocation7], %s203
        %p205 = scmp.lt.s32.totalorder %s23, 1
        %s206 = scalar_select %p205, %s23, 1
        %s207 = smul.addr %s206, 12
        %s208 = smul.addr %s207, 4
        %s209 = scalar_lea.vmem %s0, %s208
        %s210 = smul.u32 %s24, 8
        %s211 = sshra.s32 %s210, 3
        %s212 = sand.u32 %s210, 7
        %s213 = smul.addr %s211, 4
        %s214 = scalar_lea.vmem %s209, %s213
        %v215 = vld [vmem:[%s214] sm:$0xf]
        %v216 = vld [vmem:[%s214 + $0x4] sm:$0x1]
        %v217 = vunpack.c.l.bf16 %v215
        %v218 = vunpack.c.l.bf16 %v216
        %s219 = sld [smem:[#allocation2]]
        %v220 = vstv %s219
        %v221 = vmul.f32 %v220, %v217
        %v222 = vadd.f32 %v221, 0.0
        %s223 = sld [smem:[#allocation2 + $0x1]]
        %v224 = vstv %s223
        %v225 = vmul.f32 %v224, %v217
        %v226 = vadd.f32 %v225, 0.0
        %s227 = sld [smem:[#allocation2 + $0x2]]
        %v228 = vstv %s227
        %v229 = vmul.f32 %v228, %v217
        %v230 = vadd.f32 %v229, 0.0
        %s231 = sld [smem:[#allocation2 + $0x3]]
        %v232 = vstv %s231
        %v233 = vmul.f32 %v232, %v217
        %v234 = vadd.f32 %v233, 0.0
        %s235 = sld [smem:[#allocation2 + $0x4]]
        %v236 = vstv %s235
        %v237 = vmul.f32 %v236, %v217
        %v238 = vadd.f32 %v237, 0.0
        %s239 = sld [smem:[#allocation2 + $0x5]]
        %v240 = vstv %s239
        %v241 = vmul.f32 %v240, %v217
        %v242 = vadd.f32 %v241, 0.0
        %s243 = sld [smem:[#allocation2 + $0x6]]
        %v244 = vstv %s243
        %v245 = vmul.f32 %v244, %v217
        %v246 = vadd.f32 %v245, 0.0
        %s247 = sld [smem:[#allocation2 + $0x7]]
        %v248 = vstv %s247
        %v249 = vmul.f32 %v248, %v217
        %v250 = vadd.f32 %v249, 0.0
        %s251 = sld [smem:[#allocation2 + $0x20]]
        %v252 = vstv %s251
        %v253 = vmul.f32 %v252, %v217
        %255 = vrot.lane.b32.xlu0 %v253, 127
        %v256 = vpop.permute.xlu0 %255
        %v258 = vadd.f32 %v222, %v256
        %s259 = sld [smem:[#allocation2 + $0x21]]
        %v260 = vstv %s259
        %v261 = vmul.f32 %v260, %v217
        %263 = vrot.lane.b32.xlu0 %v261, 127
        %v264 = vpop.permute.xlu0 %263
        %v266 = vadd.f32 %v226, %v264
        %s267 = sld [smem:[#allocation2 + $0x22]]
        %v268 = vstv %s267
        %v269 = vmul.f32 %v268, %v217
        %271 = vrot.lane.b32.xlu0 %v269, 127
        %v272 = vpop.permute.xlu0 %271
        %v274 = vadd.f32 %v230, %v272
        %s275 = sld [smem:[#allocation2 + $0x23]]
        %v276 = vstv %s275
        %v277 = vmul.f32 %v276, %v217
        %279 = vrot.lane.b32.xlu0 %v277, 127
        %v280 = vpop.permute.xlu0 %279
        %v282 = vadd.f32 %v234, %v280
        %s283 = sld [smem:[#allocation2 + $0x24]]
        %v284 = vstv %s283
        %v285 = vmul.f32 %v284, %v217
        %287 = vrot.lane.b32.xlu0 %v285, 127
        %v288 = vpop.permute.xlu0 %287
        %v290 = vadd.f32 %v238, %v288
        %s291 = sld [smem:[#allocation2 + $0x25]]
        %v292 = vstv %s291
        %v293 = vmul.f32 %v292, %v217
        %295 = vrot.lane.b32.xlu0 %v293, 127
        %v296 = vpop.permute.xlu0 %295
        %v298 = vadd.f32 %v242, %v296
        %s299 = sld [smem:[#allocation2 + $0x26]]
        %v300 = vstv %s299
        %v301 = vmul.f32 %v300, %v217
        %303 = vrot.lane.b32.xlu0 %v301, 127
        %v304 = vpop.permute.xlu0 %303
        %v306 = vadd.f32 %v246, %v304
        %s307 = sld [smem:[#allocation2 + $0x27]]
        %v308 = vstv %s307
        %v309 = vmul.f32 %v308, %v217
        %311 = vrot.lane.b32.xlu0 %v309, 127
        %v312 = vpop.permute.xlu0 %311
        %v314 = vadd.f32 %v250, %v312
        %s315 = sld [smem:[#allocation2 + $0x40]]
        %v316 = vstv %s315
        %v317 = vmul.f32 %v316, %v217
        %319 = vrot.lane.b32.xlu0 %v317, 126
        %v320 = vpop.permute.xlu0 %319
        %v322 = vadd.f32 %v258, %v320
        %s323 = sld [smem:[#allocation2 + $0x41]]
        %v324 = vstv %s323
        %v325 = vmul.f32 %v324, %v217
        %327 = vrot.lane.b32.xlu0 %v325, 126
        %v328 = vpop.permute.xlu0 %327
        %v330 = vadd.f32 %v266, %v328
        %s331 = sld [smem:[#allocation2 + $0x42]]
        %v332 = vstv %s331
        %v333 = vmul.f32 %v332, %v217
        %335 = vrot.lane.b32.xlu0 %v333, 126
        %v336 = vpop.permute.xlu0 %335
        %v338 = vadd.f32 %v274, %v336
        %s339 = sld [smem:[#allocation2 + $0x43]]
        %v340 = vstv %s339
        %v341 = vmul.f32 %v340, %v217
        %343 = vrot.lane.b32.xlu0 %v341, 126
        %v344 = vpop.permute.xlu0 %343
        %v346 = vadd.f32 %v282, %v344
        %s347 = sld [smem:[#allocation2 + $0x44]]
        %v348 = vstv %s347
        %v349 = vmul.f32 %v348, %v217
        %351 = vrot.lane.b32.xlu0 %v349, 126
        %v352 = vpop.permute.xlu0 %351
        %v354 = vadd.f32 %v290, %v352
        %s355 = sld [smem:[#allocation2 + $0x45]]
        %v356 = vstv %s355
        %v357 = vmul.f32 %v356, %v217
        %359 = vrot.lane.b32.xlu0 %v357, 126
        %v360 = vpop.permute.xlu0 %359
        %v362 = vadd.f32 %v298, %v360
        %s363 = sld [smem:[#allocation2 + $0x46]]
        %v364 = vstv %s363
        %v365 = vmul.f32 %v364, %v217
        %367 = vrot.lane.b32.xlu0 %v365, 126
        %v368 = vpop.permute.xlu0 %367
        %v370 = vadd.f32 %v306, %v368
        %s371 = sld [smem:[#allocation2 + $0x47]]
        %v372 = vstv %s371
        %v373 = vmul.f32 %v372, %v217
        %375 = vrot.lane.b32.xlu0 %v373, 126
        %v376 = vpop.permute.xlu0 %375
        %v378 = vadd.f32 %v314, %v376
        %s379 = sld [smem:[#allocation2 + $0x60]]
        %v380 = vstv %s379
        %v381 = vmul.f32 %v380, %v217
        %v382 = vmul.f32 %v380, %v218
        %vm385 = vcmask 1046528
        %v386 = vrot.slane %v381, 1
        %v387 = vrot.slane %v382, 1
        %v388 = vsel %vm385, %v386, %v387
        %v390 = vadd.f32 %v322, %v388
        %s391 = sld [smem:[#allocation2 + $0x61]]
        %v392 = vstv %s391
        %v393 = vmul.f32 %v392, %v217
        %v394 = vmul.f32 %v392, %v218
        %v397 = vrot.slane %v393, 1
        %v398 = vrot.slane %v394, 1
        %v399 = vsel %vm385, %v397, %v398
        %v401 = vadd.f32 %v330, %v399
        %s402 = sld [smem:[#allocation2 + $0x62]]
        %v403 = vstv %s402
        %v404 = vmul.f32 %v403, %v217
        %v405 = vmul.f32 %v403, %v218
        %v408 = vrot.slane %v404, 1
        %v409 = vrot.slane %v405, 1
        %v410 = vsel %vm385, %v408, %v409
        %v412 = vadd.f32 %v338, %v410
        %s413 = sld [smem:[#allocation2 + $0x63]]
        %v414 = vstv %s413
        %v415 = vmul.f32 %v414, %v217
        %v416 = vmul.f32 %v414, %v218
        %v419 = vrot.slane %v415, 1
        %v420 = vrot.slane %v416, 1
        %v421 = vsel %vm385, %v419, %v420
        %v423 = vadd.f32 %v346, %v421
        %s424 = sld [smem:[#allocation2 + $0x64]]
        %v425 = vstv %s424
        %v426 = vmul.f32 %v425, %v217
        %v427 = vmul.f32 %v425, %v218
        %v430 = vrot.slane %v426, 1
        %v431 = vrot.slane %v427, 1
        %v432 = vsel %vm385, %v430, %v431
        %v434 = vadd.f32 %v354, %v432
        %s435 = sld [smem:[#allocation2 + $0x65]]
        %v436 = vstv %s435
        %v437 = vmul.f32 %v436, %v217
        %v438 = vmul.f32 %v436, %v218
        %v441 = vrot.slane %v437, 1
        %v442 = vrot.slane %v438, 1
        %v443 = vsel %vm385, %v441, %v442
        %v445 = vadd.f32 %v362, %v443
        %s446 = sld [smem:[#allocation2 + $0x66]]
        %v447 = vstv %s446
        %v448 = vmul.f32 %v447, %v217
        %v449 = vmul.f32 %v447, %v218
        %v452 = vrot.slane %v448, 1
        %v453 = vrot.slane %v449, 1
        %v454 = vsel %vm385, %v452, %v453
        %v456 = vadd.f32 %v370, %v454
        %s457 = sld [smem:[#allocation2 + $0x67]]
        %v458 = vstv %s457
        %v459 = vmul.f32 %v458, %v217
        %v460 = vmul.f32 %v458, %v218
        %v463 = vrot.slane %v459, 1
        %v464 = vrot.slane %v460, 1
        %v465 = vsel %vm385, %v463, %v464
        %v467 = vadd.f32 %v378, %v465
        %s468 = sld [smem:[#allocation2 + $0x80]]
        %v469 = vstv %s468
        %v470 = vmul.f32 %v469, %v217
        %v471 = vmul.f32 %v469, %v218
        %v474 = vrot.slane %v470, 1
        %v475 = vrot.slane %v471, 1
        %v476 = vsel %vm385, %v474, %v475
        %477 = vrot.lane.b32.xlu0 %v476, 127
        %v478 = vpop.permute.xlu0 %477
        %v480 = vadd.f32 %v390, %v478
        %s481 = sld [smem:[#allocation2 + $0x81]]
        %v482 = vstv %s481
        %v483 = vmul.f32 %v482, %v217
        %v484 = vmul.f32 %v482, %v218
        %v487 = vrot.slane %v483, 1
        %v488 = vrot.slane %v484, 1
        %v489 = vsel %vm385, %v487, %v488
        %490 = vrot.lane.b32.xlu0 %v489, 127
        %v491 = vpop.permute.xlu0 %490
        %v493 = vadd.f32 %v401, %v491
        %s494 = sld [smem:[#allocation2 + $0x82]]
        %v495 = vstv %s494
        %v496 = vmul.f32 %v495, %v217
        %v497 = vmul.f32 %v495, %v218
        %v500 = vrot.slane %v496, 1
        %v501 = vrot.slane %v497, 1
        %v502 = vsel %vm385, %v500, %v501
        %503 = vrot.lane.b32.xlu0 %v502, 127
        %v504 = vpop.permute.xlu0 %503
        %v506 = vadd.f32 %v412, %v504
        %s507 = sld [smem:[#allocation2 + $0x83]]
        %v508 = vstv %s507
        %v509 = vmul.f32 %v508, %v217
        %v510 = vmul.f32 %v508, %v218
        %v513 = vrot.slane %v509, 1
        %v514 = vrot.slane %v510, 1
        %v515 = vsel %vm385, %v513, %v514
        %516 = vrot.lane.b32.xlu0 %v515, 127
        %v517 = vpop.permute.xlu0 %516
        %v519 = vadd.f32 %v423, %v517
        %s520 = sld [smem:[#allocation2 + $0x84]]
        %v521 = vstv %s520
        %v522 = vmul.f32 %v521, %v217
        %v523 = vmul.f32 %v521, %v218
        %v526 = vrot.slane %v522, 1
        %v527 = vrot.slane %v523, 1
        %v528 = vsel %vm385, %v526, %v527
        %529 = vrot.lane.b32.xlu0 %v528, 127
        %v530 = vpop.permute.xlu0 %529
        %v532 = vadd.f32 %v434, %v530
        %s533 = sld [smem:[#allocation2 + $0x85]]
        %v534 = vstv %s533
        %v535 = vmul.f32 %v534, %v217
        %v536 = vmul.f32 %v534, %v218
        %v539 = vrot.slane %v535, 1
        %v540 = vrot.slane %v536, 1
        %v541 = vsel %vm385, %v539, %v540
        %542 = vrot.lane.b32.xlu0 %v541, 127
        %v543 = vpop.permute.xlu0 %542
        %v545 = vadd.f32 %v445, %v543
        %s546 = sld [smem:[#allocation2 + $0x86]]
        %v547 = vstv %s546
        %v548 = vmul.f32 %v547, %v217
        %v549 = vmul.f32 %v547, %v218
        %v552 = vrot.slane %v548, 1
        %v553 = vrot.slane %v549, 1
        %v554 = vsel %vm385, %v552, %v553
        %555 = vrot.lane.b32.xlu0 %v554, 127
        %v556 = vpop.permute.xlu0 %555
        %v558 = vadd.f32 %v456, %v556
        %s559 = sld [smem:[#allocation2 + $0x87]]
        %v560 = vstv %s559
        %v561 = vmul.f32 %v560, %v217
        %v562 = vmul.f32 %v560, %v218
        %v565 = vrot.slane %v561, 1
        %v566 = vrot.slane %v562, 1
        %v567 = vsel %vm385, %v565, %v566
        %568 = vrot.lane.b32.xlu0 %v567, 127
        %v569 = vpop.permute.xlu0 %568
        %v571 = vadd.f32 %v467, %v569
        %s572 = sld [smem:[#allocation2 + $0xa0]]
        %v573 = vstv %s572
        %v574 = vmul.f32 %v573, %v217
        %v575 = vmul.f32 %v573, %v218
        %v578 = vrot.slane %v574, 1
        %v579 = vrot.slane %v575, 1
        %v580 = vsel %vm385, %v578, %v579
        %581 = vrot.lane.b32.xlu0 %v580, 126
        %v582 = vpop.permute.xlu0 %581
        %v584 = vadd.f32 %v480, %v582
        %s585 = sld [smem:[#allocation2 + $0xa1]]
        %v586 = vstv %s585
        %v587 = vmul.f32 %v586, %v217
        %v588 = vmul.f32 %v586, %v218
        %v591 = vrot.slane %v587, 1
        %v592 = vrot.slane %v588, 1
        %v593 = vsel %vm385, %v591, %v592
        %594 = vrot.lane.b32.xlu0 %v593, 126
        %v595 = vpop.permute.xlu0 %594
        %v597 = vadd.f32 %v493, %v595
        %s598 = sld [smem:[#allocation2 + $0xa2]]
        %v599 = vstv %s598
        %v600 = vmul.f32 %v599, %v217
        %v601 = vmul.f32 %v599, %v218
        %v604 = vrot.slane %v600, 1
        %v605 = vrot.slane %v601, 1
        %v606 = vsel %vm385, %v604, %v605
        %607 = vrot.lane.b32.xlu0 %v606, 126
        %v608 = vpop.permute.xlu0 %607
        %v610 = vadd.f32 %v506, %v608
        %s611 = sld [smem:[#allocation2 + $0xa3]]
        %v612 = vstv %s611
        %v613 = vmul.f32 %v612, %v217
        %v614 = vmul.f32 %v612, %v218
        %v617 = vrot.slane %v613, 1
        %v618 = vrot.slane %v614, 1
        %v619 = vsel %vm385, %v617, %v618
        %620 = vrot.lane.b32.xlu0 %v619, 126
        %v621 = vpop.permute.xlu0 %620
        %v623 = vadd.f32 %v519, %v621
        %s624 = sld [smem:[#allocation2 + $0xa4]]
        %v625 = vstv %s624
        %v626 = vmul.f32 %v625, %v217
        %v627 = vmul.f32 %v625, %v218
        %v630 = vrot.slane %v626, 1
        %v631 = vrot.slane %v627, 1
        %v632 = vsel %vm385, %v630, %v631
        %633 = vrot.lane.b32.xlu0 %v632, 126
        %v634 = vpop.permute.xlu0 %633
        %v636 = vadd.f32 %v532, %v634
        %s637 = sld [smem:[#allocation2 + $0xa5]]
        %v638 = vstv %s637
        %v639 = vmul.f32 %v638, %v217
        %v640 = vmul.f32 %v638, %v218
        %v643 = vrot.slane %v639, 1
        %v644 = vrot.slane %v640, 1
        %v645 = vsel %vm385, %v643, %v644
        %646 = vrot.lane.b32.xlu0 %v645, 126
        %v647 = vpop.permute.xlu0 %646
        %v649 = vadd.f32 %v545, %v647
        %s650 = sld [smem:[#allocation2 + $0xa6]]
        %v651 = vstv %s650
        %v652 = vmul.f32 %v651, %v217
        %v653 = vmul.f32 %v651, %v218
        %v656 = vrot.slane %v652, 1
        %v657 = vrot.slane %v653, 1
        %v658 = vsel %vm385, %v656, %v657
        %659 = vrot.lane.b32.xlu0 %v658, 126
        %v660 = vpop.permute.xlu0 %659
        %v662 = vadd.f32 %v558, %v660
        %s663 = sld [smem:[#allocation2 + $0xa7]]
        %v664 = vstv %s663
        %v665 = vmul.f32 %v664, %v217
        %v666 = vmul.f32 %v664, %v218
        %v669 = vrot.slane %v665, 1
        %v670 = vrot.slane %v666, 1
        %v671 = vsel %vm385, %v669, %v670
        %672 = vrot.lane.b32.xlu0 %v671, 126
        %v673 = vpop.permute.xlu0 %672
        %v675 = vadd.f32 %v571, %v673
        %s676 = sld [smem:[#allocation2 + $0xc0]]
        %v677 = vstv %s676
        %v678 = vmul.f32 %v677, %v217
        %v679 = vmul.f32 %v677, %v218
        %vm682 = vcmask 1045504
        %v683 = vrot.slane %v678, 2
        %v684 = vrot.slane %v679, 2
        %v685 = vsel %vm682, %v683, %v684
        %v687 = vadd.f32 %v584, %v685
        %s688 = sld [smem:[#allocation2 + $0xc1]]
        %v689 = vstv %s688
        %v690 = vmul.f32 %v689, %v217
        %v691 = vmul.f32 %v689, %v218
        %v694 = vrot.slane %v690, 2
        %v695 = vrot.slane %v691, 2
        %v696 = vsel %vm682, %v694, %v695
        %v698 = vadd.f32 %v597, %v696
        %s699 = sld [smem:[#allocation2 + $0xc2]]
        %v700 = vstv %s699
        %v701 = vmul.f32 %v700, %v217
        %v702 = vmul.f32 %v700, %v218
        %v705 = vrot.slane %v701, 2
        %v706 = vrot.slane %v702, 2
        %v707 = vsel %vm682, %v705, %v706
        %v709 = vadd.f32 %v610, %v707
        %s710 = sld [smem:[#allocation2 + $0xc3]]
        %v711 = vstv %s710
        %v712 = vmul.f32 %v711, %v217
        %v713 = vmul.f32 %v711, %v218
        %v716 = vrot.slane %v712, 2
        %v717 = vrot.slane %v713, 2
        %v718 = vsel %vm682, %v716, %v717
        %v720 = vadd.f32 %v623, %v718
        %s721 = sld [smem:[#allocation2 + $0xc4]]
        %v722 = vstv %s721
        %v723 = vmul.f32 %v722, %v217
        %v724 = vmul.f32 %v722, %v218
        %v727 = vrot.slane %v723, 2
        %v728 = vrot.slane %v724, 2
        %v729 = vsel %vm682, %v727, %v728
        %v731 = vadd.f32 %v636, %v729
        %s732 = sld [smem:[#allocation2 + $0xc5]]
        %v733 = vstv %s732
        %v734 = vmul.f32 %v733, %v217
        %v735 = vmul.f32 %v733, %v218
        %v738 = vrot.slane %v734, 2
        %v739 = vrot.slane %v735, 2
        %v740 = vsel %vm682, %v738, %v739
        %v742 = vadd.f32 %v649, %v740
        %s743 = sld [smem:[#allocation2 + $0xc6]]
        %v744 = vstv %s743
        %v745 = vmul.f32 %v744, %v217
        %v746 = vmul.f32 %v744, %v218
        %v749 = vrot.slane %v745, 2
        %v750 = vrot.slane %v746, 2
        %v751 = vsel %vm682, %v749, %v750
        %v753 = vadd.f32 %v662, %v751
        %s754 = sld [smem:[#allocation2 + $0xc7]]
        %v755 = vstv %s754
        %v756 = vmul.f32 %v755, %v217
        %v757 = vmul.f32 %v755, %v218
        %v760 = vrot.slane %v756, 2
        %v761 = vrot.slane %v757, 2
        %v762 = vsel %vm682, %v760, %v761
        %v764 = vadd.f32 %v675, %v762
        %s765 = sld [smem:[#allocation2 + $0xe0]]
        %v766 = vstv %s765
        %v767 = vmul.f32 %v766, %v217
        %v768 = vmul.f32 %v766, %v218
        %v771 = vrot.slane %v767, 2
        %v772 = vrot.slane %v768, 2
        %v773 = vsel %vm682, %v771, %v772
        %774 = vrot.lane.b32.xlu0 %v773, 127
        %v775 = vpop.permute.xlu0 %774
        %v777 = vadd.f32 %v687, %v775
        %s778 = sld [smem:[#allocation2 + $0xe1]]
        %v779 = vstv %s778
        %v780 = vmul.f32 %v779, %v217
        %v781 = vmul.f32 %v779, %v218
        %v784 = vrot.slane %v780, 2
        %v785 = vrot.slane %v781, 2
        %v786 = vsel %vm682, %v784, %v785
        %787 = vrot.lane.b32.xlu0 %v786, 127
        %v788 = vpop.permute.xlu0 %787
        %v790 = vadd.f32 %v698, %v788
        %s791 = sld [smem:[#allocation2 + $0xe2]]
        %v792 = vstv %s791
        %v793 = vmul.f32 %v792, %v217
        %v794 = vmul.f32 %v792, %v218
        %v797 = vrot.slane %v793, 2
        %v798 = vrot.slane %v794, 2
        %v799 = vsel %vm682, %v797, %v798
        %800 = vrot.lane.b32.xlu0 %v799, 127
        %v801 = vpop.permute.xlu0 %800
        %v803 = vadd.f32 %v709, %v801
        %s804 = sld [smem:[#allocation2 + $0xe3]]
        %v805 = vstv %s804
        %v806 = vmul.f32 %v805, %v217
        %v807 = vmul.f32 %v805, %v218
        %v810 = vrot.slane %v806, 2
        %v811 = vrot.slane %v807, 2
        %v812 = vsel %vm682, %v810, %v811
        %813 = vrot.lane.b32.xlu0 %v812, 127
        %v814 = vpop.permute.xlu0 %813
        %v816 = vadd.f32 %v720, %v814
        %s817 = sld [smem:[#allocation2 + $0xe4]]
        %v818 = vstv %s817
        %v819 = vmul.f32 %v818, %v217
        %v820 = vmul.f32 %v818, %v218
        %v823 = vrot.slane %v819, 2
        %v824 = vrot.slane %v820, 2
        %v825 = vsel %vm682, %v823, %v824
        %826 = vrot.lane.b32.xlu0 %v825, 127
        %v827 = vpop.permute.xlu0 %826
        %v829 = vadd.f32 %v731, %v827
        %s830 = sld [smem:[#allocation2 + $0xe5]]
        %v831 = vstv %s830
        %v832 = vmul.f32 %v831, %v217
        %v833 = vmul.f32 %v831, %v218
        %v836 = vrot.slane %v832, 2
        %v837 = vrot.slane %v833, 2
        %v838 = vsel %vm682, %v836, %v837
        %839 = vrot.lane.b32.xlu0 %v838, 127
        %v840 = vpop.permute.xlu0 %839
        %v842 = vadd.f32 %v742, %v840
        %s843 = sld [smem:[#allocation2 + $0xe6]]
        %v844 = vstv %s843
        %v845 = vmul.f32 %v844, %v217
        %v846 = vmul.f32 %v844, %v218
        %v849 = vrot.slane %v845, 2
        %v850 = vrot.slane %v846, 2
        %v851 = vsel %vm682, %v849, %v850
        %852 = vrot.lane.b32.xlu0 %v851, 127
        %v853 = vpop.permute.xlu0 %852
        %v855 = vadd.f32 %v753, %v853
        %s856 = sld [smem:[#allocation2 + $0xe7]]
        %v857 = vstv %s856
        %v858 = vmul.f32 %v857, %v217
        %v859 = vmul.f32 %v857, %v218
        %v862 = vrot.slane %v858, 2
        %v863 = vrot.slane %v859, 2
        %v864 = vsel %vm682, %v862, %v863
        %865 = vrot.lane.b32.xlu0 %v864, 127
        %v866 = vpop.permute.xlu0 %865
        %v868 = vadd.f32 %v764, %v866
        %s869 = sld [smem:[#allocation2 + $0x100]]
        %v870 = vstv %s869
        %v871 = vmul.f32 %v870, %v217
        %v872 = vmul.f32 %v870, %v218
        %v875 = vrot.slane %v871, 2
        %v876 = vrot.slane %v872, 2
        %v877 = vsel %vm682, %v875, %v876
        %878 = vrot.lane.b32.xlu0 %v877, 126
        %v879 = vpop.permute.xlu0 %878
        %v881 = vadd.f32 %v777, %v879
        %s882 = sld [smem:[#allocation2 + $0x101]]
        %v883 = vstv %s882
        %v884 = vmul.f32 %v883, %v217
        %v885 = vmul.f32 %v883, %v218
        %v888 = vrot.slane %v884, 2
        %v889 = vrot.slane %v885, 2
        %v890 = vsel %vm682, %v888, %v889
        %891 = vrot.lane.b32.xlu0 %v890, 126
        %v892 = vpop.permute.xlu0 %891
        %v894 = vadd.f32 %v790, %v892
        %s895 = sld [smem:[#allocation2 + $0x102]]
        %v896 = vstv %s895
        %v897 = vmul.f32 %v896, %v217
        %v898 = vmul.f32 %v896, %v218
        %v901 = vrot.slane %v897, 2
        %v902 = vrot.slane %v898, 2
        %v903 = vsel %vm682, %v901, %v902
        %904 = vrot.lane.b32.xlu0 %v903, 126
        %v905 = vpop.permute.xlu0 %904
        %v907 = vadd.f32 %v803, %v905
        %s908 = sld [smem:[#allocation2 + $0x103]]
        %v909 = vstv %s908
        %v910 = vmul.f32 %v909, %v217
        %v911 = vmul.f32 %v909, %v218
        %v914 = vrot.slane %v910, 2
        %v915 = vrot.slane %v911, 2
        %v916 = vsel %vm682, %v914, %v915
        %917 = vrot.lane.b32.xlu0 %v916, 126
        %v918 = vpop.permute.xlu0 %917
        %v920 = vadd.f32 %v816, %v918
        %s921 = sld [smem:[#allocation2 + $0x104]]
        %v922 = vstv %s921
        %v923 = vmul.f32 %v922, %v217
        %v924 = vmul.f32 %v922, %v218
        %v927 = vrot.slane %v923, 2
        %v928 = vrot.slane %v924, 2
        %v929 = vsel %vm682, %v927, %v928
        %930 = vrot.lane.b32.xlu0 %v929, 126
        %v931 = vpop.permute.xlu0 %930
        %v933 = vadd.f32 %v829, %v931
        %s934 = sld [smem:[#allocation2 + $0x105]]
        %v935 = vstv %s934
        %v936 = vmul.f32 %v935, %v217
        %v937 = vmul.f32 %v935, %v218
        %v940 = vrot.slane %v936, 2
        %v941 = vrot.slane %v937, 2
        %v942 = vsel %vm682, %v940, %v941
        %943 = vrot.lane.b32.xlu0 %v942, 126
        %v944 = vpop.permute.xlu0 %943
        %v946 = vadd.f32 %v842, %v944
        %s947 = sld [smem:[#allocation2 + $0x106]]
        %v948 = vstv %s947
        %v949 = vmul.f32 %v948, %v217
        %v950 = vmul.f32 %v948, %v218
        %v953 = vrot.slane %v949, 2
        %v954 = vrot.slane %v950, 2
        %v955 = vsel %vm682, %v953, %v954
        %956 = vrot.lane.b32.xlu0 %v955, 126
        %v957 = vpop.permute.xlu0 %956
        %v959 = vadd.f32 %v855, %v957
        %s960 = sld [smem:[#allocation2 + $0x107]]
        %v961 = vstv %s960
        %v962 = vmul.f32 %v961, %v217
        %v963 = vmul.f32 %v961, %v218
        %v966 = vrot.slane %v962, 2
        %v967 = vrot.slane %v963, 2
        %v968 = vsel %vm682, %v966, %v967
        %969 = vrot.lane.b32.xlu0 %v968, 126
        %v970 = vpop.permute.xlu0 %969
        %v972 = vadd.f32 %v868, %v970
        %s973 = sadd.s32 %s211, 3
        %s974 = smul.addr %s973, 4
        %s975 = scalar_lea.vmem %s209, %s974
        %v976 = vld [vmem:[%s975] sm:$0xf]
        %v977 = vld [vmem:[%s975 + $0x4] sm:$0x1]
        %v978 = vunpack.c.l.bf16 %v976
        %v979 = vunpack.c.l.bf16 %v977
        %s980 = sld [smem:[#allocation2 + $0x8]]
        %v981 = vstv %s980
        %v982 = vmul.f32 %v981, %v978
        %v983 = vadd.f32 %v881, %v982
        %s984 = sld [smem:[#allocation2 + $0x9]]
        %v985 = vstv %s984
        %v986 = vmul.f32 %v985, %v978
        %v987 = vadd.f32 %v894, %v986
        %s988 = sld [smem:[#allocation2 + $0xa]]
        %v989 = vstv %s988
        %v990 = vmul.f32 %v989, %v978
        %v991 = vadd.f32 %v907, %v990
        %s992 = sld [smem:[#allocation2 + $0xb]]
        %v993 = vstv %s992
        %v994 = vmul.f32 %v993, %v978
        %v995 = vadd.f32 %v920, %v994
        %s996 = sld [smem:[#allocation2 + $0xc]]
        %v997 = vstv %s996
        %v998 = vmul.f32 %v997, %v978
        %v999 = vadd.f32 %v933, %v998
        %s1000 = sld [smem:[#allocation2 + $0xd]]
        %v1001 = vstv %s1000
        %v1002 = vmul.f32 %v1001, %v978
        %v1003 = vadd.f32 %v946, %v1002
        %s1004 = sld [smem:[#allocation2 + $0xe]]
        %v1005 = vstv %s1004
        %v1006 = vmul.f32 %v1005, %v978
        %v1007 = vadd.f32 %v959, %v1006
        %s1008 = sld [smem:[#allocation2 + $0xf]]
        %v1009 = vstv %s1008
        %v1010 = vmul.f32 %v1009, %v978
        %v1011 = vadd.f32 %v972, %v1010
        %s1012 = sld [smem:[#allocation2 + $0x28]]
        %v1013 = vstv %s1012
        %v1014 = vmul.f32 %v1013, %v978
        %1016 = vrot.lane.b32.xlu0 %v1014, 127
        %v1017 = vpop.permute.xlu0 %1016
        %v1019 = vadd.f32 %v983, %v1017
        %s1020 = sld [smem:[#allocation2 + $0x29]]
        %v1021 = vstv %s1020
        %v1022 = vmul.f32 %v1021, %v978
        %1024 = vrot.lane.b32.xlu0 %v1022, 127
        %v1025 = vpop.permute.xlu0 %1024
        %v1027 = vadd.f32 %v987, %v1025
        %s1028 = sld [smem:[#allocation2 + $0x2a]]
        %v1029 = vstv %s1028
        %v1030 = vmul.f32 %v1029, %v978
        %1032 = vrot.lane.b32.xlu0 %v1030, 127
        %v1033 = vpop.permute.xlu0 %1032
        %v1035 = vadd.f32 %v991, %v1033
        %s1036 = sld [smem:[#allocation2 + $0x2b]]
        %v1037 = vstv %s1036
        %v1038 = vmul.f32 %v1037, %v978
        %1040 = vrot.lane.b32.xlu0 %v1038, 127
        %v1041 = vpop.permute.xlu0 %1040
        %v1043 = vadd.f32 %v995, %v1041
        %s1044 = sld [smem:[#allocation2 + $0x2c]]
        %v1045 = vstv %s1044
        %v1046 = vmul.f32 %v1045, %v978
        %1048 = vrot.lane.b32.xlu0 %v1046, 127
        %v1049 = vpop.permute.xlu0 %1048
        %v1051 = vadd.f32 %v999, %v1049
        %s1052 = sld [smem:[#allocation2 + $0x2d]]
        %v1053 = vstv %s1052
        %v1054 = vmul.f32 %v1053, %v978
        %1056 = vrot.lane.b32.xlu0 %v1054, 127
        %v1057 = vpop.permute.xlu0 %1056
        %v1059 = vadd.f32 %v1003, %v1057
        %s1060 = sld [smem:[#allocation2 + $0x2e]]
        %v1061 = vstv %s1060
        %v1062 = vmul.f32 %v1061, %v978
        %1064 = vrot.lane.b32.xlu0 %v1062, 127
        %v1065 = vpop.permute.xlu0 %1064
        %v1067 = vadd.f32 %v1007, %v1065
        %s1068 = sld [smem:[#allocation2 + $0x2f]]
        %v1069 = vstv %s1068
        %v1070 = vmul.f32 %v1069, %v978
        %1072 = vrot.lane.b32.xlu0 %v1070, 127
        %v1073 = vpop.permute.xlu0 %1072
        %v1075 = vadd.f32 %v1011, %v1073
        %s1076 = sld [smem:[#allocation2 + $0x48]]
        %v1077 = vstv %s1076
        %v1078 = vmul.f32 %v1077, %v978
        %1080 = vrot.lane.b32.xlu0 %v1078, 126
        %v1081 = vpop.permute.xlu0 %1080
        %v1083 = vadd.f32 %v1019, %v1081
        %s1084 = sld [smem:[#allocation2 + $0x49]]
        %v1085 = vstv %s1084
        %v1086 = vmul.f32 %v1085, %v978
        %1088 = vrot.lane.b32.xlu0 %v1086, 126
        %v1089 = vpop.permute.xlu0 %1088
        %v1091 = vadd.f32 %v1027, %v1089
        %s1092 = sld [smem:[#allocation2 + $0x4a]]
        %v1093 = vstv %s1092
        %v1094 = vmul.f32 %v1093, %v978
        %1096 = vrot.lane.b32.xlu0 %v1094, 126
        %v1097 = vpop.permute.xlu0 %1096
        %v1099 = vadd.f32 %v1035, %v1097
        %s1100 = sld [smem:[#allocation2 + $0x4b]]
        %v1101 = vstv %s1100
        %v1102 = vmul.f32 %v1101, %v978
        %1104 = vrot.lane.b32.xlu0 %v1102, 126
        %v1105 = vpop.permute.xlu0 %1104
        %v1107 = vadd.f32 %v1043, %v1105
        %s1108 = sld [smem:[#allocation2 + $0x4c]]
        %v1109 = vstv %s1108
        %v1110 = vmul.f32 %v1109, %v978
        %1112 = vrot.lane.b32.xlu0 %v1110, 126
        %v1113 = vpop.permute.xlu0 %1112
        %v1115 = vadd.f32 %v1051, %v1113
        %s1116 = sld [smem:[#allocation2 + $0x4d]]
        %v1117 = vstv %s1116
        %v1118 = vmul.f32 %v1117, %v978
        %1120 = vrot.lane.b32.xlu0 %v1118, 126
        %v1121 = vpop.permute.xlu0 %1120
        %v1123 = vadd.f32 %v1059, %v1121
        %s1124 = sld [smem:[#allocation2 + $0x4e]]
        %v1125 = vstv %s1124
        %v1126 = vmul.f32 %v1125, %v978
        %1128 = vrot.lane.b32.xlu0 %v1126, 126
        %v1129 = vpop.permute.xlu0 %1128
        %v1131 = vadd.f32 %v1067, %v1129
        %s1132 = sld [smem:[#allocation2 + $0x4f]]
        %v1133 = vstv %s1132
        %v1134 = vmul.f32 %v1133, %v978
        %1136 = vrot.lane.b32.xlu0 %v1134, 126
        %v1137 = vpop.permute.xlu0 %1136
        %v1139 = vadd.f32 %v1075, %v1137
        %s1140 = sld [smem:[#allocation2 + $0x68]]
        %v1141 = vstv %s1140
        %v1142 = vmul.f32 %v1141, %v978
        %v1143 = vmul.f32 %v1141, %v979
        %v1146 = vrot.slane %v1142, 1
        %v1147 = vrot.slane %v1143, 1
        %v1148 = vsel %vm385, %v1146, %v1147
        %v1150 = vadd.f32 %v1083, %v1148
        %s1151 = sld [smem:[#allocation2 + $0x69]]
        %v1152 = vstv %s1151
        %v1153 = vmul.f32 %v1152, %v978
        %v1154 = vmul.f32 %v1152, %v979
        %v1157 = vrot.slane %v1153, 1
        %v1158 = vrot.slane %v1154, 1
        %v1159 = vsel %vm385, %v1157, %v1158
        %v1161 = vadd.f32 %v1091, %v1159
        %s1162 = sld [smem:[#allocation2 + $0x6a]]
        %v1163 = vstv %s1162
        %v1164 = vmul.f32 %v1163, %v978
        %v1165 = vmul.f32 %v1163, %v979
        %v1168 = vrot.slane %v1164, 1
        %v1169 = vrot.slane %v1165, 1
        %v1170 = vsel %vm385, %v1168, %v1169
        %v1172 = vadd.f32 %v1099, %v1170
        %s1173 = sld [smem:[#allocation2 + $0x6b]]
        %v1174 = vstv %s1173
        %v1175 = vmul.f32 %v1174, %v978
        %v1176 = vmul.f32 %v1174, %v979
        %v1179 = vrot.slane %v1175, 1
        %v1180 = vrot.slane %v1176, 1
        %v1181 = vsel %vm385, %v1179, %v1180
        %v1183 = vadd.f32 %v1107, %v1181
        %s1184 = sld [smem:[#allocation2 + $0x6c]]
        %v1185 = vstv %s1184
        %v1186 = vmul.f32 %v1185, %v978
        %v1187 = vmul.f32 %v1185, %v979
        %v1190 = vrot.slane %v1186, 1
        %v1191 = vrot.slane %v1187, 1
        %v1192 = vsel %vm385, %v1190, %v1191
        %v1194 = vadd.f32 %v1115, %v1192
        %s1195 = sld [smem:[#allocation2 + $0x6d]]
        %v1196 = vstv %s1195
        %v1197 = vmul.f32 %v1196, %v978
        %v1198 = vmul.f32 %v1196, %v979
        %v1201 = vrot.slane %v1197, 1
        %v1202 = vrot.slane %v1198, 1
        %v1203 = vsel %vm385, %v1201, %v1202
        %v1205 = vadd.f32 %v1123, %v1203
        %s1206 = sld [smem:[#allocation2 + $0x6e]]
        %v1207 = vstv %s1206
        %v1208 = vmul.f32 %v1207, %v978
        %v1209 = vmul.f32 %v1207, %v979
        %v1212 = vrot.slane %v1208, 1
        %v1213 = vrot.slane %v1209, 1
        %v1214 = vsel %vm385, %v1212, %v1213
        %v1216 = vadd.f32 %v1131, %v1214
        %s1217 = sld [smem:[#allocation2 + $0x6f]]
        %v1218 = vstv %s1217
        %v1219 = vmul.f32 %v1218, %v978
        %v1220 = vmul.f32 %v1218, %v979
        %v1223 = vrot.slane %v1219, 1
        %v1224 = vrot.slane %v1220, 1
        %v1225 = vsel %vm385, %v1223, %v1224
        %v1227 = vadd.f32 %v1139, %v1225
        %s1228 = sld [smem:[#allocation2 + $0x88]]
        %v1229 = vstv %s1228
        %v1230 = vmul.f32 %v1229, %v978
        %v1231 = vmul.f32 %v1229, %v979
        %v1234 = vrot.slane %v1230, 1
        %v1235 = vrot.slane %v1231, 1
        %v1236 = vsel %vm385, %v1234, %v1235
        %1237 = vrot.lane.b32.xlu0 %v1236, 127
        %v1238 = vpop.permute.xlu0 %1237
        %v1240 = vadd.f32 %v1150, %v1238
        %s1241 = sld [smem:[#allocation2 + $0x89]]
        %v1242 = vstv %s1241
        %v1243 = vmul.f32 %v1242, %v978
        %v1244 = vmul.f32 %v1242, %v979
        %v1247 = vrot.slane %v1243, 1
        %v1248 = vrot.slane %v1244, 1
        %v1249 = vsel %vm385, %v1247, %v1248
        %1250 = vrot.lane.b32.xlu0 %v1249, 127
        %v1251 = vpop.permute.xlu0 %1250
        %v1253 = vadd.f32 %v1161, %v1251
        %s1254 = sld [smem:[#allocation2 + $0x8a]]
        %v1255 = vstv %s1254
        %v1256 = vmul.f32 %v1255, %v978
        %v1257 = vmul.f32 %v1255, %v979
        %v1260 = vrot.slane %v1256, 1
        %v1261 = vrot.slane %v1257, 1
        %v1262 = vsel %vm385, %v1260, %v1261
        %1263 = vrot.lane.b32.xlu0 %v1262, 127
        %v1264 = vpop.permute.xlu0 %1263
        %v1266 = vadd.f32 %v1172, %v1264
        %s1267 = sld [smem:[#allocation2 + $0x8b]]
        %v1268 = vstv %s1267
        %v1269 = vmul.f32 %v1268, %v978
        %v1270 = vmul.f32 %v1268, %v979
        %v1273 = vrot.slane %v1269, 1
        %v1274 = vrot.slane %v1270, 1
        %v1275 = vsel %vm385, %v1273, %v1274
        %1276 = vrot.lane.b32.xlu0 %v1275, 127
        %v1277 = vpop.permute.xlu0 %1276
        %v1279 = vadd.f32 %v1183, %v1277
        %s1280 = sld [smem:[#allocation2 + $0x8c]]
        %v1281 = vstv %s1280
        %v1282 = vmul.f32 %v1281, %v978
        %v1283 = vmul.f32 %v1281, %v979
        %v1286 = vrot.slane %v1282, 1
        %v1287 = vrot.slane %v1283, 1
        %v1288 = vsel %vm385, %v1286, %v1287
        %1289 = vrot.lane.b32.xlu0 %v1288, 127
        %v1290 = vpop.permute.xlu0 %1289
        %v1292 = vadd.f32 %v1194, %v1290
        %s1293 = sld [smem:[#allocation2 + $0x8d]]
        %v1294 = vstv %s1293
        %v1295 = vmul.f32 %v1294, %v978
        %v1296 = vmul.f32 %v1294, %v979
        %v1299 = vrot.slane %v1295, 1
        %v1300 = vrot.slane %v1296, 1
        %v1301 = vsel %vm385, %v1299, %v1300
        %1302 = vrot.lane.b32.xlu0 %v1301, 127
        %v1303 = vpop.permute.xlu0 %1302
        %v1305 = vadd.f32 %v1205, %v1303
        %s1306 = sld [smem:[#allocation2 + $0x8e]]
        %v1307 = vstv %s1306
        %v1308 = vmul.f32 %v1307, %v978
        %v1309 = vmul.f32 %v1307, %v979
        %v1312 = vrot.slane %v1308, 1
        %v1313 = vrot.slane %v1309, 1
        %v1314 = vsel %vm385, %v1312, %v1313
        %1315 = vrot.lane.b32.xlu0 %v1314, 127
        %v1316 = vpop.permute.xlu0 %1315
        %v1318 = vadd.f32 %v1216, %v1316
        %s1319 = sld [smem:[#allocation2 + $0x8f]]
        %v1320 = vstv %s1319
        %v1321 = vmul.f32 %v1320, %v978
        %v1322 = vmul.f32 %v1320, %v979
        %v1325 = vrot.slane %v1321, 1
        %v1326 = vrot.slane %v1322, 1
        %v1327 = vsel %vm385, %v1325, %v1326
        %1328 = vrot.lane.b32.xlu0 %v1327, 127
        %v1329 = vpop.permute.xlu0 %1328
        %v1331 = vadd.f32 %v1227, %v1329
        %s1332 = sld [smem:[#allocation2 + $0xa8]]
        %v1333 = vstv %s1332
        %v1334 = vmul.f32 %v1333, %v978
        %v1335 = vmul.f32 %v1333, %v979
        %v1338 = vrot.slane %v1334, 1
        %v1339 = vrot.slane %v1335, 1
        %v1340 = vsel %vm385, %v1338, %v1339
        %1341 = vrot.lane.b32.xlu0 %v1340, 126
        %v1342 = vpop.permute.xlu0 %1341
        %v1344 = vadd.f32 %v1240, %v1342
        %s1345 = sld [smem:[#allocation2 + $0xa9]]
        %v1346 = vstv %s1345
        %v1347 = vmul.f32 %v1346, %v978
        %v1348 = vmul.f32 %v1346, %v979
        %v1351 = vrot.slane %v1347, 1
        %v1352 = vrot.slane %v1348, 1
        %v1353 = vsel %vm385, %v1351, %v1352
        %1354 = vrot.lane.b32.xlu0 %v1353, 126
        %v1355 = vpop.permute.xlu0 %1354
        %v1357 = vadd.f32 %v1253, %v1355
        %s1358 = sld [smem:[#allocation2 + $0xaa]]
        %v1359 = vstv %s1358
        %v1360 = vmul.f32 %v1359, %v978
        %v1361 = vmul.f32 %v1359, %v979
        %v1364 = vrot.slane %v1360, 1
        %v1365 = vrot.slane %v1361, 1
        %v1366 = vsel %vm385, %v1364, %v1365
        %1367 = vrot.lane.b32.xlu0 %v1366, 126
        %v1368 = vpop.permute.xlu0 %1367
        %v1370 = vadd.f32 %v1266, %v1368
        %s1371 = sld [smem:[#allocation2 + $0xab]]
        %v1372 = vstv %s1371
        %v1373 = vmul.f32 %v1372, %v978
        %v1374 = vmul.f32 %v1372, %v979
        %v1377 = vrot.slane %v1373, 1
        %v1378 = vrot.slane %v1374, 1
        %v1379 = vsel %vm385, %v1377, %v1378
        %1380 = vrot.lane.b32.xlu0 %v1379, 126
        %v1381 = vpop.permute.xlu0 %1380
        %v1383 = vadd.f32 %v1279, %v1381
        %s1384 = sld [smem:[#allocation2 + $0xac]]
        %v1385 = vstv %s1384
        %v1386 = vmul.f32 %v1385, %v978
        %v1387 = vmul.f32 %v1385, %v979
        %v1390 = vrot.slane %v1386, 1
        %v1391 = vrot.slane %v1387, 1
        %v1392 = vsel %vm385, %v1390, %v1391
        %1393 = vrot.lane.b32.xlu0 %v1392, 126
        %v1394 = vpop.permute.xlu0 %1393
        %v1396 = vadd.f32 %v1292, %v1394
        %s1397 = sld [smem:[#allocation2 + $0xad]]
        %v1398 = vstv %s1397
        %v1399 = vmul.f32 %v1398, %v978
        %v1400 = vmul.f32 %v1398, %v979
        %v1403 = vrot.slane %v1399, 1
        %v1404 = vrot.slane %v1400, 1
        %v1405 = vsel %vm385, %v1403, %v1404
        %1406 = vrot.lane.b32.xlu0 %v1405, 126
        %v1407 = vpop.permute.xlu0 %1406
        %v1409 = vadd.f32 %v1305, %v1407
        %s1410 = sld [smem:[#allocation2 + $0xae]]
        %v1411 = vstv %s1410
        %v1412 = vmul.f32 %v1411, %v978
        %v1413 = vmul.f32 %v1411, %v979
        %v1416 = vrot.slane %v1412, 1
        %v1417 = vrot.slane %v1413, 1
        %v1418 = vsel %vm385, %v1416, %v1417
        %1419 = vrot.lane.b32.xlu0 %v1418, 126
        %v1420 = vpop.permute.xlu0 %1419
        %v1422 = vadd.f32 %v1318, %v1420
        %s1423 = sld [smem:[#allocation2 + $0xaf]]
        %v1424 = vstv %s1423
        %v1425 = vmul.f32 %v1424, %v978
        %v1426 = vmul.f32 %v1424, %v979
        %v1429 = vrot.slane %v1425, 1
        %v1430 = vrot.slane %v1426, 1
        %v1431 = vsel %vm385, %v1429, %v1430
        %1432 = vrot.lane.b32.xlu0 %v1431, 126
        %v1433 = vpop.permute.xlu0 %1432
        %v1435 = vadd.f32 %v1331, %v1433
        %s1436 = sld [smem:[#allocation2 + $0xc8]]
        %v1437 = vstv %s1436
        %v1438 = vmul.f32 %v1437, %v978
        %v1439 = vmul.f32 %v1437, %v979
        %v1442 = vrot.slane %v1438, 2
        %v1443 = vrot.slane %v1439, 2
        %v1444 = vsel %vm682, %v1442, %v1443
        %v1446 = vadd.f32 %v1344, %v1444
        %s1447 = sld [smem:[#allocation2 + $0xc9]]
        %v1448 = vstv %s1447
        %v1449 = vmul.f32 %v1448, %v978
        %v1450 = vmul.f32 %v1448, %v979
        %v1453 = vrot.slane %v1449, 2
        %v1454 = vrot.slane %v1450, 2
        %v1455 = vsel %vm682, %v1453, %v1454
        %v1457 = vadd.f32 %v1357, %v1455
        %s1458 = sld [smem:[#allocation2 + $0xca]]
        %v1459 = vstv %s1458
        %v1460 = vmul.f32 %v1459, %v978
        %v1461 = vmul.f32 %v1459, %v979
        %v1464 = vrot.slane %v1460, 2
        %v1465 = vrot.slane %v1461, 2
        %v1466 = vsel %vm682, %v1464, %v1465
        %v1468 = vadd.f32 %v1370, %v1466
        %s1469 = sld [smem:[#allocation2 + $0xcb]]
        %v1470 = vstv %s1469
        %v1471 = vmul.f32 %v1470, %v978
        %v1472 = vmul.f32 %v1470, %v979
        %v1475 = vrot.slane %v1471, 2
        %v1476 = vrot.slane %v1472, 2
        %v1477 = vsel %vm682, %v1475, %v1476
        %v1479 = vadd.f32 %v1383, %v1477
        %s1480 = sld [smem:[#allocation2 + $0xcc]]
        %v1481 = vstv %s1480
        %v1482 = vmul.f32 %v1481, %v978
        %v1483 = vmul.f32 %v1481, %v979
        %v1486 = vrot.slane %v1482, 2
        %v1487 = vrot.slane %v1483, 2
        %v1488 = vsel %vm682, %v1486, %v1487
        %v1490 = vadd.f32 %v1396, %v1488
        %s1491 = sld [smem:[#allocation2 + $0xcd]]
        %v1492 = vstv %s1491
        %v1493 = vmul.f32 %v1492, %v978
        %v1494 = vmul.f32 %v1492, %v979
        %v1497 = vrot.slane %v1493, 2
        %v1498 = vrot.slane %v1494, 2
        %v1499 = vsel %vm682, %v1497, %v1498
        %v1501 = vadd.f32 %v1409, %v1499
        %s1502 = sld [smem:[#allocation2 + $0xce]]
        %v1503 = vstv %s1502
        %v1504 = vmul.f32 %v1503, %v978
        %v1505 = vmul.f32 %v1503, %v979
        %v1508 = vrot.slane %v1504, 2
        %v1509 = vrot.slane %v1505, 2
        %v1510 = vsel %vm682, %v1508, %v1509
        %v1512 = vadd.f32 %v1422, %v1510
        %s1513 = sld [smem:[#allocation2 + $0xcf]]
        %v1514 = vstv %s1513
        %v1515 = vmul.f32 %v1514, %v978
        %v1516 = vmul.f32 %v1514, %v979
        %v1519 = vrot.slane %v1515, 2
        %v1520 = vrot.slane %v1516, 2
        %v1521 = vsel %vm682, %v1519, %v1520
        %v1523 = vadd.f32 %v1435, %v1521
        %s1524 = sld [smem:[#allocation2 + $0xe8]]
        %v1525 = vstv %s1524
        %v1526 = vmul.f32 %v1525, %v978
        %v1527 = vmul.f32 %v1525, %v979
        %v1530 = vrot.slane %v1526, 2
        %v1531 = vrot.slane %v1527, 2
        %v1532 = vsel %vm682, %v1530, %v1531
        %1533 = vrot.lane.b32.xlu0 %v1532, 127
        %v1534 = vpop.permute.xlu0 %1533
        %v1536 = vadd.f32 %v1446, %v1534
        %s1537 = sld [smem:[#allocation2 + $0xe9]]
        %v1538 = vstv %s1537
        %v1539 = vmul.f32 %v1538, %v978
        %v1540 = vmul.f32 %v1538, %v979
        %v1543 = vrot.slane %v1539, 2
        %v1544 = vrot.slane %v1540, 2
        %v1545 = vsel %vm682, %v1543, %v1544
        %1546 = vrot.lane.b32.xlu0 %v1545, 127
        %v1547 = vpop.permute.xlu0 %1546
        %v1549 = vadd.f32 %v1457, %v1547
        %s1550 = sld [smem:[#allocation2 + $0xea]]
        %v1551 = vstv %s1550
        %v1552 = vmul.f32 %v1551, %v978
        %v1553 = vmul.f32 %v1551, %v979
        %v1556 = vrot.slane %v1552, 2
        %v1557 = vrot.slane %v1553, 2
        %v1558 = vsel %vm682, %v1556, %v1557
        %1559 = vrot.lane.b32.xlu0 %v1558, 127
        %v1560 = vpop.permute.xlu0 %1559
        %v1562 = vadd.f32 %v1468, %v1560
        %s1563 = sld [smem:[#allocation2 + $0xeb]]
        %v1564 = vstv %s1563
        %v1565 = vmul.f32 %v1564, %v978
        %v1566 = vmul.f32 %v1564, %v979
        %v1569 = vrot.slane %v1565, 2
        %v1570 = vrot.slane %v1566, 2
        %v1571 = vsel %vm682, %v1569, %v1570
        %1572 = vrot.lane.b32.xlu0 %v1571, 127
        %v1573 = vpop.permute.xlu0 %1572
        %v1575 = vadd.f32 %v1479, %v1573
        %s1576 = sld [smem:[#allocation2 + $0xec]]
        %v1577 = vstv %s1576
        %v1578 = vmul.f32 %v1577, %v978
        %v1579 = vmul.f32 %v1577, %v979
        %v1582 = vrot.slane %v1578, 2
        %v1583 = vrot.slane %v1579, 2
        %v1584 = vsel %vm682, %v1582, %v1583
        %1585 = vrot.lane.b32.xlu0 %v1584, 127
        %v1586 = vpop.permute.xlu0 %1585
        %v1588 = vadd.f32 %v1490, %v1586
        %s1589 = sld [smem:[#allocation2 + $0xed]]
        %v1590 = vstv %s1589
        %v1591 = vmul.f32 %v1590, %v978
        %v1592 = vmul.f32 %v1590, %v979
        %v1595 = vrot.slane %v1591, 2
        %v1596 = vrot.slane %v1592, 2
        %v1597 = vsel %vm682, %v1595, %v1596
        %1598 = vrot.lane.b32.xlu0 %v1597, 127
        %v1599 = vpop.permute.xlu0 %1598
        %v1601 = vadd.f32 %v1501, %v1599
        %s1602 = sld [smem:[#allocation2 + $0xee]]
        %v1603 = vstv %s1602
        %v1604 = vmul.f32 %v1603, %v978
        %v1605 = vmul.f32 %v1603, %v979
        %v1608 = vrot.slane %v1604, 2
        %v1609 = vrot.slane %v1605, 2
        %v1610 = vsel %vm682, %v1608, %v1609
        %1611 = vrot.lane.b32.xlu0 %v1610, 127
        %v1612 = vpop.permute.xlu0 %1611
        %v1614 = vadd.f32 %v1512, %v1612
        %s1615 = sld [smem:[#allocation2 + $0xef]]
        %v1616 = vstv %s1615
        %v1617 = vmul.f32 %v1616, %v978
        %v1618 = vmul.f32 %v1616, %v979
        %v1621 = vrot.slane %v1617, 2
        %v1622 = vrot.slane %v1618, 2
        %v1623 = vsel %vm682, %v1621, %v1622
        %1624 = vrot.lane.b32.xlu0 %v1623, 127
        %v1625 = vpop.permute.xlu0 %1624
        %v1627 = vadd.f32 %v1523, %v1625
        %s1628 = sld [smem:[#allocation2 + $0x108]]
        %v1629 = vstv %s1628
        %v1630 = vmul.f32 %v1629, %v978
        %v1631 = vmul.f32 %v1629, %v979
        %v1634 = vrot.slane %v1630, 2
        %v1635 = vrot.slane %v1631, 2
        %v1636 = vsel %vm682, %v1634, %v1635
        %1637 = vrot.lane.b32.xlu0 %v1636, 126
        %v1638 = vpop.permute.xlu0 %1637
        %v1640 = vadd.f32 %v1536, %v1638
        %s1641 = sld [smem:[#allocation2 + $0x109]]
        %v1642 = vstv %s1641
        %v1643 = vmul.f32 %v1642, %v978
        %v1644 = vmul.f32 %v1642, %v979
        %v1647 = vrot.slane %v1643, 2
        %v1648 = vrot.slane %v1644, 2
        %v1649 = vsel %vm682, %v1647, %v1648
        %1650 = vrot.lane.b32.xlu0 %v1649, 126
        %v1651 = vpop.permute.xlu0 %1650
        %v1653 = vadd.f32 %v1549, %v1651
        %s1654 = sld [smem:[#allocation2 + $0x10a]]
        %v1655 = vstv %s1654
        %v1656 = vmul.f32 %v1655, %v978
        %v1657 = vmul.f32 %v1655, %v979
        %v1660 = vrot.slane %v1656, 2
        %v1661 = vrot.slane %v1657, 2
        %v1662 = vsel %vm682, %v1660, %v1661
        %1663 = vrot.lane.b32.xlu0 %v1662, 126
        %v1664 = vpop.permute.xlu0 %1663
        %v1666 = vadd.f32 %v1562, %v1664
        %s1667 = sld [smem:[#allocation2 + $0x10b]]
        %v1668 = vstv %s1667
        %v1669 = vmul.f32 %v1668, %v978
        %v1670 = vmul.f32 %v1668, %v979
        %v1673 = vrot.slane %v1669, 2
        %v1674 = vrot.slane %v1670, 2
        %v1675 = vsel %vm682, %v1673, %v1674
        %1676 = vrot.lane.b32.xlu0 %v1675, 126
        %v1677 = vpop.permute.xlu0 %1676
        %v1679 = vadd.f32 %v1575, %v1677
        %s1680 = sld [smem:[#allocation2 + $0x10c]]
        %v1681 = vstv %s1680
        %v1682 = vmul.f32 %v1681, %v978
        %v1683 = vmul.f32 %v1681, %v979
        %v1686 = vrot.slane %v1682, 2
        %v1687 = vrot.slane %v1683, 2
        %v1688 = vsel %vm682, %v1686, %v1687
        %1689 = vrot.lane.b32.xlu0 %v1688, 126
        %v1690 = vpop.permute.xlu0 %1689
        %v1692 = vadd.f32 %v1588, %v1690
        %s1693 = sld [smem:[#allocation2 + $0x10d]]
        %v1694 = vstv %s1693
        %v1695 = vmul.f32 %v1694, %v978
        %v1696 = vmul.f32 %v1694, %v979
        %v1699 = vrot.slane %v1695, 2
        %v1700 = vrot.slane %v1696, 2
        %v1701 = vsel %vm682, %v1699, %v1700
        %1702 = vrot.lane.b32.xlu0 %v1701, 126
        %v1703 = vpop.permute.xlu0 %1702
        %v1705 = vadd.f32 %v1601, %v1703
        %s1706 = sld [smem:[#allocation2 + $0x10e]]
        %v1707 = vstv %s1706
        %v1708 = vmul.f32 %v1707, %v978
        %v1709 = vmul.f32 %v1707, %v979
        %v1712 = vrot.slane %v1708, 2
        %v1713 = vrot.slane %v1709, 2
        %v1714 = vsel %vm682, %v1712, %v1713
        %1715 = vrot.lane.b32.xlu0 %v1714, 126
        %v1716 = vpop.permute.xlu0 %1715
        %v1718 = vadd.f32 %v1614, %v1716
        %s1719 = sld [smem:[#allocation2 + $0x10f]]
        %v1720 = vstv %s1719
        %v1721 = vmul.f32 %v1720, %v978
        %v1722 = vmul.f32 %v1720, %v979
        %v1725 = vrot.slane %v1721, 2
        %v1726 = vrot.slane %v1722, 2
        %v1727 = vsel %vm682, %v1725, %v1726
        %1728 = vrot.lane.b32.xlu0 %v1727, 126
        %v1729 = vpop.permute.xlu0 %1728
        %v1731 = vadd.f32 %v1627, %v1729
        %s1732 = sadd.s32 %s211, 6
        %s1733 = smul.addr %s1732, 4
        %s1734 = scalar_lea.vmem %s209, %s1733
        %v1735 = vld [vmem:[%s1734] sm:$0xf]
        %v1736 = vld [vmem:[%s1734 + $0x4] sm:$0x1]
        %v1737 = vunpack.c.l.bf16 %v1735
        %v1738 = vunpack.c.l.bf16 %v1736
        %s1739 = sld [smem:[#allocation2 + $0x10]]
        %v1740 = vstv %s1739
        %v1741 = vmul.f32 %v1740, %v1737
        %v1742 = vadd.f32 %v1640, %v1741
        %s1743 = sld [smem:[#allocation2 + $0x11]]
        %v1744 = vstv %s1743
        %v1745 = vmul.f32 %v1744, %v1737
        %v1746 = vadd.f32 %v1653, %v1745
        %s1747 = sld [smem:[#allocation2 + $0x12]]
        %v1748 = vstv %s1747
        %v1749 = vmul.f32 %v1748, %v1737
        %v1750 = vadd.f32 %v1666, %v1749
        %s1751 = sld [smem:[#allocation2 + $0x13]]
        %v1752 = vstv %s1751
        %v1753 = vmul.f32 %v1752, %v1737
        %v1754 = vadd.f32 %v1679, %v1753
        %s1755 = sld [smem:[#allocation2 + $0x14]]
        %v1756 = vstv %s1755
        %v1757 = vmul.f32 %v1756, %v1737
        %v1758 = vadd.f32 %v1692, %v1757
        %s1759 = sld [smem:[#allocation2 + $0x15]]
        %v1760 = vstv %s1759
        %v1761 = vmul.f32 %v1760, %v1737
        %v1762 = vadd.f32 %v1705, %v1761
        %s1763 = sld [smem:[#allocation2 + $0x16]]
        %v1764 = vstv %s1763
        %v1765 = vmul.f32 %v1764, %v1737
        %v1766 = vadd.f32 %v1718, %v1765
        %s1767 = sld [smem:[#allocation2 + $0x17]]
        %v1768 = vstv %s1767
        %v1769 = vmul.f32 %v1768, %v1737
        %v1770 = vadd.f32 %v1731, %v1769
        %s1771 = sld [smem:[#allocation2 + $0x30]]
        %v1772 = vstv %s1771
        %v1773 = vmul.f32 %v1772, %v1737
        %1775 = vrot.lane.b32.xlu0 %v1773, 127
        %v1776 = vpop.permute.xlu0 %1775
        %v1778 = vadd.f32 %v1742, %v1776
        %s1779 = sld [smem:[#allocation2 + $0x31]]
        %v1780 = vstv %s1779
        %v1781 = vmul.f32 %v1780, %v1737
        %1783 = vrot.lane.b32.xlu0 %v1781, 127
        %v1784 = vpop.permute.xlu0 %1783
        %v1786 = vadd.f32 %v1746, %v1784
        %s1787 = sld [smem:[#allocation2 + $0x32]]
        %v1788 = vstv %s1787
        %v1789 = vmul.f32 %v1788, %v1737
        %1791 = vrot.lane.b32.xlu0 %v1789, 127
        %v1792 = vpop.permute.xlu0 %1791
        %v1794 = vadd.f32 %v1750, %v1792
        %s1795 = sld [smem:[#allocation2 + $0x33]]
        %v1796 = vstv %s1795
        %v1797 = vmul.f32 %v1796, %v1737
        %1799 = vrot.lane.b32.xlu0 %v1797, 127
        %v1800 = vpop.permute.xlu0 %1799
        %v1802 = vadd.f32 %v1754, %v1800
        %s1803 = sld [smem:[#allocation2 + $0x34]]
        %v1804 = vstv %s1803
        %v1805 = vmul.f32 %v1804, %v1737
        %1807 = vrot.lane.b32.xlu0 %v1805, 127
        %v1808 = vpop.permute.xlu0 %1807
        %v1810 = vadd.f32 %v1758, %v1808
        %s1811 = sld [smem:[#allocation2 + $0x35]]
        %v1812 = vstv %s1811
        %v1813 = vmul.f32 %v1812, %v1737
        %1815 = vrot.lane.b32.xlu0 %v1813, 127
        %v1816 = vpop.permute.xlu0 %1815
        %v1818 = vadd.f32 %v1762, %v1816
        %s1819 = sld [smem:[#allocation2 + $0x36]]
        %v1820 = vstv %s1819
        %v1821 = vmul.f32 %v1820, %v1737
        %1823 = vrot.lane.b32.xlu0 %v1821, 127
        %v1824 = vpop.permute.xlu0 %1823
        %v1826 = vadd.f32 %v1766, %v1824
        %s1827 = sld [smem:[#allocation2 + $0x37]]
        %v1828 = vstv %s1827
        %v1829 = vmul.f32 %v1828, %v1737
        %1831 = vrot.lane.b32.xlu0 %v1829, 127
        %v1832 = vpop.permute.xlu0 %1831
        %v1834 = vadd.f32 %v1770, %v1832
        %s1835 = sld [smem:[#allocation2 + $0x50]]
        %v1836 = vstv %s1835
        %v1837 = vmul.f32 %v1836, %v1737
        %1839 = vrot.lane.b32.xlu0 %v1837, 126
        %v1840 = vpop.permute.xlu0 %1839
        %v1842 = vadd.f32 %v1778, %v1840
        %s1843 = sld [smem:[#allocation2 + $0x51]]
        %v1844 = vstv %s1843
        %v1845 = vmul.f32 %v1844, %v1737
        %1847 = vrot.lane.b32.xlu0 %v1845, 126
        %v1848 = vpop.permute.xlu0 %1847
        %v1850 = vadd.f32 %v1786, %v1848
        %s1851 = sld [smem:[#allocation2 + $0x52]]
        %v1852 = vstv %s1851
        %v1853 = vmul.f32 %v1852, %v1737
        %1855 = vrot.lane.b32.xlu0 %v1853, 126
        %v1856 = vpop.permute.xlu0 %1855
        %v1858 = vadd.f32 %v1794, %v1856
        %s1859 = sld [smem:[#allocation2 + $0x53]]
        %v1860 = vstv %s1859
        %v1861 = vmul.f32 %v1860, %v1737
        %1863 = vrot.lane.b32.xlu0 %v1861, 126
        %v1864 = vpop.permute.xlu0 %1863
        %v1866 = vadd.f32 %v1802, %v1864
        %s1867 = sld [smem:[#allocation2 + $0x54]]
        %v1868 = vstv %s1867
        %v1869 = vmul.f32 %v1868, %v1737
        %1871 = vrot.lane.b32.xlu0 %v1869, 126
        %v1872 = vpop.permute.xlu0 %1871
        %v1874 = vadd.f32 %v1810, %v1872
        %s1875 = sld [smem:[#allocation2 + $0x55]]
        %v1876 = vstv %s1875
        %v1877 = vmul.f32 %v1876, %v1737
        %1879 = vrot.lane.b32.xlu0 %v1877, 126
        %v1880 = vpop.permute.xlu0 %1879
        %v1882 = vadd.f32 %v1818, %v1880
        %s1883 = sld [smem:[#allocation2 + $0x56]]
        %v1884 = vstv %s1883
        %v1885 = vmul.f32 %v1884, %v1737
        %1887 = vrot.lane.b32.xlu0 %v1885, 126
        %v1888 = vpop.permute.xlu0 %1887
        %v1890 = vadd.f32 %v1826, %v1888
        %s1891 = sld [smem:[#allocation2 + $0x57]]
        %v1892 = vstv %s1891
        %v1893 = vmul.f32 %v1892, %v1737
        %1895 = vrot.lane.b32.xlu0 %v1893, 126
        %v1896 = vpop.permute.xlu0 %1895
        %v1898 = vadd.f32 %v1834, %v1896
        %s1899 = sld [smem:[#allocation2 + $0x70]]
        %v1900 = vstv %s1899
        %v1901 = vmul.f32 %v1900, %v1737
        %v1902 = vmul.f32 %v1900, %v1738
        %v1905 = vrot.slane %v1901, 1
        %v1906 = vrot.slane %v1902, 1
        %v1907 = vsel %vm385, %v1905, %v1906
        %v1909 = vadd.f32 %v1842, %v1907
        %s1910 = sld [smem:[#allocation2 + $0x71]]
        %v1911 = vstv %s1910
        %v1912 = vmul.f32 %v1911, %v1737
        %v1913 = vmul.f32 %v1911, %v1738
        %v1916 = vrot.slane %v1912, 1
        %v1917 = vrot.slane %v1913, 1
        %v1918 = vsel %vm385, %v1916, %v1917
        %v1920 = vadd.f32 %v1850, %v1918
        %s1921 = sld [smem:[#allocation2 + $0x72]]
        %v1922 = vstv %s1921
        %v1923 = vmul.f32 %v1922, %v1737
        %v1924 = vmul.f32 %v1922, %v1738
        %v1927 = vrot.slane %v1923, 1
        %v1928 = vrot.slane %v1924, 1
        %v1929 = vsel %vm385, %v1927, %v1928
        %v1931 = vadd.f32 %v1858, %v1929
        %s1932 = sld [smem:[#allocation2 + $0x73]]
        %v1933 = vstv %s1932
        %v1934 = vmul.f32 %v1933, %v1737
        %v1935 = vmul.f32 %v1933, %v1738
        %v1938 = vrot.slane %v1934, 1
        %v1939 = vrot.slane %v1935, 1
        %v1940 = vsel %vm385, %v1938, %v1939
        %v1942 = vadd.f32 %v1866, %v1940
        %s1943 = sld [smem:[#allocation2 + $0x74]]
        %v1944 = vstv %s1943
        %v1945 = vmul.f32 %v1944, %v1737
        %v1946 = vmul.f32 %v1944, %v1738
        %v1949 = vrot.slane %v1945, 1
        %v1950 = vrot.slane %v1946, 1
        %v1951 = vsel %vm385, %v1949, %v1950
        %v1953 = vadd.f32 %v1874, %v1951
        %s1954 = sld [smem:[#allocation2 + $0x75]]
        %v1955 = vstv %s1954
        %v1956 = vmul.f32 %v1955, %v1737
        %v1957 = vmul.f32 %v1955, %v1738
        %v1960 = vrot.slane %v1956, 1
        %v1961 = vrot.slane %v1957, 1
        %v1962 = vsel %vm385, %v1960, %v1961
        %v1964 = vadd.f32 %v1882, %v1962
        %s1965 = sld [smem:[#allocation2 + $0x76]]
        %v1966 = vstv %s1965
        %v1967 = vmul.f32 %v1966, %v1737
        %v1968 = vmul.f32 %v1966, %v1738
        %v1971 = vrot.slane %v1967, 1
        %v1972 = vrot.slane %v1968, 1
        %v1973 = vsel %vm385, %v1971, %v1972
        %v1975 = vadd.f32 %v1890, %v1973
        %s1976 = sld [smem:[#allocation2 + $0x77]]
        %v1977 = vstv %s1976
        %v1978 = vmul.f32 %v1977, %v1737
        %v1979 = vmul.f32 %v1977, %v1738
        %v1982 = vrot.slane %v1978, 1
        %v1983 = vrot.slane %v1979, 1
        %v1984 = vsel %vm385, %v1982, %v1983
        %v1986 = vadd.f32 %v1898, %v1984
        %s1987 = sld [smem:[#allocation2 + $0x90]]
        %v1988 = vstv %s1987
        %v1989 = vmul.f32 %v1988, %v1737
        %v1990 = vmul.f32 %v1988, %v1738
        %v1993 = vrot.slane %v1989, 1
        %v1994 = vrot.slane %v1990, 1
        %v1995 = vsel %vm385, %v1993, %v1994
        %1996 = vrot.lane.b32.xlu0 %v1995, 127
        %v1997 = vpop.permute.xlu0 %1996
        %v1999 = vadd.f32 %v1909, %v1997
        %s2000 = sld [smem:[#allocation2 + $0x91]]
        %v2001 = vstv %s2000
        %v2002 = vmul.f32 %v2001, %v1737
        %v2003 = vmul.f32 %v2001, %v1738
        %v2006 = vrot.slane %v2002, 1
        %v2007 = vrot.slane %v2003, 1
        %v2008 = vsel %vm385, %v2006, %v2007
        %2009 = vrot.lane.b32.xlu0 %v2008, 127
        %v2010 = vpop.permute.xlu0 %2009
        %v2012 = vadd.f32 %v1920, %v2010
        %s2013 = sld [smem:[#allocation2 + $0x92]]
        %v2014 = vstv %s2013
        %v2015 = vmul.f32 %v2014, %v1737
        %v2016 = vmul.f32 %v2014, %v1738
        %v2019 = vrot.slane %v2015, 1
        %v2020 = vrot.slane %v2016, 1
        %v2021 = vsel %vm385, %v2019, %v2020
        %2022 = vrot.lane.b32.xlu0 %v2021, 127
        %v2023 = vpop.permute.xlu0 %2022
        %v2025 = vadd.f32 %v1931, %v2023
        %s2026 = sld [smem:[#allocation2 + $0x93]]
        %v2027 = vstv %s2026
        %v2028 = vmul.f32 %v2027, %v1737
        %v2029 = vmul.f32 %v2027, %v1738
        %v2032 = vrot.slane %v2028, 1
        %v2033 = vrot.slane %v2029, 1
        %v2034 = vsel %vm385, %v2032, %v2033
        %2035 = vrot.lane.b32.xlu0 %v2034, 127
        %v2036 = vpop.permute.xlu0 %2035
        %v2038 = vadd.f32 %v1942, %v2036
        %s2039 = sld [smem:[#allocation2 + $0x94]]
        %v2040 = vstv %s2039
        %v2041 = vmul.f32 %v2040, %v1737
        %v2042 = vmul.f32 %v2040, %v1738
        %v2045 = vrot.slane %v2041, 1
        %v2046 = vrot.slane %v2042, 1
        %v2047 = vsel %vm385, %v2045, %v2046
        %2048 = vrot.lane.b32.xlu0 %v2047, 127
        %v2049 = vpop.permute.xlu0 %2048
        %v2051 = vadd.f32 %v1953, %v2049
        %s2052 = sld [smem:[#allocation2 + $0x95]]
        %v2053 = vstv %s2052
        %v2054 = vmul.f32 %v2053, %v1737
        %v2055 = vmul.f32 %v2053, %v1738
        %v2058 = vrot.slane %v2054, 1
        %v2059 = vrot.slane %v2055, 1
        %v2060 = vsel %vm385, %v2058, %v2059
        %2061 = vrot.lane.b32.xlu0 %v2060, 127
        %v2062 = vpop.permute.xlu0 %2061
        %v2064 = vadd.f32 %v1964, %v2062
        %s2065 = sld [smem:[#allocation2 + $0x96]]
        %v2066 = vstv %s2065
        %v2067 = vmul.f32 %v2066, %v1737
        %v2068 = vmul.f32 %v2066, %v1738
        %v2071 = vrot.slane %v2067, 1
        %v2072 = vrot.slane %v2068, 1
        %v2073 = vsel %vm385, %v2071, %v2072
        %2074 = vrot.lane.b32.xlu0 %v2073, 127
        %v2075 = vpop.permute.xlu0 %2074
        %v2077 = vadd.f32 %v1975, %v2075
        %s2078 = sld [smem:[#allocation2 + $0x97]]
        %v2079 = vstv %s2078
        %v2080 = vmul.f32 %v2079, %v1737
        %v2081 = vmul.f32 %v2079, %v1738
        %v2084 = vrot.slane %v2080, 1
        %v2085 = vrot.slane %v2081, 1
        %v2086 = vsel %vm385, %v2084, %v2085
        %2087 = vrot.lane.b32.xlu0 %v2086, 127
        %v2088 = vpop.permute.xlu0 %2087
        %v2090 = vadd.f32 %v1986, %v2088
        %s2091 = sld [smem:[#allocation2 + $0xb0]]
        %v2092 = vstv %s2091
        %v2093 = vmul.f32 %v2092, %v1737
        %v2094 = vmul.f32 %v2092, %v1738
        %v2097 = vrot.slane %v2093, 1
        %v2098 = vrot.slane %v2094, 1
        %v2099 = vsel %vm385, %v2097, %v2098
        %2100 = vrot.lane.b32.xlu0 %v2099, 126
        %v2101 = vpop.permute.xlu0 %2100
        %v2103 = vadd.f32 %v1999, %v2101
        %s2104 = sld [smem:[#allocation2 + $0xb1]]
        %v2105 = vstv %s2104
        %v2106 = vmul.f32 %v2105, %v1737
        %v2107 = vmul.f32 %v2105, %v1738
        %v2110 = vrot.slane %v2106, 1
        %v2111 = vrot.slane %v2107, 1
        %v2112 = vsel %vm385, %v2110, %v2111
        %2113 = vrot.lane.b32.xlu0 %v2112, 126
        %v2114 = vpop.permute.xlu0 %2113
        %v2116 = vadd.f32 %v2012, %v2114
        %s2117 = sld [smem:[#allocation2 + $0xb2]]
        %v2118 = vstv %s2117
        %v2119 = vmul.f32 %v2118, %v1737
        %v2120 = vmul.f32 %v2118, %v1738
        %v2123 = vrot.slane %v2119, 1
        %v2124 = vrot.slane %v2120, 1
        %v2125 = vsel %vm385, %v2123, %v2124
        %2126 = vrot.lane.b32.xlu0 %v2125, 126
        %v2127 = vpop.permute.xlu0 %2126
        %v2129 = vadd.f32 %v2025, %v2127
        %s2130 = sld [smem:[#allocation2 + $0xb3]]
        %v2131 = vstv %s2130
        %v2132 = vmul.f32 %v2131, %v1737
        %v2133 = vmul.f32 %v2131, %v1738
        %v2136 = vrot.slane %v2132, 1
        %v2137 = vrot.slane %v2133, 1
        %v2138 = vsel %vm385, %v2136, %v2137
        %2139 = vrot.lane.b32.xlu0 %v2138, 126
        %v2140 = vpop.permute.xlu0 %2139
        %v2142 = vadd.f32 %v2038, %v2140
        %s2143 = sld [smem:[#allocation2 + $0xb4]]
        %v2144 = vstv %s2143
        %v2145 = vmul.f32 %v2144, %v1737
        %v2146 = vmul.f32 %v2144, %v1738
        %v2149 = vrot.slane %v2145, 1
        %v2150 = vrot.slane %v2146, 1
        %v2151 = vsel %vm385, %v2149, %v2150
        %2152 = vrot.lane.b32.xlu0 %v2151, 126
        %v2153 = vpop.permute.xlu0 %2152
        %v2155 = vadd.f32 %v2051, %v2153
        %s2156 = sld [smem:[#allocation2 + $0xb5]]
        %v2157 = vstv %s2156
        %v2158 = vmul.f32 %v2157, %v1737
        %v2159 = vmul.f32 %v2157, %v1738
        %v2162 = vrot.slane %v2158, 1
        %v2163 = vrot.slane %v2159, 1
        %v2164 = vsel %vm385, %v2162, %v2163
        %2165 = vrot.lane.b32.xlu0 %v2164, 126
        %v2166 = vpop.permute.xlu0 %2165
        %v2168 = vadd.f32 %v2064, %v2166
        %s2169 = sld [smem:[#allocation2 + $0xb6]]
        %v2170 = vstv %s2169
        %v2171 = vmul.f32 %v2170, %v1737
        %v2172 = vmul.f32 %v2170, %v1738
        %v2175 = vrot.slane %v2171, 1
        %v2176 = vrot.slane %v2172, 1
        %v2177 = vsel %vm385, %v2175, %v2176
        %2178 = vrot.lane.b32.xlu0 %v2177, 126
        %v2179 = vpop.permute.xlu0 %2178
        %v2181 = vadd.f32 %v2077, %v2179
        %s2182 = sld [smem:[#allocation2 + $0xb7]]
        %v2183 = vstv %s2182
        %v2184 = vmul.f32 %v2183, %v1737
        %v2185 = vmul.f32 %v2183, %v1738
        %v2188 = vrot.slane %v2184, 1
        %v2189 = vrot.slane %v2185, 1
        %v2190 = vsel %vm385, %v2188, %v2189
        %2191 = vrot.lane.b32.xlu0 %v2190, 126
        %v2192 = vpop.permute.xlu0 %2191
        %v2194 = vadd.f32 %v2090, %v2192
        %s2195 = sld [smem:[#allocation2 + $0xd0]]
        %v2196 = vstv %s2195
        %v2197 = vmul.f32 %v2196, %v1737
        %v2198 = vmul.f32 %v2196, %v1738
        %v2201 = vrot.slane %v2197, 2
        %v2202 = vrot.slane %v2198, 2
        %v2203 = vsel %vm682, %v2201, %v2202
        %v2205 = vadd.f32 %v2103, %v2203
        %s2206 = sld [smem:[#allocation2 + $0xd1]]
        %v2207 = vstv %s2206
        %v2208 = vmul.f32 %v2207, %v1737
        %v2209 = vmul.f32 %v2207, %v1738
        %v2212 = vrot.slane %v2208, 2
        %v2213 = vrot.slane %v2209, 2
        %v2214 = vsel %vm682, %v2212, %v2213
        %v2216 = vadd.f32 %v2116, %v2214
        %s2217 = sld [smem:[#allocation2 + $0xd2]]
        %v2218 = vstv %s2217
        %v2219 = vmul.f32 %v2218, %v1737
        %v2220 = vmul.f32 %v2218, %v1738
        %v2223 = vrot.slane %v2219, 2
        %v2224 = vrot.slane %v2220, 2
        %v2225 = vsel %vm682, %v2223, %v2224
        %v2227 = vadd.f32 %v2129, %v2225
        %s2228 = sld [smem:[#allocation2 + $0xd3]]
        %v2229 = vstv %s2228
        %v2230 = vmul.f32 %v2229, %v1737
        %v2231 = vmul.f32 %v2229, %v1738
        %v2234 = vrot.slane %v2230, 2
        %v2235 = vrot.slane %v2231, 2
        %v2236 = vsel %vm682, %v2234, %v2235
        %v2238 = vadd.f32 %v2142, %v2236
        %s2239 = sld [smem:[#allocation2 + $0xd4]]
        %v2240 = vstv %s2239
        %v2241 = vmul.f32 %v2240, %v1737
        %v2242 = vmul.f32 %v2240, %v1738
        %v2245 = vrot.slane %v2241, 2
        %v2246 = vrot.slane %v2242, 2
        %v2247 = vsel %vm682, %v2245, %v2246
        %v2249 = vadd.f32 %v2155, %v2247
        %s2250 = sld [smem:[#allocation2 + $0xd5]]
        %v2251 = vstv %s2250
        %v2252 = vmul.f32 %v2251, %v1737
        %v2253 = vmul.f32 %v2251, %v1738
        %v2256 = vrot.slane %v2252, 2
        %v2257 = vrot.slane %v2253, 2
        %v2258 = vsel %vm682, %v2256, %v2257
        %v2260 = vadd.f32 %v2168, %v2258
        %s2261 = sld [smem:[#allocation2 + $0xd6]]
        %v2262 = vstv %s2261
        %v2263 = vmul.f32 %v2262, %v1737
        %v2264 = vmul.f32 %v2262, %v1738
        %v2267 = vrot.slane %v2263, 2
        %v2268 = vrot.slane %v2264, 2
        %v2269 = vsel %vm682, %v2267, %v2268
        %v2271 = vadd.f32 %v2181, %v2269
        %s2272 = sld [smem:[#allocation2 + $0xd7]]
        %v2273 = vstv %s2272
        %v2274 = vmul.f32 %v2273, %v1737
        %v2275 = vmul.f32 %v2273, %v1738
        %v2278 = vrot.slane %v2274, 2
        %v2279 = vrot.slane %v2275, 2
        %v2280 = vsel %vm682, %v2278, %v2279
        %v2282 = vadd.f32 %v2194, %v2280
        %s2283 = sld [smem:[#allocation2 + $0xf0]]
        %v2284 = vstv %s2283
        %v2285 = vmul.f32 %v2284, %v1737
        %v2286 = vmul.f32 %v2284, %v1738
        %v2289 = vrot.slane %v2285, 2
        %v2290 = vrot.slane %v2286, 2
        %v2291 = vsel %vm682, %v2289, %v2290
        %2292 = vrot.lane.b32.xlu0 %v2291, 127
        %v2293 = vpop.permute.xlu0 %2292
        %v2295 = vadd.f32 %v2205, %v2293
        %s2296 = sld [smem:[#allocation2 + $0xf1]]
        %v2297 = vstv %s2296
        %v2298 = vmul.f32 %v2297, %v1737
        %v2299 = vmul.f32 %v2297, %v1738
        %v2302 = vrot.slane %v2298, 2
        %v2303 = vrot.slane %v2299, 2
        %v2304 = vsel %vm682, %v2302, %v2303
        %2305 = vrot.lane.b32.xlu0 %v2304, 127
        %v2306 = vpop.permute.xlu0 %2305
        %v2308 = vadd.f32 %v2216, %v2306
        %s2309 = sld [smem:[#allocation2 + $0xf2]]
        %v2310 = vstv %s2309
        %v2311 = vmul.f32 %v2310, %v1737
        %v2312 = vmul.f32 %v2310, %v1738
        %v2315 = vrot.slane %v2311, 2
        %v2316 = vrot.slane %v2312, 2
        %v2317 = vsel %vm682, %v2315, %v2316
        %2318 = vrot.lane.b32.xlu0 %v2317, 127
        %v2319 = vpop.permute.xlu0 %2318
        %v2321 = vadd.f32 %v2227, %v2319
        %s2322 = sld [smem:[#allocation2 + $0xf3]]
        %v2323 = vstv %s2322
        %v2324 = vmul.f32 %v2323, %v1737
        %v2325 = vmul.f32 %v2323, %v1738
        %v2328 = vrot.slane %v2324, 2
        %v2329 = vrot.slane %v2325, 2
        %v2330 = vsel %vm682, %v2328, %v2329
        %2331 = vrot.lane.b32.xlu0 %v2330, 127
        %v2332 = vpop.permute.xlu0 %2331
        %v2334 = vadd.f32 %v2238, %v2332
        %s2335 = sld [smem:[#allocation2 + $0xf4]]
        %v2336 = vstv %s2335
        %v2337 = vmul.f32 %v2336, %v1737
        %v2338 = vmul.f32 %v2336, %v1738
        %v2341 = vrot.slane %v2337, 2
        %v2342 = vrot.slane %v2338, 2
        %v2343 = vsel %vm682, %v2341, %v2342
        %2344 = vrot.lane.b32.xlu0 %v2343, 127
        %v2345 = vpop.permute.xlu0 %2344
        %v2347 = vadd.f32 %v2249, %v2345
        %s2348 = sld [smem:[#allocation2 + $0xf5]]
        %v2349 = vstv %s2348
        %v2350 = vmul.f32 %v2349, %v1737
        %v2351 = vmul.f32 %v2349, %v1738
        %v2354 = vrot.slane %v2350, 2
        %v2355 = vrot.slane %v2351, 2
        %v2356 = vsel %vm682, %v2354, %v2355
        %2357 = vrot.lane.b32.xlu0 %v2356, 127
        %v2358 = vpop.permute.xlu0 %2357
        %v2360 = vadd.f32 %v2260, %v2358
        %s2361 = sld [smem:[#allocation2 + $0xf6]]
        %v2362 = vstv %s2361
        %v2363 = vmul.f32 %v2362, %v1737
        %v2364 = vmul.f32 %v2362, %v1738
        %v2367 = vrot.slane %v2363, 2
        %v2368 = vrot.slane %v2364, 2
        %v2369 = vsel %vm682, %v2367, %v2368
        %2370 = vrot.lane.b32.xlu0 %v2369, 127
        %v2371 = vpop.permute.xlu0 %2370
        %v2373 = vadd.f32 %v2271, %v2371
        %s2374 = sld [smem:[#allocation2 + $0xf7]]
        %v2375 = vstv %s2374
        %v2376 = vmul.f32 %v2375, %v1737
        %v2377 = vmul.f32 %v2375, %v1738
        %v2380 = vrot.slane %v2376, 2
        %v2381 = vrot.slane %v2377, 2
        %v2382 = vsel %vm682, %v2380, %v2381
        %2383 = vrot.lane.b32.xlu0 %v2382, 127
        %v2384 = vpop.permute.xlu0 %2383
        %v2386 = vadd.f32 %v2282, %v2384
        %s2387 = sld [smem:[#allocation2 + $0x110]]
        %v2388 = vstv %s2387
        %v2389 = vmul.f32 %v2388, %v1737
        %v2390 = vmul.f32 %v2388, %v1738
        %v2393 = vrot.slane %v2389, 2
        %v2394 = vrot.slane %v2390, 2
        %v2395 = vsel %vm682, %v2393, %v2394
        %2396 = vrot.lane.b32.xlu0 %v2395, 126
        %v2397 = vpop.permute.xlu0 %2396
        %v2399 = vadd.f32 %v2295, %v2397
        %s2400 = sld [smem:[#allocation2 + $0x111]]
        %v2401 = vstv %s2400
        %v2402 = vmul.f32 %v2401, %v1737
        %v2403 = vmul.f32 %v2401, %v1738
        %v2406 = vrot.slane %v2402, 2
        %v2407 = vrot.slane %v2403, 2
        %v2408 = vsel %vm682, %v2406, %v2407
        %2409 = vrot.lane.b32.xlu0 %v2408, 126
        %v2410 = vpop.permute.xlu0 %2409
        %v2412 = vadd.f32 %v2308, %v2410
        %s2413 = sld [smem:[#allocation2 + $0x112]]
        %v2414 = vstv %s2413
        %v2415 = vmul.f32 %v2414, %v1737
        %v2416 = vmul.f32 %v2414, %v1738
        %v2419 = vrot.slane %v2415, 2
        %v2420 = vrot.slane %v2416, 2
        %v2421 = vsel %vm682, %v2419, %v2420
        %2422 = vrot.lane.b32.xlu0 %v2421, 126
        %v2423 = vpop.permute.xlu0 %2422
        %v2425 = vadd.f32 %v2321, %v2423
        %s2426 = sld [smem:[#allocation2 + $0x113]]
        %v2427 = vstv %s2426
        %v2428 = vmul.f32 %v2427, %v1737
        %v2429 = vmul.f32 %v2427, %v1738
        %v2432 = vrot.slane %v2428, 2
        %v2433 = vrot.slane %v2429, 2
        %v2434 = vsel %vm682, %v2432, %v2433
        %2435 = vrot.lane.b32.xlu0 %v2434, 126
        %v2436 = vpop.permute.xlu0 %2435
        %v2438 = vadd.f32 %v2334, %v2436
        %s2439 = sld [smem:[#allocation2 + $0x114]]
        %v2440 = vstv %s2439
        %v2441 = vmul.f32 %v2440, %v1737
        %v2442 = vmul.f32 %v2440, %v1738
        %v2445 = vrot.slane %v2441, 2
        %v2446 = vrot.slane %v2442, 2
        %v2447 = vsel %vm682, %v2445, %v2446
        %2448 = vrot.lane.b32.xlu0 %v2447, 126
        %v2449 = vpop.permute.xlu0 %2448
        %v2451 = vadd.f32 %v2347, %v2449
        %s2452 = sld [smem:[#allocation2 + $0x115]]
        %v2453 = vstv %s2452
        %v2454 = vmul.f32 %v2453, %v1737
        %v2455 = vmul.f32 %v2453, %v1738
        %v2458 = vrot.slane %v2454, 2
        %v2459 = vrot.slane %v2455, 2
        %v2460 = vsel %vm682, %v2458, %v2459
        %2461 = vrot.lane.b32.xlu0 %v2460, 126
        %v2462 = vpop.permute.xlu0 %2461
        %v2464 = vadd.f32 %v2360, %v2462
        %s2465 = sld [smem:[#allocation2 + $0x116]]
        %v2466 = vstv %s2465
        %v2467 = vmul.f32 %v2466, %v1737
        %v2468 = vmul.f32 %v2466, %v1738
        %v2471 = vrot.slane %v2467, 2
        %v2472 = vrot.slane %v2468, 2
        %v2473 = vsel %vm682, %v2471, %v2472
        %2474 = vrot.lane.b32.xlu0 %v2473, 126
        %v2475 = vpop.permute.xlu0 %2474
        %v2477 = vadd.f32 %v2373, %v2475
        %s2478 = sld [smem:[#allocation2 + $0x117]]
        %v2479 = vstv %s2478
        %v2480 = vmul.f32 %v2479, %v1737
        %v2481 = vmul.f32 %v2479, %v1738
        %v2484 = vrot.slane %v2480, 2
        %v2485 = vrot.slane %v2481, 2
        %v2486 = vsel %vm682, %v2484, %v2485
        %2487 = vrot.lane.b32.xlu0 %v2486, 126
        %v2488 = vpop.permute.xlu0 %2487
        %v2490 = vadd.f32 %v2386, %v2488
        %s2491 = sadd.s32 %s211, 9
        %s2492 = smul.addr %s2491, 4
        %s2493 = scalar_lea.vmem %s209, %s2492
        %v2494 = vld [vmem:[%s2493] sm:$0xf]
        %v2495 = vld [vmem:[%s2493 + $0x4] sm:$0x1]
        %v2496 = vunpack.c.l.bf16 %v2494
        %v2497 = vunpack.c.l.bf16 %v2495
        %s2498 = sld [smem:[#allocation2 + $0x18]]
        %v2499 = vstv %s2498
        %v2500 = vmul.f32 %v2499, %v2496
        %v2501 = vadd.f32 %v2399, %v2500
        %s2502 = sld [smem:[#allocation2 + $0x19]]
        %v2503 = vstv %s2502
        %v2504 = vmul.f32 %v2503, %v2496
        %v2505 = vadd.f32 %v2412, %v2504
        %s2506 = sld [smem:[#allocation2 + $0x1a]]
        %v2507 = vstv %s2506
        %v2508 = vmul.f32 %v2507, %v2496
        %v2509 = vadd.f32 %v2425, %v2508
        %s2510 = sld [smem:[#allocation2 + $0x1b]]
        %v2511 = vstv %s2510
        %v2512 = vmul.f32 %v2511, %v2496
        %v2513 = vadd.f32 %v2438, %v2512
        %s2514 = sld [smem:[#allocation2 + $0x1c]]
        %v2515 = vstv %s2514
        %v2516 = vmul.f32 %v2515, %v2496
        %v2517 = vadd.f32 %v2451, %v2516
        %s2518 = sld [smem:[#allocation2 + $0x1d]]
        %v2519 = vstv %s2518
        %v2520 = vmul.f32 %v2519, %v2496
        %v2521 = vadd.f32 %v2464, %v2520
        %s2522 = sld [smem:[#allocation2 + $0x1e]]
        %v2523 = vstv %s2522
        %v2524 = vmul.f32 %v2523, %v2496
        %v2525 = vadd.f32 %v2477, %v2524
        %s2526 = sld [smem:[#allocation2 + $0x1f]]
        %v2527 = vstv %s2526
        %v2528 = vmul.f32 %v2527, %v2496
        %v2529 = vadd.f32 %v2490, %v2528
        %s2530 = sld [smem:[#allocation2 + $0x38]]
        %v2531 = vstv %s2530
        %v2532 = vmul.f32 %v2531, %v2496
        %2534 = vrot.lane.b32.xlu0 %v2532, 127
        %v2535 = vpop.permute.xlu0 %2534
        %v2537 = vadd.f32 %v2501, %v2535
        %s2538 = sld [smem:[#allocation2 + $0x39]]
        %v2539 = vstv %s2538
        %v2540 = vmul.f32 %v2539, %v2496
        %2542 = vrot.lane.b32.xlu0 %v2540, 127
        %v2543 = vpop.permute.xlu0 %2542
        %v2545 = vadd.f32 %v2505, %v2543
        %s2546 = sld [smem:[#allocation2 + $0x3a]]
        %v2547 = vstv %s2546
        %v2548 = vmul.f32 %v2547, %v2496
        %2550 = vrot.lane.b32.xlu0 %v2548, 127
        %v2551 = vpop.permute.xlu0 %2550
        %v2553 = vadd.f32 %v2509, %v2551
        %s2554 = sld [smem:[#allocation2 + $0x3b]]
        %v2555 = vstv %s2554
        %v2556 = vmul.f32 %v2555, %v2496
        %2558 = vrot.lane.b32.xlu0 %v2556, 127
        %v2559 = vpop.permute.xlu0 %2558
        %v2561 = vadd.f32 %v2513, %v2559
        %s2562 = sld [smem:[#allocation2 + $0x3c]]
        %v2563 = vstv %s2562
        %v2564 = vmul.f32 %v2563, %v2496
        %2566 = vrot.lane.b32.xlu0 %v2564, 127
        %v2567 = vpop.permute.xlu0 %2566
        %v2569 = vadd.f32 %v2517, %v2567
        %s2570 = sld [smem:[#allocation2 + $0x3d]]
        %v2571 = vstv %s2570
        %v2572 = vmul.f32 %v2571, %v2496
        %2574 = vrot.lane.b32.xlu0 %v2572, 127
        %v2575 = vpop.permute.xlu0 %2574
        %v2577 = vadd.f32 %v2521, %v2575
        %s2578 = sld [smem:[#allocation2 + $0x3e]]
        %v2579 = vstv %s2578
        %v2580 = vmul.f32 %v2579, %v2496
        %2582 = vrot.lane.b32.xlu0 %v2580, 127
        %v2583 = vpop.permute.xlu0 %2582
        %v2585 = vadd.f32 %v2525, %v2583
        %s2586 = sld [smem:[#allocation2 + $0x3f]]
        %v2587 = vstv %s2586
        %v2588 = vmul.f32 %v2587, %v2496
        %2590 = vrot.lane.b32.xlu0 %v2588, 127
        %v2591 = vpop.permute.xlu0 %2590
        %v2593 = vadd.f32 %v2529, %v2591
        %s2594 = sld [smem:[#allocation2 + $0x58]]
        %v2595 = vstv %s2594
        %v2596 = vmul.f32 %v2595, %v2496
        %2598 = vrot.lane.b32.xlu0 %v2596, 126
        %v2599 = vpop.permute.xlu0 %2598
        %v2601 = vadd.f32 %v2537, %v2599
        %s2602 = sld [smem:[#allocation2 + $0x59]]
        %v2603 = vstv %s2602
        %v2604 = vmul.f32 %v2603, %v2496
        %2606 = vrot.lane.b32.xlu0 %v2604, 126
        %v2607 = vpop.permute.xlu0 %2606
        %v2609 = vadd.f32 %v2545, %v2607
        %s2610 = sld [smem:[#allocation2 + $0x5a]]
        %v2611 = vstv %s2610
        %v2612 = vmul.f32 %v2611, %v2496
        %2614 = vrot.lane.b32.xlu0 %v2612, 126
        %v2615 = vpop.permute.xlu0 %2614
        %v2617 = vadd.f32 %v2553, %v2615
        %s2618 = sld [smem:[#allocation2 + $0x5b]]
        %v2619 = vstv %s2618
        %v2620 = vmul.f32 %v2619, %v2496
        %2622 = vrot.lane.b32.xlu0 %v2620, 126
        %v2623 = vpop.permute.xlu0 %2622
        %v2625 = vadd.f32 %v2561, %v2623
        %s2626 = sld [smem:[#allocation2 + $0x5c]]
        %v2627 = vstv %s2626
        %v2628 = vmul.f32 %v2627, %v2496
        %2630 = vrot.lane.b32.xlu0 %v2628, 126
        %v2631 = vpop.permute.xlu0 %2630
        %v2633 = vadd.f32 %v2569, %v2631
        %s2634 = sld [smem:[#allocation2 + $0x5d]]
        %v2635 = vstv %s2634
        %v2636 = vmul.f32 %v2635, %v2496
        %2638 = vrot.lane.b32.xlu0 %v2636, 126
        %v2639 = vpop.permute.xlu0 %2638
        %v2641 = vadd.f32 %v2577, %v2639
        %s2642 = sld [smem:[#allocation2 + $0x5e]]
        %v2643 = vstv %s2642
        %v2644 = vmul.f32 %v2643, %v2496
        %2646 = vrot.lane.b32.xlu0 %v2644, 126
        %v2647 = vpop.permute.xlu0 %2646
        %v2649 = vadd.f32 %v2585, %v2647
        %s2650 = sld [smem:[#allocation2 + $0x5f]]
        %v2651 = vstv %s2650
        %v2652 = vmul.f32 %v2651, %v2496
        %2654 = vrot.lane.b32.xlu0 %v2652, 126
        %v2655 = vpop.permute.xlu0 %2654
        %v2657 = vadd.f32 %v2593, %v2655
        %s2658 = sld [smem:[#allocation2 + $0x78]]
        %v2659 = vstv %s2658
        %v2660 = vmul.f32 %v2659, %v2496
        %v2661 = vmul.f32 %v2659, %v2497
        %v2664 = vrot.slane %v2660, 1
        %v2665 = vrot.slane %v2661, 1
        %v2666 = vsel %vm385, %v2664, %v2665
        %v2668 = vadd.f32 %v2601, %v2666
        %s2669 = sld [smem:[#allocation2 + $0x79]]
        %v2670 = vstv %s2669
        %v2671 = vmul.f32 %v2670, %v2496
        %v2672 = vmul.f32 %v2670, %v2497
        %v2675 = vrot.slane %v2671, 1
        %v2676 = vrot.slane %v2672, 1
        %v2677 = vsel %vm385, %v2675, %v2676
        %v2679 = vadd.f32 %v2609, %v2677
        %s2680 = sld [smem:[#allocation2 + $0x7a]]
        %v2681 = vstv %s2680
        %v2682 = vmul.f32 %v2681, %v2496
        %v2683 = vmul.f32 %v2681, %v2497
        %v2686 = vrot.slane %v2682, 1
        %v2687 = vrot.slane %v2683, 1
        %v2688 = vsel %vm385, %v2686, %v2687
        %v2690 = vadd.f32 %v2617, %v2688
        %s2691 = sld [smem:[#allocation2 + $0x7b]]
        %v2692 = vstv %s2691
        %v2693 = vmul.f32 %v2692, %v2496
        %v2694 = vmul.f32 %v2692, %v2497
        %v2697 = vrot.slane %v2693, 1
        %v2698 = vrot.slane %v2694, 1
        %v2699 = vsel %vm385, %v2697, %v2698
        %v2701 = vadd.f32 %v2625, %v2699
        %s2702 = sld [smem:[#allocation2 + $0x7c]]
        %v2703 = vstv %s2702
        %v2704 = vmul.f32 %v2703, %v2496
        %v2705 = vmul.f32 %v2703, %v2497
        %v2708 = vrot.slane %v2704, 1
        %v2709 = vrot.slane %v2705, 1
        %v2710 = vsel %vm385, %v2708, %v2709
        %v2712 = vadd.f32 %v2633, %v2710
        %s2713 = sld [smem:[#allocation2 + $0x7d]]
        %v2714 = vstv %s2713
        %v2715 = vmul.f32 %v2714, %v2496
        %v2716 = vmul.f32 %v2714, %v2497
        %v2719 = vrot.slane %v2715, 1
        %v2720 = vrot.slane %v2716, 1
        %v2721 = vsel %vm385, %v2719, %v2720
        %v2723 = vadd.f32 %v2641, %v2721
        %s2724 = sld [smem:[#allocation2 + $0x7e]]
        %v2725 = vstv %s2724
        %v2726 = vmul.f32 %v2725, %v2496
        %v2727 = vmul.f32 %v2725, %v2497
        %v2730 = vrot.slane %v2726, 1
        %v2731 = vrot.slane %v2727, 1
        %v2732 = vsel %vm385, %v2730, %v2731
        %v2734 = vadd.f32 %v2649, %v2732
        %s2735 = sld [smem:[#allocation2 + $0x7f]]
        %v2736 = vstv %s2735
        %v2737 = vmul.f32 %v2736, %v2496
        %v2738 = vmul.f32 %v2736, %v2497
        %v2741 = vrot.slane %v2737, 1
        %v2742 = vrot.slane %v2738, 1
        %v2743 = vsel %vm385, %v2741, %v2742
        %v2745 = vadd.f32 %v2657, %v2743
        %s2746 = sld [smem:[#allocation2 + $0x98]]
        %v2747 = vstv %s2746
        %v2748 = vmul.f32 %v2747, %v2496
        %v2749 = vmul.f32 %v2747, %v2497
        %v2752 = vrot.slane %v2748, 1
        %v2753 = vrot.slane %v2749, 1
        %v2754 = vsel %vm385, %v2752, %v2753
        %2755 = vrot.lane.b32.xlu0 %v2754, 127
        %v2756 = vpop.permute.xlu0 %2755
        %v2758 = vadd.f32 %v2668, %v2756
        %s2759 = sld [smem:[#allocation2 + $0x99]]
        %v2760 = vstv %s2759
        %v2761 = vmul.f32 %v2760, %v2496
        %v2762 = vmul.f32 %v2760, %v2497
        %v2765 = vrot.slane %v2761, 1
        %v2766 = vrot.slane %v2762, 1
        %v2767 = vsel %vm385, %v2765, %v2766
        %2768 = vrot.lane.b32.xlu0 %v2767, 127
        %v2769 = vpop.permute.xlu0 %2768
        %v2771 = vadd.f32 %v2679, %v2769
        %s2772 = sld [smem:[#allocation2 + $0x9a]]
        %v2773 = vstv %s2772
        %v2774 = vmul.f32 %v2773, %v2496
        %v2775 = vmul.f32 %v2773, %v2497
        %v2778 = vrot.slane %v2774, 1
        %v2779 = vrot.slane %v2775, 1
        %v2780 = vsel %vm385, %v2778, %v2779
        %2781 = vrot.lane.b32.xlu0 %v2780, 127
        %v2782 = vpop.permute.xlu0 %2781
        %v2784 = vadd.f32 %v2690, %v2782
        %s2785 = sld [smem:[#allocation2 + $0x9b]]
        %v2786 = vstv %s2785
        %v2787 = vmul.f32 %v2786, %v2496
        %v2788 = vmul.f32 %v2786, %v2497
        %v2791 = vrot.slane %v2787, 1
        %v2792 = vrot.slane %v2788, 1
        %v2793 = vsel %vm385, %v2791, %v2792
        %2794 = vrot.lane.b32.xlu0 %v2793, 127
        %v2795 = vpop.permute.xlu0 %2794
        %v2797 = vadd.f32 %v2701, %v2795
        %s2798 = sld [smem:[#allocation2 + $0x9c]]
        %v2799 = vstv %s2798
        %v2800 = vmul.f32 %v2799, %v2496
        %v2801 = vmul.f32 %v2799, %v2497
        %v2804 = vrot.slane %v2800, 1
        %v2805 = vrot.slane %v2801, 1
        %v2806 = vsel %vm385, %v2804, %v2805
        %2807 = vrot.lane.b32.xlu0 %v2806, 127
        %v2808 = vpop.permute.xlu0 %2807
        %v2810 = vadd.f32 %v2712, %v2808
        %s2811 = sld [smem:[#allocation2 + $0x9d]]
        %v2812 = vstv %s2811
        %v2813 = vmul.f32 %v2812, %v2496
        %v2814 = vmul.f32 %v2812, %v2497
        %v2817 = vrot.slane %v2813, 1
        %v2818 = vrot.slane %v2814, 1
        %v2819 = vsel %vm385, %v2817, %v2818
        %2820 = vrot.lane.b32.xlu0 %v2819, 127
        %v2821 = vpop.permute.xlu0 %2820
        %v2823 = vadd.f32 %v2723, %v2821
        %s2824 = sld [smem:[#allocation2 + $0x9e]]
        %v2825 = vstv %s2824
        %v2826 = vmul.f32 %v2825, %v2496
        %v2827 = vmul.f32 %v2825, %v2497
        %v2830 = vrot.slane %v2826, 1
        %v2831 = vrot.slane %v2827, 1
        %v2832 = vsel %vm385, %v2830, %v2831
        %2833 = vrot.lane.b32.xlu0 %v2832, 127
        %v2834 = vpop.permute.xlu0 %2833
        %v2836 = vadd.f32 %v2734, %v2834
        %s2837 = sld [smem:[#allocation2 + $0x9f]]
        %v2838 = vstv %s2837
        %v2839 = vmul.f32 %v2838, %v2496
        %v2840 = vmul.f32 %v2838, %v2497
        %v2843 = vrot.slane %v2839, 1
        %v2844 = vrot.slane %v2840, 1
        %v2845 = vsel %vm385, %v2843, %v2844
        %2846 = vrot.lane.b32.xlu0 %v2845, 127
        %v2847 = vpop.permute.xlu0 %2846
        %v2849 = vadd.f32 %v2745, %v2847
        %s2850 = sld [smem:[#allocation2 + $0xb8]]
        %v2851 = vstv %s2850
        %v2852 = vmul.f32 %v2851, %v2496
        %v2853 = vmul.f32 %v2851, %v2497
        %v2856 = vrot.slane %v2852, 1
        %v2857 = vrot.slane %v2853, 1
        %v2858 = vsel %vm385, %v2856, %v2857
        %2859 = vrot.lane.b32.xlu0 %v2858, 126
        %v2860 = vpop.permute.xlu0 %2859
        %v2862 = vadd.f32 %v2758, %v2860
        %s2863 = sld [smem:[#allocation2 + $0xb9]]
        %v2864 = vstv %s2863
        %v2865 = vmul.f32 %v2864, %v2496
        %v2866 = vmul.f32 %v2864, %v2497
        %v2869 = vrot.slane %v2865, 1
        %v2870 = vrot.slane %v2866, 1
        %v2871 = vsel %vm385, %v2869, %v2870
        %2872 = vrot.lane.b32.xlu0 %v2871, 126
        %v2873 = vpop.permute.xlu0 %2872
        %v2875 = vadd.f32 %v2771, %v2873
        %s2876 = sld [smem:[#allocation2 + $0xba]]
        %v2877 = vstv %s2876
        %v2878 = vmul.f32 %v2877, %v2496
        %v2879 = vmul.f32 %v2877, %v2497
        %v2882 = vrot.slane %v2878, 1
        %v2883 = vrot.slane %v2879, 1
        %v2884 = vsel %vm385, %v2882, %v2883
        %2885 = vrot.lane.b32.xlu0 %v2884, 126
        %v2886 = vpop.permute.xlu0 %2885
        %v2888 = vadd.f32 %v2784, %v2886
        %s2889 = sld [smem:[#allocation2 + $0xbb]]
        %v2890 = vstv %s2889
        %v2891 = vmul.f32 %v2890, %v2496
        %v2892 = vmul.f32 %v2890, %v2497
        %v2895 = vrot.slane %v2891, 1
        %v2896 = vrot.slane %v2892, 1
        %v2897 = vsel %vm385, %v2895, %v2896
        %2898 = vrot.lane.b32.xlu0 %v2897, 126
        %v2899 = vpop.permute.xlu0 %2898
        %v2901 = vadd.f32 %v2797, %v2899
        %s2902 = sld [smem:[#allocation2 + $0xbc]]
        %v2903 = vstv %s2902
        %v2904 = vmul.f32 %v2903, %v2496
        %v2905 = vmul.f32 %v2903, %v2497
        %v2908 = vrot.slane %v2904, 1
        %v2909 = vrot.slane %v2905, 1
        %v2910 = vsel %vm385, %v2908, %v2909
        %2911 = vrot.lane.b32.xlu0 %v2910, 126
        %v2912 = vpop.permute.xlu0 %2911
        %v2914 = vadd.f32 %v2810, %v2912
        %s2915 = sld [smem:[#allocation2 + $0xbd]]
        %v2916 = vstv %s2915
        %v2917 = vmul.f32 %v2916, %v2496
        %v2918 = vmul.f32 %v2916, %v2497
        %v2921 = vrot.slane %v2917, 1
        %v2922 = vrot.slane %v2918, 1
        %v2923 = vsel %vm385, %v2921, %v2922
        %2924 = vrot.lane.b32.xlu0 %v2923, 126
        %v2925 = vpop.permute.xlu0 %2924
        %v2927 = vadd.f32 %v2823, %v2925
        %s2928 = sld [smem:[#allocation2 + $0xbe]]
        %v2929 = vstv %s2928
        %v2930 = vmul.f32 %v2929, %v2496
        %v2931 = vmul.f32 %v2929, %v2497
        %v2934 = vrot.slane %v2930, 1
        %v2935 = vrot.slane %v2931, 1
        %v2936 = vsel %vm385, %v2934, %v2935
        %2937 = vrot.lane.b32.xlu0 %v2936, 126
        %v2938 = vpop.permute.xlu0 %2937
        %v2940 = vadd.f32 %v2836, %v2938
        %s2941 = sld [smem:[#allocation2 + $0xbf]]
        %v2942 = vstv %s2941
        %v2943 = vmul.f32 %v2942, %v2496
        %v2944 = vmul.f32 %v2942, %v2497
        %v2947 = vrot.slane %v2943, 1
        %v2948 = vrot.slane %v2944, 1
        %v2949 = vsel %vm385, %v2947, %v2948
        %2950 = vrot.lane.b32.xlu0 %v2949, 126
        %v2951 = vpop.permute.xlu0 %2950
        %v2953 = vadd.f32 %v2849, %v2951
        %s2954 = sld [smem:[#allocation2 + $0xd8]]
        %v2955 = vstv %s2954
        %v2956 = vmul.f32 %v2955, %v2496
        %v2957 = vmul.f32 %v2955, %v2497
        %v2960 = vrot.slane %v2956, 2
        %v2961 = vrot.slane %v2957, 2
        %v2962 = vsel %vm682, %v2960, %v2961
        %v2964 = vadd.f32 %v2862, %v2962
        %s2965 = sld [smem:[#allocation2 + $0xd9]]
        %v2966 = vstv %s2965
        %v2967 = vmul.f32 %v2966, %v2496
        %v2968 = vmul.f32 %v2966, %v2497
        %v2971 = vrot.slane %v2967, 2
        %v2972 = vrot.slane %v2968, 2
        %v2973 = vsel %vm682, %v2971, %v2972
        %v2975 = vadd.f32 %v2875, %v2973
        %s2976 = sld [smem:[#allocation2 + $0xda]]
        %v2977 = vstv %s2976
        %v2978 = vmul.f32 %v2977, %v2496
        %v2979 = vmul.f32 %v2977, %v2497
        %v2982 = vrot.slane %v2978, 2
        %v2983 = vrot.slane %v2979, 2
        %v2984 = vsel %vm682, %v2982, %v2983
        %v2986 = vadd.f32 %v2888, %v2984
        %s2987 = sld [smem:[#allocation2 + $0xdb]]
        %v2988 = vstv %s2987
        %v2989 = vmul.f32 %v2988, %v2496
        %v2990 = vmul.f32 %v2988, %v2497
        %v2993 = vrot.slane %v2989, 2
        %v2994 = vrot.slane %v2990, 2
        %v2995 = vsel %vm682, %v2993, %v2994
        %v2997 = vadd.f32 %v2901, %v2995
        %s2998 = sld [smem:[#allocation2 + $0xdc]]
        %v2999 = vstv %s2998
        %v3000 = vmul.f32 %v2999, %v2496
        %v3001 = vmul.f32 %v2999, %v2497
        %v3004 = vrot.slane %v3000, 2
        %v3005 = vrot.slane %v3001, 2
        %v3006 = vsel %vm682, %v3004, %v3005
        %v3008 = vadd.f32 %v2914, %v3006
        %s3009 = sld [smem:[#allocation2 + $0xdd]]
        %v3010 = vstv %s3009
        %v3011 = vmul.f32 %v3010, %v2496
        %v3012 = vmul.f32 %v3010, %v2497
        %v3015 = vrot.slane %v3011, 2
        %v3016 = vrot.slane %v3012, 2
        %v3017 = vsel %vm682, %v3015, %v3016
        %v3019 = vadd.f32 %v2927, %v3017
        %s3020 = sld [smem:[#allocation2 + $0xde]]
        %v3021 = vstv %s3020
        %v3022 = vmul.f32 %v3021, %v2496
        %v3023 = vmul.f32 %v3021, %v2497
        %v3026 = vrot.slane %v3022, 2
        %v3027 = vrot.slane %v3023, 2
        %v3028 = vsel %vm682, %v3026, %v3027
        %v3030 = vadd.f32 %v2940, %v3028
        %s3031 = sld [smem:[#allocation2 + $0xdf]]
        %v3032 = vstv %s3031
        %v3033 = vmul.f32 %v3032, %v2496
        %v3034 = vmul.f32 %v3032, %v2497
        %v3037 = vrot.slane %v3033, 2
        %v3038 = vrot.slane %v3034, 2
        %v3039 = vsel %vm682, %v3037, %v3038
        %v3041 = vadd.f32 %v2953, %v3039
        %s3042 = sld [smem:[#allocation2 + $0xf8]]
        %v3043 = vstv %s3042
        %v3044 = vmul.f32 %v3043, %v2496
        %v3045 = vmul.f32 %v3043, %v2497
        %v3048 = vrot.slane %v3044, 2
        %v3049 = vrot.slane %v3045, 2
        %v3050 = vsel %vm682, %v3048, %v3049
        %3051 = vrot.lane.b32.xlu0 %v3050, 127
        %v3052 = vpop.permute.xlu0 %3051
        %v3054 = vadd.f32 %v2964, %v3052
        %s3055 = sld [smem:[#allocation2 + $0xf9]]
        %v3056 = vstv %s3055
        %v3057 = vmul.f32 %v3056, %v2496
        %v3058 = vmul.f32 %v3056, %v2497
        %v3061 = vrot.slane %v3057, 2
        %v3062 = vrot.slane %v3058, 2
        %v3063 = vsel %vm682, %v3061, %v3062
        %3064 = vrot.lane.b32.xlu0 %v3063, 127
        %v3065 = vpop.permute.xlu0 %3064
        %v3067 = vadd.f32 %v2975, %v3065
        %s3068 = sld [smem:[#allocation2 + $0xfa]]
        %v3069 = vstv %s3068
        %v3070 = vmul.f32 %v3069, %v2496
        %v3071 = vmul.f32 %v3069, %v2497
        %v3074 = vrot.slane %v3070, 2
        %v3075 = vrot.slane %v3071, 2
        %v3076 = vsel %vm682, %v3074, %v3075
        %3077 = vrot.lane.b32.xlu0 %v3076, 127
        %v3078 = vpop.permute.xlu0 %3077
        %v3080 = vadd.f32 %v2986, %v3078
        %s3081 = sld [smem:[#allocation2 + $0xfb]]
        %v3082 = vstv %s3081
        %v3083 = vmul.f32 %v3082, %v2496
        %v3084 = vmul.f32 %v3082, %v2497
        %v3087 = vrot.slane %v3083, 2
        %v3088 = vrot.slane %v3084, 2
        %v3089 = vsel %vm682, %v3087, %v3088
        %3090 = vrot.lane.b32.xlu0 %v3089, 127
        %v3091 = vpop.permute.xlu0 %3090
        %v3093 = vadd.f32 %v2997, %v3091
        %s3094 = sld [smem:[#allocation2 + $0xfc]]
        %v3095 = vstv %s3094
        %v3096 = vmul.f32 %v3095, %v2496
        %v3097 = vmul.f32 %v3095, %v2497
        %v3100 = vrot.slane %v3096, 2
        %v3101 = vrot.slane %v3097, 2
        %v3102 = vsel %vm682, %v3100, %v3101
        %3103 = vrot.lane.b32.xlu0 %v3102, 127
        %v3104 = vpop.permute.xlu0 %3103
        %v3106 = vadd.f32 %v3008, %v3104
        %s3107 = sld [smem:[#allocation2 + $0xfd]]
        %v3108 = vstv %s3107
        %v3109 = vmul.f32 %v3108, %v2496
        %v3110 = vmul.f32 %v3108, %v2497
        %v3113 = vrot.slane %v3109, 2
        %v3114 = vrot.slane %v3110, 2
        %v3115 = vsel %vm682, %v3113, %v3114
        %3116 = vrot.lane.b32.xlu0 %v3115, 127
        %v3117 = vpop.permute.xlu0 %3116
        %v3119 = vadd.f32 %v3019, %v3117
        %s3120 = sld [smem:[#allocation2 + $0xfe]]
        %v3121 = vstv %s3120
        %v3122 = vmul.f32 %v3121, %v2496
        %v3123 = vmul.f32 %v3121, %v2497
        %v3126 = vrot.slane %v3122, 2
        %v3127 = vrot.slane %v3123, 2
        %v3128 = vsel %vm682, %v3126, %v3127
        %3129 = vrot.lane.b32.xlu0 %v3128, 127
        %v3130 = vpop.permute.xlu0 %3129
        %v3132 = vadd.f32 %v3030, %v3130
        %s3133 = sld [smem:[#allocation2 + $0xff]]
        %v3134 = vstv %s3133
        %v3135 = vmul.f32 %v3134, %v2496
        %v3136 = vmul.f32 %v3134, %v2497
        %v3139 = vrot.slane %v3135, 2
        %v3140 = vrot.slane %v3136, 2
        %v3141 = vsel %vm682, %v3139, %v3140
        %3142 = vrot.lane.b32.xlu0 %v3141, 127
        %v3143 = vpop.permute.xlu0 %3142
        %v3145 = vadd.f32 %v3041, %v3143
        %s3146 = sld [smem:[#allocation2 + $0x118]]
        %v3147 = vstv %s3146
        %v3148 = vmul.f32 %v3147, %v2496
        %v3149 = vmul.f32 %v3147, %v2497
        %v3152 = vrot.slane %v3148, 2
        %v3153 = vrot.slane %v3149, 2
        %v3154 = vsel %vm682, %v3152, %v3153
        %3155 = vrot.lane.b32.xlu0 %v3154, 126
        %v3156 = vpop.permute.xlu0 %3155
        %v3158 = vadd.f32 %v3054, %v3156
        %s3159 = sld [smem:[#allocation2 + $0x119]]
        %v3160 = vstv %s3159
        %v3161 = vmul.f32 %v3160, %v2496
        %v3162 = vmul.f32 %v3160, %v2497
        %v3165 = vrot.slane %v3161, 2
        %v3166 = vrot.slane %v3162, 2
        %v3167 = vsel %vm682, %v3165, %v3166
        %3168 = vrot.lane.b32.xlu0 %v3167, 126
        %v3169 = vpop.permute.xlu0 %3168
        %v3171 = vadd.f32 %v3067, %v3169
        %s3172 = sld [smem:[#allocation2 + $0x11a]]
        %v3173 = vstv %s3172
        %v3174 = vmul.f32 %v3173, %v2496
        %v3175 = vmul.f32 %v3173, %v2497
        %v3178 = vrot.slane %v3174, 2
        %v3179 = vrot.slane %v3175, 2
        %v3180 = vsel %vm682, %v3178, %v3179
        %3181 = vrot.lane.b32.xlu0 %v3180, 126
        %v3182 = vpop.permute.xlu0 %3181
        %v3184 = vadd.f32 %v3080, %v3182
        %s3185 = sld [smem:[#allocation2 + $0x11b]]
        %v3186 = vstv %s3185
        %v3187 = vmul.f32 %v3186, %v2496
        %v3188 = vmul.f32 %v3186, %v2497
        %v3191 = vrot.slane %v3187, 2
        %v3192 = vrot.slane %v3188, 2
        %v3193 = vsel %vm682, %v3191, %v3192
        %3194 = vrot.lane.b32.xlu0 %v3193, 126
        %v3195 = vpop.permute.xlu0 %3194
        %v3197 = vadd.f32 %v3093, %v3195
        %s3198 = sld [smem:[#allocation2 + $0x11c]]
        %v3199 = vstv %s3198
        %v3200 = vmul.f32 %v3199, %v2496
        %v3201 = vmul.f32 %v3199, %v2497
        %v3204 = vrot.slane %v3200, 2
        %v3205 = vrot.slane %v3201, 2
        %v3206 = vsel %vm682, %v3204, %v3205
        %3207 = vrot.lane.b32.xlu0 %v3206, 126
        %v3208 = vpop.permute.xlu0 %3207
        %v3210 = vadd.f32 %v3106, %v3208
        %s3211 = sld [smem:[#allocation2 + $0x11d]]
        %v3212 = vstv %s3211
        %v3213 = vmul.f32 %v3212, %v2496
        %v3214 = vmul.f32 %v3212, %v2497
        %v3217 = vrot.slane %v3213, 2
        %v3218 = vrot.slane %v3214, 2
        %v3219 = vsel %vm682, %v3217, %v3218
        %3220 = vrot.lane.b32.xlu0 %v3219, 126
        %v3221 = vpop.permute.xlu0 %3220
        %v3223 = vadd.f32 %v3119, %v3221
        %s3224 = sld [smem:[#allocation2 + $0x11e]]
        %v3225 = vstv %s3224
        %v3226 = vmul.f32 %v3225, %v2496
        %v3227 = vmul.f32 %v3225, %v2497
        %v3230 = vrot.slane %v3226, 2
        %v3231 = vrot.slane %v3227, 2
        %v3232 = vsel %vm682, %v3230, %v3231
        %3233 = vrot.lane.b32.xlu0 %v3232, 126
        %v3234 = vpop.permute.xlu0 %3233
        %v3236 = vadd.f32 %v3132, %v3234
        %s3237 = sld [smem:[#allocation2 + $0x11f]]
        %v3238 = vstv %s3237
        %v3239 = vmul.f32 %v3238, %v2496
        %v3240 = vmul.f32 %v3238, %v2497
        %v3243 = vrot.slane %v3239, 2
        %v3244 = vrot.slane %v3240, 2
        %v3245 = vsel %vm682, %v3243, %v3244
        %3246 = vrot.lane.b32.xlu0 %v3245, 126
        %v3247 = vpop.permute.xlu0 %3246
        %v3249 = vadd.f32 %v3145, %v3247
        %s3250 = sld [smem:[#allocation5]]
        %v3251 = vstv %s3250
        %v3252 = vadd.f32 %v3158, %v3251
        %v3253 = vmul.f32 %v3252, 0.5
        %v3254 = vmul.f32 %v3252, 0.70710677
        %v3255 = verf.f32.pop %v3254
        %v3256 = vadd.f32 %v3255, 1.0
        %v3257 = vmul.f32 %v3253, %v3256
        %vm3258 = vcmask 130048
        %3259 = vst.msk [vmem:[%s204] sm:$0xff] %vm3258, %v3257
        %s3260 = sld [smem:[#allocation5 + $0x1]]
        %v3261 = vstv %s3260
        %v3262 = vadd.f32 %v3171, %v3261
        %v3263 = vmul.f32 %v3262, 0.5
        %v3264 = vmul.f32 %v3262, 0.70710677
        %v3265 = verf.f32.pop %v3264
        %v3266 = vadd.f32 %v3265, 1.0
        %v3267 = vmul.f32 %v3263, %v3266
        %s3268 = scalar_lea.vmem %s204, 8 [#allocation7]
        %3269 = vst.msk [vmem:[%s3268] sm:$0xff] %vm3258, %v3267
        %s3270 = sld [smem:[#allocation5 + $0x2]]
        %v3271 = vstv %s3270
        %v3272 = vadd.f32 %v3184, %v3271
        %v3273 = vmul.f32 %v3272, 0.5
        %v3274 = vmul.f32 %v3272, 0.70710677
        %v3275 = verf.f32.pop %v3274
        %v3276 = vadd.f32 %v3275, 1.0
        %v3277 = vmul.f32 %v3273, %v3276
        %s3278 = scalar_lea.vmem %s204, 16 [#allocation7]
        %3279 = vst.msk [vmem:[%s3278] sm:$0xff] %vm3258, %v3277
        %s3280 = sld [smem:[#allocation5 + $0x3]]
        %v3281 = vstv %s3280
        %v3282 = vadd.f32 %v3197, %v3281
        %v3283 = vmul.f32 %v3282, 0.5
        %v3284 = vmul.f32 %v3282, 0.70710677
        %v3285 = verf.f32.pop %v3284
        %v3286 = vadd.f32 %v3285, 1.0
        %v3287 = vmul.f32 %v3283, %v3286
        %s3288 = scalar_lea.vmem %s204, 24 [#allocation7]
        %3289 = vst.msk [vmem:[%s3288] sm:$0xff] %vm3258, %v3287
        %s3290 = sld [smem:[#allocation5 + $0x4]]
        %v3291 = vstv %s3290
        %v3292 = vadd.f32 %v3210, %v3291
        %v3293 = vmul.f32 %v3292, 0.5
        %v3294 = vmul.f32 %v3292, 0.70710677
        %v3295 = verf.f32.pop %v3294
        %v3296 = vadd.f32 %v3295, 1.0
        %v3297 = vmul.f32 %v3293, %v3296
        %s3298 = scalar_lea.vmem %s204, 32 [#allocation7]
        %3299 = vst.msk [vmem:[%s3298] sm:$0xff] %vm3258, %v3297
        %s3300 = sld [smem:[#allocation5 + $0x5]]
        %v3301 = vstv %s3300
        %v3302 = vadd.f32 %v3223, %v3301
        %v3303 = vmul.f32 %v3302, 0.5
        %v3304 = vmul.f32 %v3302, 0.70710677
        %v3305 = verf.f32.pop %v3304
        %v3306 = vadd.f32 %v3305, 1.0
        %v3307 = vmul.f32 %v3303, %v3306
        %s3308 = scalar_lea.vmem %s204, 40 [#allocation7]
        %3309 = vst.msk [vmem:[%s3308] sm:$0xff] %vm3258, %v3307
        %s3310 = sld [smem:[#allocation5 + $0x6]]
        %v3311 = vstv %s3310
        %v3312 = vadd.f32 %v3236, %v3311
        %v3313 = vmul.f32 %v3312, 0.5
        %v3314 = vmul.f32 %v3312, 0.70710677
        %v3315 = verf.f32.pop %v3314
        %v3316 = vadd.f32 %v3315, 1.0
        %v3317 = vmul.f32 %v3313, %v3316
        %s3318 = scalar_lea.vmem %s204, 48 [#allocation7]
        %3319 = vst.msk [vmem:[%s3318] sm:$0xff] %vm3258, %v3317
        %s3320 = sld [smem:[#allocation5 + $0x7]]
        %v3321 = vstv %s3320
        %v3322 = vadd.f32 %v3249, %v3321
        %v3323 = vmul.f32 %v3322, 0.5
        %v3324 = vmul.f32 %v3322, 0.70710677
        %v3325 = verf.f32.pop %v3324
        %v3326 = vadd.f32 %v3325, 1.0
        %v3327 = vmul.f32 %v3323, %v3326
        %s3328 = scalar_lea.vmem %s204, 56 [#allocation7]
        %3329 = vst.msk [vmem:[%s3328] sm:$0xff] %vm3258, %v3327
        %s3330 = sand.u32 %s109, 1
        %s3331 = scalar_lea.sflag [#allocation3], %s3330
        %s3332 = sand.u32 %s109, 1
        %s3333 = smul.addr %s3332, 64
        %s3334 = scalar_lea.vmem [#allocation7], %s3333
        // Predicated region
        $region41: #{conv_act.1} parent=31 // pred_check
          %p3335 = pneg %p119
        $region42: #{conv_act.1} parent=31 // pred_check_branch
          %3337 = sbr.rel (%p3335) target = $region44
        $region43: #{conv_act.1} parent=31 // pred_region
          %s3339 = ssub.s32 1024, 1024
          %3340 = vsyncadd %s3331, %s3339
          %s3341 = smul.addr %s23, 16
          %s3342 = sadd.s32 %s24, %s3341
          %s3343 = smul.addr %s3342, 128
          %s3344 = scalar_lea.hbm %s3, %s3343
          %s3345 = sshll.u32 %s3334, 4
          %s3346 = int_to_ptr.vmem [resolvable:$true] %s3345
          %3351 = dma.vmem_to_hbm [thread:$0]  %s3346, 1024, %s3344, %s3331, 128, 256, 8
        $region44: #{conv_act.1} parent=31 // pred_fallthru
          _
      $region32: #{conv_act.1} parent=5 // pred_fallthru
        _
      %p3352 = scmp.le.s32.totalorder 2, %s14
      // Predicated region
      $region45: #{conv_act.1} parent=5 // pred_check
        %p3353 = pneg %p3352
      $region46: #{conv_act.1} parent=5 // pred_check_branch
        %3355 = sbr.rel (%p3353) target = $region48
      $region47: #{conv_act.1} parent=5 // pred_region
        %s3356 = ssub.s32 %s14, 2
        // Predicated region
        $region49: #{conv_act.1} parent=47 // pred_check
          %p3357 = pneg %p125
        $region50: #{conv_act.1} parent=47 // pred_check_branch
          %3359 = sbr.rel (%p3357) target = $region52
        $region51: #{conv_act.1} parent=47 // pred_region
          %s3360 = sand.u32 %s110, 1
          %s3361 = scalar_lea.sflag [#allocation3], %s3360
          %s3362 = sand.u32 %s110, 1
          %s3363 = smul.addr %s3362, 64
          %s3364 = scalar_lea.vmem [#allocation7], %s3363
          %3365 = dma.done %s3361, 1024
        $region52: #{conv_act.1} parent=47 // pred_fallthru
          _
      $region48: #{conv_act.1} parent=5 // pred_fallthru
        _
    $region6: #{conv_act.1} parent=1 // loop_footer
      %s18 = sadd.s32 1, %s14
    $region7: #{conv_act.1} parent=1 // loop_footer_branch
      %13 = sbr.rel target = $region3
    $region8: #{conv_act.1} parent=1 // loop_exit
      _
    %3366 = vsyncpa [#allocation3], 1
    %s3367 = scalar_lea.sflag [#allocation3], 1
    %3368 = vsyncpa %s3367, 1
    %3369 = vsyncpa [#allocation4], 1
    %s3370 = scalar_lea.sflag [#allocation4], 1
    %3371 = vsyncpa %s3370, 1
    %3372 = vsyncpa [#allocation6], 1

</llo_original>
